<compile_context>
chip_gen: v7x
topology: tpu7x:2x2x1
jax: 0.10.0
libtpu: 0.0.40
codegen_flags: <defaults>
</compile_context>

<pallas_src>
import functools

import numpy as np
import jax
import jax.numpy as jnp
from jax import lax
from jax.experimental import pallas as pl
from jax.experimental.pallas import tpu as pltpu

NEG_SLOPE = 0.01          # default negative_slope of nn.LeakyReLU / F.leaky_relu
H_IN = W_IN = 10          # input spatial size implied by the 32*2*2 flatten
HW_IN = H_IN * W_IN       # 100 lanes per batch element for conv1/pool1
GRID2 = 6                 # conv2 runs on a zero-padded 6x6 grid (padding=1 on 4x4)
HW_P2 = GRID2 * GRID2     # 36 lanes per batch element for conv2/pool2


def _leaky(y):
    return jnp.where(y >= 0, y, NEG_SLOPE * y)


def _shift_lanes(a, off):
    """result[:, i] = a[:, (i + off) % n].

    The wrapped tail only lands on lane positions that are never selected by the
    downstream 0/1 selection matmuls, so its (finite) values are harmless.
    (pltpu.roll would also work; explicit slice+concat keeps the shift
    direction unambiguous.)
    """
    if off == 0:
        return a
    return jnp.concatenate([a[:, off:], a[:, :off]], axis=1)


# ------------------------------ fused kernel ------------------------------- #
def _nlayernet_kernel(x_ref, w1_ref, b1_ref, s1_ref, w2_ref, b2_ref, esel_ref,
                      wl1_ref, bl1_ref, wl2_ref, bl2_ref, wl3_ref, bl3_ref,
                      o_ref, *, batch):
    f32 = jnp.float32
    # TODO(synk): nn.Dropout(p=0.5) is stochastic; eval-mode identity is used here.

    # Stage 0: stack the batch images side by side along lanes: (Cin=2, B*100).
    xl = jnp.concatenate([x_ref[b] for b in range(batch)], axis=1)

    # conv1 (2->16, k=3, valid) as 9 shifted matmuls + bias + LeakyReLU.
    acc = None
    for di in range(3):
        for dj in range(3):
            xs = _shift_lanes(xl, di * W_IN + dj)
            term = jnp.dot(w1_ref[di * 3 + dj], xs, preferred_element_type=f32)
            acc = term if acc is None else acc + term
    y1 = _leaky(acc + b1_ref[...])                          # (16, B*100)

    # maxpool1 (2x2, stride 2) fused as two lane-shifted maxima, then compact
    # the pooled pixels into conv2's zero-padded 6x6 grid with one 0/1 matmul.
    m1 = jnp.maximum(y1, _shift_lanes(y1, 1))
    m1 = jnp.maximum(m1, _shift_lanes(m1, W_IN))
    d2 = jnp.dot(m1, s1_ref[...], preferred_element_type=f32)   # (16, B*36)

    # conv2 (16->32, k=3, padding=1 via the padded grid) + bias + LeakyReLU.
    acc = None
    for di in range(3):
        for dj in range(3):
            ds_ = _shift_lanes(d2, di * GRID2 + dj)
            term = jnp.dot(w2_ref[di * 3 + dj], ds_, preferred_element_type=f32)
            acc = term if acc is None else acc + term
    y2 = _leaky(acc + b2_ref[...])                          # (32, B*36)

    # maxpool2 fused the same way; gather the 4 pooled pixels of every batch
    # element as rows: rows[j*B + b, c] = pooled[b, c, spatial j].
    m2 = jnp.maximum(y2, _shift_lanes(y2, 1))
    m2 = jnp.maximum(m2, _shift_lanes(m2, GRID2))
    rows = lax.dot_general(esel_ref[...], m2,
                           dimension_numbers=(((1,), (1,)), ((), ())),
                           preferred_element_type=f32)      # (4*B, 32)

    # linear1: PyTorch's (c, h, w) flatten order folded into 4 weight blocks.
    h = bl1_ref[...]
    for j in range(4):
        h = h + jnp.dot(rows[j * batch:(j + 1) * batch, :], wl1_ref[j],
                        preferred_element_type=f32)         # (B, 128)
    h = _leaky(h)

    # linear2 + LeakyReLU, linear3 (zero-padded to 128 lanes) + 10*sigmoid.
    h = _leaky(jnp.dot(h, wl2_ref[...], preferred_element_type=f32) + bl2_ref[...])
    y3 = jnp.dot(h, wl3_ref[...], preferred_element_type=f32) + bl3_ref[...]
    o_ref[...] = 10.0 / (1.0 + jnp.exp(-y3))                # (B, 128), lane-dense


# ------------------------- constants & parameters --------------------------- #
def _selection_matrices(batch):
    """0/1 matrices that compact pooled pixels (all built at trace time)."""
    # s1: pooled conv1 pixel (ph, pw) on the 10x10 lane grid -> position
    #     (ph+1, pw+1) of conv2's zero-padded 6x6 lane grid (per batch block).
    s1 = np.zeros((batch * HW_IN, batch * HW_P2), np.float32)
    for b in range(batch):
        for ph in range(4):
            for pw in range(4):
                src = b * HW_IN + (2 * ph) * W_IN + 2 * pw
                dst = b * HW_P2 + (ph + 1) * GRID2 + (pw + 1)
                s1[src, dst] = 1.0
    # esel: gather the 4 pooled conv2 pixels as rows; row index = j*batch + b,
    #       j = ph*2 + pw (PyTorch spatial order).
    qsel = [0, 2, 2 * GRID2, 2 * GRID2 + 2]
    esel = np.zeros((4 * batch, batch * HW_P2), np.float32)
    for j in range(4):
        for b in range(batch):
            esel[j * batch + b, b * HW_P2 + qsel[j]] = 1.0
    return jnp.asarray(s1), jnp.asarray(esel)


def init_torch_params(key):
    """Deterministic synthetic parameters in PyTorch's native layouts."""
    ks = jax.random.split(key, 10)

    def w(k, *shape, scale=0.05):
        return jax.random.normal(k, shape, jnp.float32) * scale

    return {
        "w1": w(ks[0], 16, 2, 3, 3), "b1": w(ks[1], 16, scale=0.01),
        "w2": w(ks[2], 32, 16, 3, 3), "b2": w(ks[3], 32, scale=0.01),
        "wl1": w(ks[4], 128, 128), "bl1": w(ks[5], 128, scale=0.01),
        "wl2": w(ks[6], 128, 128), "bl2": w(ks[7], 128, scale=0.01),
        "wl3": w(ks[8], 100, 128), "bl3": w(ks[9], 100, scale=0.01),
    }


def pack_params(tp):
    """One-time conversion of PyTorch-layout params to the kernel's layouts."""
    w1t = jnp.transpose(tp["w1"], (2, 3, 0, 1)).reshape(9, 16, 2)    # [tap, cout, cin]
    w2t = jnp.transpose(tp["w2"], (2, 3, 0, 1)).reshape(9, 32, 16)
    # linear1 flatten fold: wl1b[j, c, n] = wl1[n, c*4 + j]
    wl1b = jnp.transpose(tp["wl1"].T.reshape(32, 4, 128), (1, 0, 2))
    wl3p = jnp.zeros((128, 128), jnp.float32).at[:, :100].set(tp["wl3"].T)
    bl3p = jnp.zeros((1, 128), jnp.float32).at[:, :100].set(tp["bl3"][None, :])
    return {
        "w1t": w1t, "b1": tp["b1"].reshape(16, 1),
        "w2t": w2t, "b2": tp["b2"].reshape(32, 1),
        "wl1b": wl1b, "bl1": tp["bl1"].reshape(1, 128),
        "wl2": tp["wl2"].T, "bl2": tp["bl2"].reshape(1, 128),
        "wl3p": wl3p, "bl3p": bl3p,
    }


# --------------------------------- wrapper ---------------------------------- #
def nlayernet_forward(packed, x_nchw):
    """Forward pass equivalent to NLayerNet.forward (dropout = eval identity)."""
    batch = x_nchw.shape[0]
    s1, esel = _selection_matrices(batch)
    x_lanes = x_nchw.reshape(batch, 2, HW_IN)   # free bitcast reshape, no transpose
    out = pl.pallas_call(
        functools.partial(_nlayernet_kernel, batch=batch),
        out_shape=jax.ShapeDtypeStruct((batch, 128), jnp.float32),
        in_specs=[pl.BlockSpec(memory_space=pltpu.MemorySpace.VMEM)] * 13,
        out_specs=pl.BlockSpec(memory_space=pltpu.MemorySpace.VMEM),
    )(x_lanes, packed["w1t"], packed["b1"], s1, packed["w2t"], packed["b2"],
      esel, packed["wl1b"], packed["bl1"], packed["wl2"], packed["bl2"],
      packed["wl3p"], packed["bl3p"])
    return out[:, :100]   # drop the zero lane-padding of linear3


# ----------------------- pure-JAX reference (XLA ops) ----------------------- #
def nlayernet_reference(tp, x_nchw):
    def conv(x, w, b, pad):
        y = lax.conv_general_dilated(
            x, w, window_strides=(1, 1), padding=[(pad, pad), (pad, pad)],
            dimension_numbers=("NCHW", "OIHW", "NCHW"))
        return y + b[None, :, None, None]

    def pool(v):
        b_, c, h, w = v.shape
        return v.reshape(b_, c, h // 2, 2, w // 2, 2).max(axis=(3, 5))

    y = pool(_leaky(conv(x_nchw, tp["w1"], tp["b1"], 0)))
    y = pool(_leaky(conv(y, tp["w2"], tp["b2"], 1)))
    y = y.reshape(y.shape[0], -1)                 # NCHW flatten, like .view(B, -1)
    y = _leaky(y @ tp["wl1"].T + tp["bl1"])
    y = _leaky(y @ tp["wl2"].T + tp["bl2"])
    y = y @ tp["wl3"].T + tp["bl3"]
    return 10.0 / (1.0 + jnp.exp(-y))


if __name__ == "__main__":
    key = jax.random.PRNGKey(0)
    k_param, k_x = jax.random.split(key)
    torch_params = init_torch_params(k_param)
    packed = pack_params(torch_params)
    # Input spatial size 10x10 is implied by the 32*2*2 flatten in the module.
    x = jax.random.normal(k_x, (2, 2, 10, 10), jnp.float32)

    out = jax.block_until_ready(jax.jit(nlayernet_forward)(packed, x))
    assert out.shape == (2, 100), out.shape
    assert bool(jnp.all(jnp.isfinite(out)))

    ref = nlayernet_reference(torch_params, x)
    max_err = float(jnp.max(jnp.abs(out - ref)))
    assert max_err < 0.1, f"mismatch vs pure-JAX reference: max abs err {max_err}"
    print("KERNEL_OK")
</pallas_src>

<mosaic_0001>
module attributes {stable_mosaic.version = 11 : i64} {
  func.func @_nlayernet_kernel(%arg0: memref<2x2x100xf32, #tpu.memory_space<vmem>>, %arg1: memref<9x16x2xf32, #tpu.memory_space<vmem>>, %arg2: memref<16x1xf32, #tpu.memory_space<vmem>>, %arg3: memref<200x72xf32, #tpu.memory_space<vmem>>, %arg4: memref<9x32x16xf32, #tpu.memory_space<vmem>>, %arg5: memref<32x1xf32, #tpu.memory_space<vmem>>, %arg6: memref<8x72xf32, #tpu.memory_space<vmem>>, %arg7: memref<4x32x128xf32, #tpu.memory_space<vmem>>, %arg8: memref<1x128xf32, #tpu.memory_space<vmem>>, %arg9: memref<128x128xf32, #tpu.memory_space<vmem>>, %arg10: memref<1x128xf32, #tpu.memory_space<vmem>>, %arg11: memref<128x128xf32, #tpu.memory_space<vmem>>, %arg12: memref<1x128xf32, #tpu.memory_space<vmem>>, %arg13: memref<2x128xf32, #tpu.memory_space<vmem>>) attributes {dimension_semantics = [], scalar_prefetch = 0 : i64, scratch_operands = 0 : i64, tpu.core_type = #tpu.core_type<tc>} {
    %c0 = arith.constant 0 : index
    %c0_0 = arith.constant 0 : index
    %c0_1 = arith.constant 0 : index
    %0 = vector.load %arg0[%c0, %c0_0, %c0_1] : memref<2x2x100xf32, #tpu.memory_space<vmem>>, vector<1x2x100xf32>
    %1 = vector.shape_cast %0 : vector<1x2x100xf32> to vector<2x100xf32>
    %c1 = arith.constant 1 : index
    %c0_2 = arith.constant 0 : index
    %c0_3 = arith.constant 0 : index
    %2 = vector.load %arg0[%c1, %c0_2, %c0_3] : memref<2x2x100xf32, #tpu.memory_space<vmem>>, vector<1x2x100xf32>
    %3 = vector.shape_cast %2 : vector<1x2x100xf32> to vector<2x100xf32>
    %4 = tpu.concatenate %1, %3 in 1 : vector<2x100xf32>, vector<2x100xf32> -> vector<2x200xf32>
    %c0_4 = arith.constant 0 : index
    %c0_5 = arith.constant 0 : index
    %c0_6 = arith.constant 0 : index
    %5 = vector.load %arg1[%c0_4, %c0_5, %c0_6] : memref<9x16x2xf32, #tpu.memory_space<vmem>>, vector<1x16x2xf32>
    %6 = vector.shape_cast %5 : vector<1x16x2xf32> to vector<16x2xf32>
    %cst = arith.constant dense<0.000000e+00> : vector<16x200xf32>
    %7 = tpu.matmul %6, %4, %cst {dimension_numbers = #tpu.dot_dimension_numbers<[1], [0], [0], [1], [0, 0, 1, 1], [], []>} : vector<16x2xf32>, vector<2x200xf32>, vector<16x200xf32> -> vector<16x200xf32>
    %8 = vector.extract_strided_slice %4 {offsets = [0, 1], sizes = [2, 199], strides = [1, 1]} : vector<2x200xf32> to vector<2x199xf32>
    %9 = vector.extract_strided_slice %4 {offsets = [0, 0], sizes = [2, 1], strides = [1, 1]} : vector<2x200xf32> to vector<2x1xf32>
    %10 = tpu.concatenate %8, %9 in 1 : vector<2x199xf32>, vector<2x1xf32> -> vector<2x200xf32>
    %c1_7 = arith.constant 1 : index
    %c0_8 = arith.constant 0 : index
    %c0_9 = arith.constant 0 : index
    %11 = vector.load %arg1[%c1_7, %c0_8, %c0_9] : memref<9x16x2xf32, #tpu.memory_space<vmem>>, vector<1x16x2xf32>
    %12 = vector.shape_cast %11 : vector<1x16x2xf32> to vector<16x2xf32>
    %cst_10 = arith.constant dense<0.000000e+00> : vector<16x200xf32>
    %13 = tpu.matmul %12, %10, %cst_10 {dimension_numbers = #tpu.dot_dimension_numbers<[1], [0], [0], [1], [0, 0, 1, 1], [], []>} : vector<16x2xf32>, vector<2x200xf32>, vector<16x200xf32> -> vector<16x200xf32>
    %14 = arith.addf %7, %13 : vector<16x200xf32>
    %15 = vector.extract_strided_slice %4 {offsets = [0, 2], sizes = [2, 198], strides = [1, 1]} : vector<2x200xf32> to vector<2x198xf32>
    %16 = vector.extract_strided_slice %4 {offsets = [0, 0], sizes = [2, 2], strides = [1, 1]} : vector<2x200xf32> to vector<2x2xf32>
    %17 = tpu.concatenate %15, %16 in 1 : vector<2x198xf32>, vector<2x2xf32> -> vector<2x200xf32>
    %c2 = arith.constant 2 : index
    %c0_11 = arith.constant 0 : index
    %c0_12 = arith.constant 0 : index
    %18 = vector.load %arg1[%c2, %c0_11, %c0_12] : memref<9x16x2xf32, #tpu.memory_space<vmem>>, vector<1x16x2xf32>
    %19 = vector.shape_cast %18 : vector<1x16x2xf32> to vector<16x2xf32>
    %cst_13 = arith.constant dense<0.000000e+00> : vector<16x200xf32>
    %20 = tpu.matmul %19, %17, %cst_13 {dimension_numbers = #tpu.dot_dimension_numbers<[1], [0], [0], [1], [0, 0, 1, 1], [], []>} : vector<16x2xf32>, vector<2x200xf32>, vector<16x200xf32> -> vector<16x200xf32>
    %21 = arith.addf %14, %20 : vector<16x200xf32>
    %22 = vector.extract_strided_slice %4 {offsets = [0, 10], sizes = [2, 190], strides = [1, 1]} : vector<2x200xf32> to vector<2x190xf32>
    %23 = vector.extract_strided_slice %4 {offsets = [0, 0], sizes = [2, 10], strides = [1, 1]} : vector<2x200xf32> to vector<2x10xf32>
    %24 = tpu.concatenate %22, %23 in 1 : vector<2x190xf32>, vector<2x10xf32> -> vector<2x200xf32>
    %c3 = arith.constant 3 : index
    %c0_14 = arith.constant 0 : index
    %c0_15 = arith.constant 0 : index
    %25 = vector.load %arg1[%c3, %c0_14, %c0_15] : memref<9x16x2xf32, #tpu.memory_space<vmem>>, vector<1x16x2xf32>
    %26 = vector.shape_cast %25 : vector<1x16x2xf32> to vector<16x2xf32>
    %cst_16 = arith.constant dense<0.000000e+00> : vector<16x200xf32>
    %27 = tpu.matmul %26, %24, %cst_16 {dimension_numbers = #tpu.dot_dimension_numbers<[1], [0], [0], [1], [0, 0, 1, 1], [], []>} : vector<16x2xf32>, vector<2x200xf32>, vector<16x200xf32> -> vector<16x200xf32>
    %28 = arith.addf %21, %27 : vector<16x200xf32>
    %29 = vector.extract_strided_slice %4 {offsets = [0, 11], sizes = [2, 189], strides = [1, 1]} : vector<2x200xf32> to vector<2x189xf32>
    %30 = vector.extract_strided_slice %4 {offsets = [0, 0], sizes = [2, 11], strides = [1, 1]} : vector<2x200xf32> to vector<2x11xf32>
    %31 = tpu.concatenate %29, %30 in 1 : vector<2x189xf32>, vector<2x11xf32> -> vector<2x200xf32>
    %c4 = arith.constant 4 : index
    %c0_17 = arith.constant 0 : index
    %c0_18 = arith.constant 0 : index
    %32 = vector.load %arg1[%c4, %c0_17, %c0_18] : memref<9x16x2xf32, #tpu.memory_space<vmem>>, vector<1x16x2xf32>
    %33 = vector.shape_cast %32 : vector<1x16x2xf32> to vector<16x2xf32>
    %cst_19 = arith.constant dense<0.000000e+00> : vector<16x200xf32>
    %34 = tpu.matmul %33, %31, %cst_19 {dimension_numbers = #tpu.dot_dimension_numbers<[1], [0], [0], [1], [0, 0, 1, 1], [], []>} : vector<16x2xf32>, vector<2x200xf32>, vector<16x200xf32> -> vector<16x200xf32>
    %35 = arith.addf %28, %34 : vector<16x200xf32>
    %36 = vector.extract_strided_slice %4 {offsets = [0, 12], sizes = [2, 188], strides = [1, 1]} : vector<2x200xf32> to vector<2x188xf32>
    %37 = vector.extract_strided_slice %4 {offsets = [0, 0], sizes = [2, 12], strides = [1, 1]} : vector<2x200xf32> to vector<2x12xf32>
    %38 = tpu.concatenate %36, %37 in 1 : vector<2x188xf32>, vector<2x12xf32> -> vector<2x200xf32>
    %c5 = arith.constant 5 : index
    %c0_20 = arith.constant 0 : index
    %c0_21 = arith.constant 0 : index
    %39 = vector.load %arg1[%c5, %c0_20, %c0_21] : memref<9x16x2xf32, #tpu.memory_space<vmem>>, vector<1x16x2xf32>
    %40 = vector.shape_cast %39 : vector<1x16x2xf32> to vector<16x2xf32>
    %cst_22 = arith.constant dense<0.000000e+00> : vector<16x200xf32>
    %41 = tpu.matmul %40, %38, %cst_22 {dimension_numbers = #tpu.dot_dimension_numbers<[1], [0], [0], [1], [0, 0, 1, 1], [], []>} : vector<16x2xf32>, vector<2x200xf32>, vector<16x200xf32> -> vector<16x200xf32>
    %42 = arith.addf %35, %41 : vector<16x200xf32>
    %43 = vector.extract_strided_slice %4 {offsets = [0, 20], sizes = [2, 180], strides = [1, 1]} : vector<2x200xf32> to vector<2x180xf32>
    %44 = vector.extract_strided_slice %4 {offsets = [0, 0], sizes = [2, 20], strides = [1, 1]} : vector<2x200xf32> to vector<2x20xf32>
    %45 = tpu.concatenate %43, %44 in 1 : vector<2x180xf32>, vector<2x20xf32> -> vector<2x200xf32>
    %c6 = arith.constant 6 : index
    %c0_23 = arith.constant 0 : index
    %c0_24 = arith.constant 0 : index
    %46 = vector.load %arg1[%c6, %c0_23, %c0_24] : memref<9x16x2xf32, #tpu.memory_space<vmem>>, vector<1x16x2xf32>
    %47 = vector.shape_cast %46 : vector<1x16x2xf32> to vector<16x2xf32>
    %cst_25 = arith.constant dense<0.000000e+00> : vector<16x200xf32>
    %48 = tpu.matmul %47, %45, %cst_25 {dimension_numbers = #tpu.dot_dimension_numbers<[1], [0], [0], [1], [0, 0, 1, 1], [], []>} : vector<16x2xf32>, vector<2x200xf32>, vector<16x200xf32> -> vector<16x200xf32>
    %49 = arith.addf %42, %48 : vector<16x200xf32>
    %50 = vector.extract_strided_slice %4 {offsets = [0, 21], sizes = [2, 179], strides = [1, 1]} : vector<2x200xf32> to vector<2x179xf32>
    %51 = vector.extract_strided_slice %4 {offsets = [0, 0], sizes = [2, 21], strides = [1, 1]} : vector<2x200xf32> to vector<2x21xf32>
    %52 = tpu.concatenate %50, %51 in 1 : vector<2x179xf32>, vector<2x21xf32> -> vector<2x200xf32>
    %c7 = arith.constant 7 : index
    %c0_26 = arith.constant 0 : index
    %c0_27 = arith.constant 0 : index
    %53 = vector.load %arg1[%c7, %c0_26, %c0_27] : memref<9x16x2xf32, #tpu.memory_space<vmem>>, vector<1x16x2xf32>
    %54 = vector.shape_cast %53 : vector<1x16x2xf32> to vector<16x2xf32>
    %cst_28 = arith.constant dense<0.000000e+00> : vector<16x200xf32>
    %55 = tpu.matmul %54, %52, %cst_28 {dimension_numbers = #tpu.dot_dimension_numbers<[1], [0], [0], [1], [0, 0, 1, 1], [], []>} : vector<16x2xf32>, vector<2x200xf32>, vector<16x200xf32> -> vector<16x200xf32>
    %56 = arith.addf %49, %55 : vector<16x200xf32>
    %57 = vector.extract_strided_slice %4 {offsets = [0, 22], sizes = [2, 178], strides = [1, 1]} : vector<2x200xf32> to vector<2x178xf32>
    %58 = vector.extract_strided_slice %4 {offsets = [0, 0], sizes = [2, 22], strides = [1, 1]} : vector<2x200xf32> to vector<2x22xf32>
    %59 = tpu.concatenate %57, %58 in 1 : vector<2x178xf32>, vector<2x22xf32> -> vector<2x200xf32>
    %c8 = arith.constant 8 : index
    %c0_29 = arith.constant 0 : index
    %c0_30 = arith.constant 0 : index
    %60 = vector.load %arg1[%c8, %c0_29, %c0_30] : memref<9x16x2xf32, #tpu.memory_space<vmem>>, vector<1x16x2xf32>
    %61 = vector.shape_cast %60 : vector<1x16x2xf32> to vector<16x2xf32>
    %cst_31 = arith.constant dense<0.000000e+00> : vector<16x200xf32>
    %62 = tpu.matmul %61, %59, %cst_31 {dimension_numbers = #tpu.dot_dimension_numbers<[1], [0], [0], [1], [0, 0, 1, 1], [], []>} : vector<16x2xf32>, vector<2x200xf32>, vector<16x200xf32> -> vector<16x200xf32>
    %63 = arith.addf %56, %62 : vector<16x200xf32>
    %c0_32 = arith.constant 0 : index
    %c0_33 = arith.constant 0 : index
    %64 = vector.load %arg2[%c0_32, %c0_33] : memref<16x1xf32, #tpu.memory_space<vmem>>, vector<16x1xf32>
    %65 = vector.broadcast %64 : vector<16x1xf32> to vector<16x200xf32>
    %66 = arith.addf %63, %65 : vector<16x200xf32>
    %cst_34 = arith.constant 0.000000e+00 : f32
    %67 = vector.broadcast %cst_34 : f32 to vector<16x200xf32>
    %68 = arith.cmpf oge, %66, %67 : vector<16x200xf32>
    %cst_35 = arith.constant 0.00999999977 : f32
    %69 = vector.broadcast %cst_35 : f32 to vector<16x200xf32>
    %70 = arith.mulf %69, %66 : vector<16x200xf32>
    %71 = arith.select %68, %66, %70 : vector<16x200xi1>, vector<16x200xf32>
    %72 = vector.extract_strided_slice %71 {offsets = [0, 1], sizes = [16, 199], strides = [1, 1]} : vector<16x200xf32> to vector<16x199xf32>
    %73 = vector.extract_strided_slice %71 {offsets = [0, 0], sizes = [16, 1], strides = [1, 1]} : vector<16x200xf32> to vector<16x1xf32>
    %74 = tpu.concatenate %72, %73 in 1 : vector<16x199xf32>, vector<16x1xf32> -> vector<16x200xf32>
    %75 = arith.maximumf %71, %74 : vector<16x200xf32>
    %76 = vector.extract_strided_slice %75 {offsets = [0, 10], sizes = [16, 190], strides = [1, 1]} : vector<16x200xf32> to vector<16x190xf32>
    %77 = vector.extract_strided_slice %75 {offsets = [0, 0], sizes = [16, 10], strides = [1, 1]} : vector<16x200xf32> to vector<16x10xf32>
    %78 = tpu.concatenate %76, %77 in 1 : vector<16x190xf32>, vector<16x10xf32> -> vector<16x200xf32>
    %79 = arith.maximumf %75, %78 : vector<16x200xf32>
    %c0_36 = arith.constant 0 : index
    %c0_37 = arith.constant 0 : index
    %80 = vector.load %arg3[%c0_36, %c0_37] : memref<200x72xf32, #tpu.memory_space<vmem>>, vector<200x72xf32>
    %cst_38 = arith.constant dense<0.000000e+00> : vector<16x72xf32>
    %81 = tpu.matmul %79, %80, %cst_38 {dimension_numbers = #tpu.dot_dimension_numbers<[1], [0], [0], [1], [0, 0, 1, 1], [], []>} : vector<16x200xf32>, vector<200x72xf32>, vector<16x72xf32> -> vector<16x72xf32>
    %c0_39 = arith.constant 0 : index
    %c0_40 = arith.constant 0 : index
    %c0_41 = arith.constant 0 : index
    %82 = vector.load %arg4[%c0_39, %c0_40, %c0_41] : memref<9x32x16xf32, #tpu.memory_space<vmem>>, vector<1x32x16xf32>
    %83 = vector.shape_cast %82 : vector<1x32x16xf32> to vector<32x16xf32>
    %cst_42 = arith.constant dense<0.000000e+00> : vector<32x72xf32>
    %84 = tpu.matmul %83, %81, %cst_42 {dimension_numbers = #tpu.dot_dimension_numbers<[1], [0], [0], [1], [0, 0, 1, 1], [], []>} : vector<32x16xf32>, vector<16x72xf32>, vector<32x72xf32> -> vector<32x72xf32>
    %85 = vector.extract_strided_slice %81 {offsets = [0, 1], sizes = [16, 71], strides = [1, 1]} : vector<16x72xf32> to vector<16x71xf32>
    %86 = vector.extract_strided_slice %81 {offsets = [0, 0], sizes = [16, 1], strides = [1, 1]} : vector<16x72xf32> to vector<16x1xf32>
    %87 = tpu.concatenate %85, %86 in 1 : vector<16x71xf32>, vector<16x1xf32> -> vector<16x72xf32>
    %c1_43 = arith.constant 1 : index
    %c0_44 = arith.constant 0 : index
    %c0_45 = arith.constant 0 : index
    %88 = vector.load %arg4[%c1_43, %c0_44, %c0_45] : memref<9x32x16xf32, #tpu.memory_space<vmem>>, vector<1x32x16xf32>
    %89 = vector.shape_cast %88 : vector<1x32x16xf32> to vector<32x16xf32>
    %cst_46 = arith.constant dense<0.000000e+00> : vector<32x72xf32>
    %90 = tpu.matmul %89, %87, %cst_46 {dimension_numbers = #tpu.dot_dimension_numbers<[1], [0], [0], [1], [0, 0, 1, 1], [], []>} : vector<32x16xf32>, vector<16x72xf32>, vector<32x72xf32> -> vector<32x72xf32>
    %91 = arith.addf %84, %90 : vector<32x72xf32>
    %92 = vector.extract_strided_slice %81 {offsets = [0, 2], sizes = [16, 70], strides = [1, 1]} : vector<16x72xf32> to vector<16x70xf32>
    %93 = vector.extract_strided_slice %81 {offsets = [0, 0], sizes = [16, 2], strides = [1, 1]} : vector<16x72xf32> to vector<16x2xf32>
    %94 = tpu.concatenate %92, %93 in 1 : vector<16x70xf32>, vector<16x2xf32> -> vector<16x72xf32>
    %c2_47 = arith.constant 2 : index
    %c0_48 = arith.constant 0 : index
    %c0_49 = arith.constant 0 : index
    %95 = vector.load %arg4[%c2_47, %c0_48, %c0_49] : memref<9x32x16xf32, #tpu.memory_space<vmem>>, vector<1x32x16xf32>
    %96 = vector.shape_cast %95 : vector<1x32x16xf32> to vector<32x16xf32>
    %cst_50 = arith.constant dense<0.000000e+00> : vector<32x72xf32>
    %97 = tpu.matmul %96, %94, %cst_50 {dimension_numbers = #tpu.dot_dimension_numbers<[1], [0], [0], [1], [0, 0, 1, 1], [], []>} : vector<32x16xf32>, vector<16x72xf32>, vector<32x72xf32> -> vector<32x72xf32>
    %98 = arith.addf %91, %97 : vector<32x72xf32>
    %99 = vector.extract_strided_slice %81 {offsets = [0, 6], sizes = [16, 66], strides = [1, 1]} : vector<16x72xf32> to vector<16x66xf32>
    %100 = vector.extract_strided_slice %81 {offsets = [0, 0], sizes = [16, 6], strides = [1, 1]} : vector<16x72xf32> to vector<16x6xf32>
    %101 = tpu.concatenate %99, %100 in 1 : vector<16x66xf32>, vector<16x6xf32> -> vector<16x72xf32>
    %c3_51 = arith.constant 3 : index
    %c0_52 = arith.constant 0 : index
    %c0_53 = arith.constant 0 : index
    %102 = vector.load %arg4[%c3_51, %c0_52, %c0_53] : memref<9x32x16xf32, #tpu.memory_space<vmem>>, vector<1x32x16xf32>
    %103 = vector.shape_cast %102 : vector<1x32x16xf32> to vector<32x16xf32>
    %cst_54 = arith.constant dense<0.000000e+00> : vector<32x72xf32>
    %104 = tpu.matmul %103, %101, %cst_54 {dimension_numbers = #tpu.dot_dimension_numbers<[1], [0], [0], [1], [0, 0, 1, 1], [], []>} : vector<32x16xf32>, vector<16x72xf32>, vector<32x72xf32> -> vector<32x72xf32>
    %105 = arith.addf %98, %104 : vector<32x72xf32>
    %106 = vector.extract_strided_slice %81 {offsets = [0, 7], sizes = [16, 65], strides = [1, 1]} : vector<16x72xf32> to vector<16x65xf32>
    %107 = vector.extract_strided_slice %81 {offsets = [0, 0], sizes = [16, 7], strides = [1, 1]} : vector<16x72xf32> to vector<16x7xf32>
    %108 = tpu.concatenate %106, %107 in 1 : vector<16x65xf32>, vector<16x7xf32> -> vector<16x72xf32>
    %c4_55 = arith.constant 4 : index
    %c0_56 = arith.constant 0 : index
    %c0_57 = arith.constant 0 : index
    %109 = vector.load %arg4[%c4_55, %c0_56, %c0_57] : memref<9x32x16xf32, #tpu.memory_space<vmem>>, vector<1x32x16xf32>
    %110 = vector.shape_cast %109 : vector<1x32x16xf32> to vector<32x16xf32>
    %cst_58 = arith.constant dense<0.000000e+00> : vector<32x72xf32>
    %111 = tpu.matmul %110, %108, %cst_58 {dimension_numbers = #tpu.dot_dimension_numbers<[1], [0], [0], [1], [0, 0, 1, 1], [], []>} : vector<32x16xf32>, vector<16x72xf32>, vector<32x72xf32> -> vector<32x72xf32>
    %112 = arith.addf %105, %111 : vector<32x72xf32>
    %113 = vector.extract_strided_slice %81 {offsets = [0, 8], sizes = [16, 64], strides = [1, 1]} : vector<16x72xf32> to vector<16x64xf32>
    %114 = vector.extract_strided_slice %81 {offsets = [0, 0], sizes = [16, 8], strides = [1, 1]} : vector<16x72xf32> to vector<16x8xf32>
    %115 = tpu.concatenate %113, %114 in 1 : vector<16x64xf32>, vector<16x8xf32> -> vector<16x72xf32>
    %c5_59 = arith.constant 5 : index
    %c0_60 = arith.constant 0 : index
    %c0_61 = arith.constant 0 : index
    %116 = vector.load %arg4[%c5_59, %c0_60, %c0_61] : memref<9x32x16xf32, #tpu.memory_space<vmem>>, vector<1x32x16xf32>
    %117 = vector.shape_cast %116 : vector<1x32x16xf32> to vector<32x16xf32>
    %cst_62 = arith.constant dense<0.000000e+00> : vector<32x72xf32>
    %118 = tpu.matmul %117, %115, %cst_62 {dimension_numbers = #tpu.dot_dimension_numbers<[1], [0], [0], [1], [0, 0, 1, 1], [], []>} : vector<32x16xf32>, vector<16x72xf32>, vector<32x72xf32> -> vector<32x72xf32>
    %119 = arith.addf %112, %118 : vector<32x72xf32>
    %120 = vector.extract_strided_slice %81 {offsets = [0, 12], sizes = [16, 60], strides = [1, 1]} : vector<16x72xf32> to vector<16x60xf32>
    %121 = vector.extract_strided_slice %81 {offsets = [0, 0], sizes = [16, 12], strides = [1, 1]} : vector<16x72xf32> to vector<16x12xf32>
    %122 = tpu.concatenate %120, %121 in 1 : vector<16x60xf32>, vector<16x12xf32> -> vector<16x72xf32>
    %c6_63 = arith.constant 6 : index
    %c0_64 = arith.constant 0 : index
    %c0_65 = arith.constant 0 : index
    %123 = vector.load %arg4[%c6_63, %c0_64, %c0_65] : memref<9x32x16xf32, #tpu.memory_space<vmem>>, vector<1x32x16xf32>
    %124 = vector.shape_cast %123 : vector<1x32x16xf32> to vector<32x16xf32>
    %cst_66 = arith.constant dense<0.000000e+00> : vector<32x72xf32>
    %125 = tpu.matmul %124, %122, %cst_66 {dimension_numbers = #tpu.dot_dimension_numbers<[1], [0], [0], [1], [0, 0, 1, 1], [], []>} : vector<32x16xf32>, vector<16x72xf32>, vector<32x72xf32> -> vector<32x72xf32>
    %126 = arith.addf %119, %125 : vector<32x72xf32>
    %127 = vector.extract_strided_slice %81 {offsets = [0, 13], sizes = [16, 59], strides = [1, 1]} : vector<16x72xf32> to vector<16x59xf32>
    %128 = vector.extract_strided_slice %81 {offsets = [0, 0], sizes = [16, 13], strides = [1, 1]} : vector<16x72xf32> to vector<16x13xf32>
    %129 = tpu.concatenate %127, %128 in 1 : vector<16x59xf32>, vector<16x13xf32> -> vector<16x72xf32>
    %c7_67 = arith.constant 7 : index
    %c0_68 = arith.constant 0 : index
    %c0_69 = arith.constant 0 : index
    %130 = vector.load %arg4[%c7_67, %c0_68, %c0_69] : memref<9x32x16xf32, #tpu.memory_space<vmem>>, vector<1x32x16xf32>
    %131 = vector.shape_cast %130 : vector<1x32x16xf32> to vector<32x16xf32>
    %cst_70 = arith.constant dense<0.000000e+00> : vector<32x72xf32>
    %132 = tpu.matmul %131, %129, %cst_70 {dimension_numbers = #tpu.dot_dimension_numbers<[1], [0], [0], [1], [0, 0, 1, 1], [], []>} : vector<32x16xf32>, vector<16x72xf32>, vector<32x72xf32> -> vector<32x72xf32>
    %133 = arith.addf %126, %132 : vector<32x72xf32>
    %134 = vector.extract_strided_slice %81 {offsets = [0, 14], sizes = [16, 58], strides = [1, 1]} : vector<16x72xf32> to vector<16x58xf32>
    %135 = vector.extract_strided_slice %81 {offsets = [0, 0], sizes = [16, 14], strides = [1, 1]} : vector<16x72xf32> to vector<16x14xf32>
    %136 = tpu.concatenate %134, %135 in 1 : vector<16x58xf32>, vector<16x14xf32> -> vector<16x72xf32>
    %c8_71 = arith.constant 8 : index
    %c0_72 = arith.constant 0 : index
    %c0_73 = arith.constant 0 : index
    %137 = vector.load %arg4[%c8_71, %c0_72, %c0_73] : memref<9x32x16xf32, #tpu.memory_space<vmem>>, vector<1x32x16xf32>
    %138 = vector.shape_cast %137 : vector<1x32x16xf32> to vector<32x16xf32>
    %cst_74 = arith.constant dense<0.000000e+00> : vector<32x72xf32>
    %139 = tpu.matmul %138, %136, %cst_74 {dimension_numbers = #tpu.dot_dimension_numbers<[1], [0], [0], [1], [0, 0, 1, 1], [], []>} : vector<32x16xf32>, vector<16x72xf32>, vector<32x72xf32> -> vector<32x72xf32>
    %140 = arith.addf %133, %139 : vector<32x72xf32>
    %c0_75 = arith.constant 0 : index
    %c0_76 = arith.constant 0 : index
    %141 = vector.load %arg5[%c0_75, %c0_76] : memref<32x1xf32, #tpu.memory_space<vmem>>, vector<32x1xf32>
    %142 = vector.broadcast %141 : vector<32x1xf32> to vector<32x72xf32>
    %143 = arith.addf %140, %142 : vector<32x72xf32>
    %cst_77 = arith.constant 0.000000e+00 : f32
    %144 = vector.broadcast %cst_77 : f32 to vector<32x72xf32>
    %145 = arith.cmpf oge, %143, %144 : vector<32x72xf32>
    %cst_78 = arith.constant 0.00999999977 : f32
    %146 = vector.broadcast %cst_78 : f32 to vector<32x72xf32>
    %147 = arith.mulf %146, %143 : vector<32x72xf32>
    %148 = arith.select %145, %143, %147 : vector<32x72xi1>, vector<32x72xf32>
    %149 = vector.extract_strided_slice %148 {offsets = [0, 1], sizes = [32, 71], strides = [1, 1]} : vector<32x72xf32> to vector<32x71xf32>
    %150 = vector.extract_strided_slice %148 {offsets = [0, 0], sizes = [32, 1], strides = [1, 1]} : vector<32x72xf32> to vector<32x1xf32>
    %151 = tpu.concatenate %149, %150 in 1 : vector<32x71xf32>, vector<32x1xf32> -> vector<32x72xf32>
    %152 = arith.maximumf %148, %151 : vector<32x72xf32>
    %153 = vector.extract_strided_slice %152 {offsets = [0, 6], sizes = [32, 66], strides = [1, 1]} : vector<32x72xf32> to vector<32x66xf32>
    %154 = vector.extract_strided_slice %152 {offsets = [0, 0], sizes = [32, 6], strides = [1, 1]} : vector<32x72xf32> to vector<32x6xf32>
    %155 = tpu.concatenate %153, %154 in 1 : vector<32x66xf32>, vector<32x6xf32> -> vector<32x72xf32>
    %156 = arith.maximumf %152, %155 : vector<32x72xf32>
    %c0_79 = arith.constant 0 : index
    %c0_80 = arith.constant 0 : index
    %157 = vector.load %arg6[%c0_79, %c0_80] : memref<8x72xf32, #tpu.memory_space<vmem>>, vector<8x72xf32>
    %cst_81 = arith.constant dense<0.000000e+00> : vector<8x32xf32>
    %158 = tpu.matmul %157, %156, %cst_81 {dimension_numbers = #tpu.dot_dimension_numbers<[1], [1], [0], [0], [0, 0, 1, 0], [], []>} : vector<8x72xf32>, vector<32x72xf32>, vector<8x32xf32> -> vector<8x32xf32>
    %c0_82 = arith.constant 0 : index
    %c0_83 = arith.constant 0 : index
    %159 = vector.load %arg8[%c0_82, %c0_83] : memref<1x128xf32, #tpu.memory_space<vmem>>, vector<1x128xf32>
    %160 = vector.extract_strided_slice %158 {offsets = [0, 0], sizes = [2, 32], strides = [1, 1]} : vector<8x32xf32> to vector<2x32xf32>
    %c0_84 = arith.constant 0 : index
    %c0_85 = arith.constant 0 : index
    %c0_86 = arith.constant 0 : index
    %161 = vector.load %arg7[%c0_84, %c0_85, %c0_86] : memref<4x32x128xf32, #tpu.memory_space<vmem>>, vector<1x32x128xf32>
    %162 = vector.shape_cast %161 : vector<1x32x128xf32> to vector<32x128xf32>
    %cst_87 = arith.constant dense<0.000000e+00> : vector<2x128xf32>
    %163 = tpu.matmul %160, %162, %cst_87 {dimension_numbers = #tpu.dot_dimension_numbers<[1], [0], [0], [1], [0, 0, 1, 1], [], []>} : vector<2x32xf32>, vector<32x128xf32>, vector<2x128xf32> -> vector<2x128xf32>
    %164 = vector.broadcast %159 : vector<1x128xf32> to vector<2x128xf32>
    %165 = arith.addf %164, %163 : vector<2x128xf32>
    %166 = vector.extract_strided_slice %158 {offsets = [2, 0], sizes = [2, 32], strides = [1, 1]} : vector<8x32xf32> to vector<2x32xf32>
    %c1_88 = arith.constant 1 : index
    %c0_89 = arith.constant 0 : index
    %c0_90 = arith.constant 0 : index
    %167 = vector.load %arg7[%c1_88, %c0_89, %c0_90] : memref<4x32x128xf32, #tpu.memory_space<vmem>>, vector<1x32x128xf32>
    %168 = vector.shape_cast %167 : vector<1x32x128xf32> to vector<32x128xf32>
    %cst_91 = arith.constant dense<0.000000e+00> : vector<2x128xf32>
    %169 = tpu.matmul %166, %168, %cst_91 {dimension_numbers = #tpu.dot_dimension_numbers<[1], [0], [0], [1], [0, 0, 1, 1], [], []>} : vector<2x32xf32>, vector<32x128xf32>, vector<2x128xf32> -> vector<2x128xf32>
    %170 = arith.addf %165, %169 : vector<2x128xf32>
    %171 = vector.extract_strided_slice %158 {offsets = [4, 0], sizes = [2, 32], strides = [1, 1]} : vector<8x32xf32> to vector<2x32xf32>
    %c2_92 = arith.constant 2 : index
    %c0_93 = arith.constant 0 : index
    %c0_94 = arith.constant 0 : index
    %172 = vector.load %arg7[%c2_92, %c0_93, %c0_94] : memref<4x32x128xf32, #tpu.memory_space<vmem>>, vector<1x32x128xf32>
    %173 = vector.shape_cast %172 : vector<1x32x128xf32> to vector<32x128xf32>
    %cst_95 = arith.constant dense<0.000000e+00> : vector<2x128xf32>
    %174 = tpu.matmul %171, %173, %cst_95 {dimension_numbers = #tpu.dot_dimension_numbers<[1], [0], [0], [1], [0, 0, 1, 1], [], []>} : vector<2x32xf32>, vector<32x128xf32>, vector<2x128xf32> -> vector<2x128xf32>
    %175 = arith.addf %170, %174 : vector<2x128xf32>
    %176 = vector.extract_strided_slice %158 {offsets = [6, 0], sizes = [2, 32], strides = [1, 1]} : vector<8x32xf32> to vector<2x32xf32>
    %c3_96 = arith.constant 3 : index
    %c0_97 = arith.constant 0 : index
    %c0_98 = arith.constant 0 : index
    %177 = vector.load %arg7[%c3_96, %c0_97, %c0_98] : memref<4x32x128xf32, #tpu.memory_space<vmem>>, vector<1x32x128xf32>
    %178 = vector.shape_cast %177 : vector<1x32x128xf32> to vector<32x128xf32>
    %cst_99 = arith.constant dense<0.000000e+00> : vector<2x128xf32>
    %179 = tpu.matmul %176, %178, %cst_99 {dimension_numbers = #tpu.dot_dimension_numbers<[1], [0], [0], [1], [0, 0, 1, 1], [], []>} : vector<2x32xf32>, vector<32x128xf32>, vector<2x128xf32> -> vector<2x128xf32>
    %180 = arith.addf %175, %179 : vector<2x128xf32>
    %cst_100 = arith.constant 0.000000e+00 : f32
    %181 = vector.broadcast %cst_100 : f32 to vector<2x128xf32>
    %182 = arith.cmpf oge, %180, %181 : vector<2x128xf32>
    %cst_101 = arith.constant 0.00999999977 : f32
    %183 = vector.broadcast %cst_101 : f32 to vector<2x128xf32>
    %184 = arith.mulf %183, %180 : vector<2x128xf32>
    %185 = arith.select %182, %180, %184 : vector<2x128xi1>, vector<2x128xf32>
    %c0_102 = arith.constant 0 : index
    %c0_103 = arith.constant 0 : index
    %186 = vector.load %arg9[%c0_102, %c0_103] : memref<128x128xf32, #tpu.memory_space<vmem>>, vector<128x128xf32>
    %cst_104 = arith.constant dense<0.000000e+00> : vector<2x128xf32>
    %187 = tpu.matmul %185, %186, %cst_104 {dimension_numbers = #tpu.dot_dimension_numbers<[1], [0], [0], [1], [0, 0, 1, 1], [], []>} : vector<2x128xf32>, vector<128x128xf32>, vector<2x128xf32> -> vector<2x128xf32>
    %c0_105 = arith.constant 0 : index
    %c0_106 = arith.constant 0 : index
    %188 = vector.load %arg10[%c0_105, %c0_106] : memref<1x128xf32, #tpu.memory_space<vmem>>, vector<1x128xf32>
    %189 = vector.broadcast %188 : vector<1x128xf32> to vector<2x128xf32>
    %190 = arith.addf %187, %189 : vector<2x128xf32>
    %cst_107 = arith.constant 0.000000e+00 : f32
    %191 = vector.broadcast %cst_107 : f32 to vector<2x128xf32>
    %192 = arith.cmpf oge, %190, %191 : vector<2x128xf32>
    %cst_108 = arith.constant 0.00999999977 : f32
    %193 = vector.broadcast %cst_108 : f32 to vector<2x128xf32>
    %194 = arith.mulf %193, %190 : vector<2x128xf32>
    %195 = arith.select %192, %190, %194 : vector<2x128xi1>, vector<2x128xf32>
    %c0_109 = arith.constant 0 : index
    %c0_110 = arith.constant 0 : index
    %196 = vector.load %arg11[%c0_109, %c0_110] : memref<128x128xf32, #tpu.memory_space<vmem>>, vector<128x128xf32>
    %cst_111 = arith.constant dense<0.000000e+00> : vector<2x128xf32>
    %197 = tpu.matmul %195, %196, %cst_111 {dimension_numbers = #tpu.dot_dimension_numbers<[1], [0], [0], [1], [0, 0, 1, 1], [], []>} : vector<2x128xf32>, vector<128x128xf32>, vector<2x128xf32> -> vector<2x128xf32>
    %c0_112 = arith.constant 0 : index
    %c0_113 = arith.constant 0 : index
    %198 = vector.load %arg12[%c0_112, %c0_113] : memref<1x128xf32, #tpu.memory_space<vmem>>, vector<1x128xf32>
    %199 = vector.broadcast %198 : vector<1x128xf32> to vector<2x128xf32>
    %200 = arith.addf %197, %199 : vector<2x128xf32>
    %cst_114 = arith.constant 0.000000e+00 : f32
    %201 = vector.broadcast %cst_114 : f32 to vector<2x128xf32>
    %202 = arith.subf %201, %200 : vector<2x128xf32>
    %203 = math.exp %202 : vector<2x128xf32>
    %cst_115 = arith.constant 1.000000e+00 : f32
    %204 = vector.broadcast %cst_115 : f32 to vector<2x128xf32>
    %205 = arith.addf %204, %203 : vector<2x128xf32>
    %cst_116 = arith.constant 1.000000e+01 : f32
    %206 = vector.broadcast %cst_116 : f32 to vector<2x128xf32>
    %207 = arith.divf %206, %205 : vector<2x128xf32>
    %c0_117 = arith.constant 0 : index
    %c0_118 = arith.constant 0 : index
    %208 = vector.load %arg13[%c0_117, %c0_118] : memref<2x128xf32, #tpu.memory_space<vmem>>, vector<2x128xf32>
    tpu.vector_store %arg13[%c0_117, %c0_118], %207 {strides = array<i32>} : memref<2x128xf32, #tpu.memory_space<vmem>>, vector<2x128xf32>,
    return
  }
}

</mosaic_0001>

<llo_original>
// kernel: nlayernet_forward.1
$region0: #{nlayernet_forward.1}
  #allocation0 [shape = 'u32[]', space=smem, size = 0x4, offset = 0x4, fixed_abs, tag = 'smem constant byte address 0x4 - core index']
  #allocation1 [shape = 'u32[144,128]{1,0:T(1,128)}', space=vmem, size = 0x12000, scoped, tag = 'internal scratch']
  %s0 = inlined_call_operand.vmem [shape: f32[2,2,100], index: 0, kind: input, shape index: {}]
  %s1 = inlined_call_operand.vmem [shape: f32[9,16,2], index: 1, kind: input, shape index: {}]
  %s2 = inlined_call_operand.vmem [shape: f32[16,1], index: 2, kind: input, shape index: {}]
  %s3 = inlined_call_operand.vmem [shape: f32[200,72], index: 3, kind: input, shape index: {}]
  %s4 = inlined_call_operand.vmem [shape: f32[9,32,16], index: 4, kind: input, shape index: {}]
  %s5 = inlined_call_operand.vmem [shape: f32[32,1], index: 5, kind: input, shape index: {}]
  %s6 = inlined_call_operand.vmem [shape: f32[8,72], index: 6, kind: input, shape index: {}]
  %s7 = inlined_call_operand.vmem [shape: f32[4,32,128], index: 7, kind: input, shape index: {}]
  %s8 = inlined_call_operand.vmem [shape: f32[1,128], index: 8, kind: input, shape index: {}]
  %s9 = inlined_call_operand.vmem [shape: f32[128,128], index: 9, kind: input, shape index: {}]
  %s10 = inlined_call_operand.vmem [shape: f32[1,128], index: 10, kind: input, shape index: {}]
  %s11 = inlined_call_operand.vmem [shape: f32[128,128], index: 11, kind: input, shape index: {}]
  %s12 = inlined_call_operand.vmem [shape: f32[1,128], index: 12, kind: input, shape index: {}]
  %s13 = inlined_call_operand.hbm [shape: f32[2,128], index: 13, kind: output, shape index: {}]
  %s14 = sld [smem:[#allocation0]]
  $region62: #{nlayernet_forward.1} parent=0
    _
  %s16 = ssub.s32 1, %s14
  %s17 = scalar_select 0, %s16, %s14
  $region1: #{nlayernet_forward.1} parent=0
    #allocation2 [shape = 'u8[1024]{0}', space=vmem, size = 0x400, scoped, tag = 'output window, operand 0, single buffered']
    #allocation3 [shape = 's32[1]{0}', space=sflag, size = 0x4, scoped, tag = 'scoped memory for nlayernet_forward.1']
    %18 = vsyncpa [#allocation3], 0
    // Predicated region
    $region2: #{nlayernet_forward.1} parent=1 // pred_check
      _
    $region3: #{nlayernet_forward.1} parent=1 // pred_check_branch
      %20 = sbr.rel (0) target = $region5
    $region4: #{nlayernet_forward.1} parent=1 // pred_region
      _
    $region5: #{nlayernet_forward.1} parent=1 // pred_fallthru
      _
    // Predicated region
    $region6: #{nlayernet_forward.1} parent=1 // pred_check
      _
    $region7: #{nlayernet_forward.1} parent=1 // pred_check_branch
      %22 = sbr.rel (0) target = $region9
    $region8: #{nlayernet_forward.1} parent=1 // pred_region
      _
    $region9: #{nlayernet_forward.1} parent=1 // pred_fallthru
      _
    // Predicated region
    $region10: #{nlayernet_forward.1} parent=1 // pred_check
      _
    $region11: #{nlayernet_forward.1} parent=1 // pred_check_branch
      %24 = sbr.rel (0) target = $region13
    $region12: #{nlayernet_forward.1} parent=1 // pred_region
      _
    $region13: #{nlayernet_forward.1} parent=1 // pred_fallthru
      _
    // Predicated region
    $region14: #{nlayernet_forward.1} parent=1 // pred_check
      _
    $region15: #{nlayernet_forward.1} parent=1 // pred_check_branch
      %26 = sbr.rel (0) target = $region17
    $region16: #{nlayernet_forward.1} parent=1 // pred_region
      _
    $region17: #{nlayernet_forward.1} parent=1 // pred_fallthru
      _
    // Predicated region
    $region18: #{nlayernet_forward.1} parent=1 // pred_check
      _
    $region19: #{nlayernet_forward.1} parent=1 // pred_check_branch
      %28 = sbr.rel (0) target = $region21
    $region20: #{nlayernet_forward.1} parent=1 // pred_region
      _
    $region21: #{nlayernet_forward.1} parent=1 // pred_fallthru
      _
    // Predicated region
    $region22: #{nlayernet_forward.1} parent=1 // pred_check
      _
    $region23: #{nlayernet_forward.1} parent=1 // pred_check_branch
      %30 = sbr.rel (0) target = $region25
    $region24: #{nlayernet_forward.1} parent=1 // pred_region
      _
    $region25: #{nlayernet_forward.1} parent=1 // pred_fallthru
      _
    // Predicated region
    $region26: #{nlayernet_forward.1} parent=1 // pred_check
      _
    $region27: #{nlayernet_forward.1} parent=1 // pred_check_branch
      %32 = sbr.rel (0) target = $region29
    $region28: #{nlayernet_forward.1} parent=1 // pred_region
      _
    $region29: #{nlayernet_forward.1} parent=1 // pred_fallthru
      _
    // Predicated region
    $region30: #{nlayernet_forward.1} parent=1 // pred_check
      _
    $region31: #{nlayernet_forward.1} parent=1 // pred_check_branch
      %34 = sbr.rel (0) target = $region33
    $region32: #{nlayernet_forward.1} parent=1 // pred_region
      _
    $region33: #{nlayernet_forward.1} parent=1 // pred_fallthru
      _
    // Predicated region
    $region34: #{nlayernet_forward.1} parent=1 // pred_check
      _
    $region35: #{nlayernet_forward.1} parent=1 // pred_check_branch
      %36 = sbr.rel (0) target = $region37
    $region36: #{nlayernet_forward.1} parent=1 // pred_region
      _
    $region37: #{nlayernet_forward.1} parent=1 // pred_fallthru
      _
    // Predicated region
    $region38: #{nlayernet_forward.1} parent=1 // pred_check
      _
    $region39: #{nlayernet_forward.1} parent=1 // pred_check_branch
      %38 = sbr.rel (0) target = $region41
    $region40: #{nlayernet_forward.1} parent=1 // pred_region
      _
    $region41: #{nlayernet_forward.1} parent=1 // pred_fallthru
      _
    // Predicated region
    $region42: #{nlayernet_forward.1} parent=1 // pred_check
      _
    $region43: #{nlayernet_forward.1} parent=1 // pred_check_branch
      %40 = sbr.rel (0) target = $region45
    $region44: #{nlayernet_forward.1} parent=1 // pred_region
      _
    $region45: #{nlayernet_forward.1} parent=1 // pred_fallthru
      _
    // Predicated region
    $region46: #{nlayernet_forward.1} parent=1 // pred_check
      _
    $region47: #{nlayernet_forward.1} parent=1 // pred_check_branch
      %42 = sbr.rel (0) target = $region49
    $region48: #{nlayernet_forward.1} parent=1 // pred_region
      _
    $region49: #{nlayernet_forward.1} parent=1 // pred_fallthru
      _
    // Predicated region
    $region50: #{nlayernet_forward.1} parent=1 // pred_check
      _
    $region51: #{nlayernet_forward.1} parent=1 // pred_check_branch
      %44 = sbr.rel (0) target = $region53
    $region52: #{nlayernet_forward.1} parent=1 // pred_region
      _
    $region53: #{nlayernet_forward.1} parent=1 // pred_fallthru
      _
    %v45 = vld [vmem:[%s0] sm:$0x3]
    %s46 = scalar_lea.vmem %s0, 2
    %v47 = vld [vmem:[%s46] sm:$0x3]
    %49 = vrot.lane.b32.xlu0 %v47, 100
    %v50 = vpop.permute.xlu0 %49
    %vm52 = vcmask 818176
    %v53 = vsel %vm52, %v45, %v50
    %v54 = vld [vmem:[%s1] sm:$0xff]
    %v55 = vld [vmem:[%s1 + $0x8] sm:$0xff]
    %57 = vrot.lane.b32.xlu0 %v53, 127
    %v58 = vpop.permute.xlu0 %57
    %59 = vrot.lane.b32.xlu0 %v50, 127
    %v60 = vpop.permute.xlu0 %59
    %vm61 = vcmask 1039360
    %v62 = vsel %vm61, %v58, %v60
    %64 = vrot.lane.b32.xlu0 %v53, 71
    %v65 = vpop.permute.xlu0 %64
    %vm67 = vcmask 580608
    %v68 = vsel %vm67, %v60, %v65
    %s69 = scalar_lea.vmem %s1, 16
    %v70 = vld [vmem:[%s69] sm:$0xff]
    %v71 = vld [vmem:[%s69 + $0x8] sm:$0xff]
    %vm72 = vcmask 15360
    %v74 = vsel %vm72, %v70, 0
    %v77 = vsel %vm72, %v71, 0
    %vm79 = vcmask 1041408
    %v80 = vsel %vm79, %v62, 0
    %v83 = vsel %vm79, %v68, 0
    %85 = vmatprep.subr.mxu0 %v83
    %86 = vmatpush1.msra.mxu0 %v80
    %87 = vmatprep.subr.mxu0 0.0
    %88 = vmatpush1.msra.mxu0 0.0
    %89 = vmatprep.subr.mxu0 0.0
    %90 = vmatpush1.msra.mxu0 0.0
    %91 = vmatprep.subr.mxu0 0.0
    %92 = vmatpush1.msra.mxu0 0.0
    %93 = vmatprep.subr.mxu0 0.0
    %94 = vmatpush1.msra.mxu0 0.0
    %95 = vmatprep.subr.mxu0 0.0
    %96 = vmatpush1.msra.mxu0 0.0
    %97 = vmatprep.subr.mxu0 0.0
    %98 = vmatpush1.msra.mxu0 0.0
    %99 = vmatprep.subr.mxu0 0.0
    %100 = vmatpush1.msra.mxu0 0.0
    %101 = vmatprep.subr.mxu0 0.0
    %102 = vmatpush1.msra.mxu0 0.0
    %103 = vmatprep.subr.mxu0 0.0
    %104 = vmatpush1.msra.mxu0 0.0
    %105 = vmatprep.subr.mxu0 0.0
    %106 = vmatpush1.msra.mxu0 0.0
    %107 = vmatprep.subr.mxu0 0.0
    %108 = vmatpush1.msra.mxu0 0.0
    %109 = vmatprep.subr.mxu0 0.0
    %110 = vmatpush1.msra.mxu0 0.0
    %111 = vmatprep.subr.mxu0 0.0
    %112 = vmatpush1.msra.mxu0 0.0
    %113 = vmatprep.subr.mxu0 0.0
    %114 = vmatpush1.msra.mxu0 0.0
    %115 = vmatprep.subr.mxu0 0.0
    %116 = vmatpush1.msra.mxu0 0.0
    %117 = vmatprep.subr.mxu0 0.0
    %118 = vmatpush1.msra.mxu0 0.0
    %119 = vmatprep.subr.mxu0 0.0
    %120 = vmatpush1.msra.mxu0 0.0
    %121 = vmatprep.subr.mxu0 0.0
    %122 = vmatpush1.msra.mxu0 0.0
    %123 = vmatprep.subr.mxu0 0.0
    %124 = vmatpush1.msra.mxu0 0.0
    %125 = vmatprep.subr.mxu0 0.0
    %126 = vmatpush1.msra.mxu0 0.0
    %127 = vmatprep.subr.mxu0 0.0
    %128 = vmatpush1.msra.mxu0 0.0
    %129 = vmatprep.subr.mxu0 0.0
    %130 = vmatpush1.msra.mxu0 0.0
    %131 = vmatprep.subr.mxu0 0.0
    %132 = vmatpush1.msra.mxu0 0.0
    %133 = vmatprep.subr.mxu0 0.0
    %134 = vmatpush1.msra.mxu0 0.0
    %135 = vmatprep.subr.mxu0 0.0
    %136 = vmatpush1.msra.mxu0 0.0
    %137 = vmatprep.subr.mxu0 0.0
    %138 = vmatpush1.msra.mxu0 0.0
    %139 = vmatprep.subr.mxu0 0.0
    %140 = vmatpush1.msra.mxu0 0.0
    %141 = vmatprep.subr.mxu0 0.0
    %142 = vmatpush1.msra.mxu0 0.0
    %143 = vmatprep.subr.mxu0 0.0
    %144 = vmatpush1.msra.mxu0 0.0
    %145 = vmatprep.subr.mxu0 0.0
    %146 = vmatpush1.msra.mxu0 0.0
    %147 = vmatprep.subr.mxu0 0.0
    %148 = vmatpush1.msra.mxu0 0.0
    %149 = vmatprep.mubr.f32.mxu0 0.0
    %150 = vmatmul.mubr.f32.gmra.mrb[0].mxu0 %v74
    %v151 = vpop.f32.mrb[0].mxu0
    %v152 = vadd.f32 0.0, %v151
    %v153 = vpop.f32.mrb[0].mxu0
    %v154 = vadd.f32 0.0, %v153
    %155 = vmatprep.mubr.f32.mxu0 0.0
    %156 = vmatmul.mubr.f32.gmra.mrb[0].mxu0 %v77
    %v157 = vpop.f32.mrb[0].mxu0
    %v158 = vadd.f32 0.0, %v157
    %v159 = vpop.f32.mrb[0].mxu0
    %v160 = vadd.f32 0.0, %v159
    %161 = vdwg.mxu0
    %v163 = vsel %vm72, %v54, 0
    %v166 = vsel %vm72, %v55, 0
    %v168 = vsel %vm79, %v53, 0
    %v170 = vsel %vm79, %v50, 0
    %172 = vmatprep.subr.mxu0 %v170
    %173 = vmatpush1.msra.mxu0 %v168
    %174 = vmatprep.subr.mxu0 0.0
    %175 = vmatpush1.msra.mxu0 0.0
    %176 = vmatprep.subr.mxu0 0.0
    %177 = vmatpush1.msra.mxu0 0.0
    %178 = vmatprep.subr.mxu0 0.0
    %179 = vmatpush1.msra.mxu0 0.0
    %180 = vmatprep.subr.mxu0 0.0
    %181 = vmatpush1.msra.mxu0 0.0
    %182 = vmatprep.subr.mxu0 0.0
    %183 = vmatpush1.msra.mxu0 0.0
    %184 = vmatprep.subr.mxu0 0.0
    %185 = vmatpush1.msra.mxu0 0.0
    %186 = vmatprep.subr.mxu0 0.0
    %187 = vmatpush1.msra.mxu0 0.0
    %188 = vmatprep.subr.mxu0 0.0
    %189 = vmatpush1.msra.mxu0 0.0
    %190 = vmatprep.subr.mxu0 0.0
    %191 = vmatpush1.msra.mxu0 0.0
    %192 = vmatprep.subr.mxu0 0.0
    %193 = vmatpush1.msra.mxu0 0.0
    %194 = vmatprep.subr.mxu0 0.0
    %195 = vmatpush1.msra.mxu0 0.0
    %196 = vmatprep.subr.mxu0 0.0
    %197 = vmatpush1.msra.mxu0 0.0
    %198 = vmatprep.subr.mxu0 0.0
    %199 = vmatpush1.msra.mxu0 0.0
    %200 = vmatprep.subr.mxu0 0.0
    %201 = vmatpush1.msra.mxu0 0.0
    %202 = vmatprep.subr.mxu0 0.0
    %203 = vmatpush1.msra.mxu0 0.0
    %204 = vmatprep.subr.mxu0 0.0
    %205 = vmatpush1.msra.mxu0 0.0
    %206 = vmatprep.subr.mxu0 0.0
    %207 = vmatpush1.msra.mxu0 0.0
    %208 = vmatprep.subr.mxu0 0.0
    %209 = vmatpush1.msra.mxu0 0.0
    %210 = vmatprep.subr.mxu0 0.0
    %211 = vmatpush1.msra.mxu0 0.0
    %212 = vmatprep.subr.mxu0 0.0
    %213 = vmatpush1.msra.mxu0 0.0
    %214 = vmatprep.subr.mxu0 0.0
    %215 = vmatpush1.msra.mxu0 0.0
    %216 = vmatprep.subr.mxu0 0.0
    %217 = vmatpush1.msra.mxu0 0.0
    %218 = vmatprep.subr.mxu0 0.0
    %219 = vmatpush1.msra.mxu0 0.0
    %220 = vmatprep.subr.mxu0 0.0
    %221 = vmatpush1.msra.mxu0 0.0
    %222 = vmatprep.subr.mxu0 0.0
    %223 = vmatpush1.msra.mxu0 0.0
    %224 = vmatprep.subr.mxu0 0.0
    %225 = vmatpush1.msra.mxu0 0.0
    %226 = vmatprep.subr.mxu0 0.0
    %227 = vmatpush1.msra.mxu0 0.0
    %228 = vmatprep.subr.mxu0 0.0
    %229 = vmatpush1.msra.mxu0 0.0
    %230 = vmatprep.subr.mxu0 0.0
    %231 = vmatpush1.msra.mxu0 0.0
    %232 = vmatprep.subr.mxu0 0.0
    %233 = vmatpush1.msra.mxu0 0.0
    %234 = vmatprep.subr.mxu0 0.0
    %235 = vmatpush1.msra.mxu0 0.0
    %236 = vmatprep.mubr.f32.mxu0 0.0
    %237 = vmatmul.mubr.f32.gmra.mrb[0].mxu0 %v163
    %v238 = vpop.f32.mrb[0].mxu0
    %v239 = vadd.f32 %v152, %v238
    %v240 = vpop.f32.mrb[0].mxu0
    %v241 = vadd.f32 %v154, %v240
    %242 = vmatprep.mubr.f32.mxu0 0.0
    %243 = vmatmul.mubr.f32.gmra.mrb[0].mxu0 %v166
    %v244 = vpop.f32.mrb[0].mxu0
    %v245 = vadd.f32 %v158, %v244
    %v246 = vpop.f32.mrb[0].mxu0
    %v247 = vadd.f32 %v160, %v246
    %248 = vdwg.mxu0
    %249 = vrot.lane.b32.xlu0 %v53, 126
    %v250 = vpop.permute.xlu0 %249
    %251 = vrot.lane.b32.xlu0 %v50, 126
    %v252 = vpop.permute.xlu0 %251
    %vm253 = vcmask 1031168
    %v254 = vsel %vm253, %v250, %v252
    %256 = vrot.lane.b32.xlu0 %v53, 70
    %v257 = vpop.permute.xlu0 %256
    %vm259 = vcmask 572416
    %v260 = vsel %vm259, %v252, %v257
    %s261 = scalar_lea.vmem %s1, 32
    %v262 = vld [vmem:[%s261] sm:$0xff]
    %v263 = vld [vmem:[%s261 + $0x8] sm:$0xff]
    %v265 = vsel %vm72, %v262, 0
    %v268 = vsel %vm72, %v263, 0
    %v270 = vsel %vm79, %v254, 0
    %v273 = vsel %vm79, %v260, 0
    %275 = vmatprep.subr.mxu0 %v273
    %276 = vmatpush1.msra.mxu0 %v270
    %277 = vmatprep.subr.mxu0 0.0
    %278 = vmatpush1.msra.mxu0 0.0
    %279 = vmatprep.subr.mxu0 0.0
    %280 = vmatpush1.msra.mxu0 0.0
    %281 = vmatprep.subr.mxu0 0.0
    %282 = vmatpush1.msra.mxu0 0.0
    %283 = vmatprep.subr.mxu0 0.0
    %284 = vmatpush1.msra.mxu0 0.0
    %285 = vmatprep.subr.mxu0 0.0
    %286 = vmatpush1.msra.mxu0 0.0
    %287 = vmatprep.subr.mxu0 0.0
    %288 = vmatpush1.msra.mxu0 0.0
    %289 = vmatprep.subr.mxu0 0.0
    %290 = vmatpush1.msra.mxu0 0.0
    %291 = vmatprep.subr.mxu0 0.0
    %292 = vmatpush1.msra.mxu0 0.0
    %293 = vmatprep.subr.mxu0 0.0
    %294 = vmatpush1.msra.mxu0 0.0
    %295 = vmatprep.subr.mxu0 0.0
    %296 = vmatpush1.msra.mxu0 0.0
    %297 = vmatprep.subr.mxu0 0.0
    %298 = vmatpush1.msra.mxu0 0.0
    %299 = vmatprep.subr.mxu0 0.0
    %300 = vmatpush1.msra.mxu0 0.0
    %301 = vmatprep.subr.mxu0 0.0
    %302 = vmatpush1.msra.mxu0 0.0
    %303 = vmatprep.subr.mxu0 0.0
    %304 = vmatpush1.msra.mxu0 0.0
    %305 = vmatprep.subr.mxu0 0.0
    %306 = vmatpush1.msra.mxu0 0.0
    %307 = vmatprep.subr.mxu0 0.0
    %308 = vmatpush1.msra.mxu0 0.0
    %309 = vmatprep.subr.mxu0 0.0
    %310 = vmatpush1.msra.mxu0 0.0
    %311 = vmatprep.subr.mxu0 0.0
    %312 = vmatpush1.msra.mxu0 0.0
    %313 = vmatprep.subr.mxu0 0.0
    %314 = vmatpush1.msra.mxu0 0.0
    %315 = vmatprep.subr.mxu0 0.0
    %316 = vmatpush1.msra.mxu0 0.0
    %317 = vmatprep.subr.mxu0 0.0
    %318 = vmatpush1.msra.mxu0 0.0
    %319 = vmatprep.subr.mxu0 0.0
    %320 = vmatpush1.msra.mxu0 0.0
    %321 = vmatprep.subr.mxu0 0.0
    %322 = vmatpush1.msra.mxu0 0.0
    %323 = vmatprep.subr.mxu0 0.0
    %324 = vmatpush1.msra.mxu0 0.0
    %325 = vmatprep.subr.mxu0 0.0
    %326 = vmatpush1.msra.mxu0 0.0
    %327 = vmatprep.subr.mxu0 0.0
    %328 = vmatpush1.msra.mxu0 0.0
    %329 = vmatprep.subr.mxu0 0.0
    %330 = vmatpush1.msra.mxu0 0.0
    %331 = vmatprep.subr.mxu0 0.0
    %332 = vmatpush1.msra.mxu0 0.0
    %333 = vmatprep.subr.mxu0 0.0
    %334 = vmatpush1.msra.mxu0 0.0
    %335 = vmatprep.subr.mxu0 0.0
    %336 = vmatpush1.msra.mxu0 0.0
    %337 = vmatprep.subr.mxu0 0.0
    %338 = vmatpush1.msra.mxu0 0.0
    %339 = vmatprep.mubr.f32.mxu0 0.0
    %340 = vmatmul.mubr.f32.gmra.mrb[0].mxu0 %v265
    %v341 = vpop.f32.mrb[0].mxu0
    %v342 = vadd.f32 0.0, %v341
    %v343 = vpop.f32.mrb[0].mxu0
    %v344 = vadd.f32 0.0, %v343
    %345 = vmatprep.mubr.f32.mxu0 0.0
    %346 = vmatmul.mubr.f32.gmra.mrb[0].mxu0 %v268
    %v347 = vpop.f32.mrb[0].mxu0
    %v348 = vadd.f32 0.0, %v347
    %v349 = vpop.f32.mrb[0].mxu0
    %v350 = vadd.f32 0.0, %v349
    %351 = vdwg.mxu0
    %v352 = vadd.f32 %v239, %v342
    %v353 = vadd.f32 %v241, %v344
    %v354 = vadd.f32 %v245, %v348
    %v355 = vadd.f32 %v247, %v350
    %356 = vrot.lane.b32.xlu0 %v53, 118
    %v357 = vpop.permute.xlu0 %356
    %358 = vrot.lane.b32.xlu0 %v50, 118
    %v359 = vpop.permute.xlu0 %358
    %vm360 = vcmask 965632
    %v361 = vsel %vm360, %v357, %v359
    %363 = vrot.lane.b32.xlu0 %v53, 62
    %v364 = vpop.permute.xlu0 %363
    %vm366 = vcmask 506880
    %v367 = vsel %vm366, %v359, %v364
    %s368 = scalar_lea.vmem %s1, 48
    %v369 = vld [vmem:[%s368] sm:$0xff]
    %v370 = vld [vmem:[%s368 + $0x8] sm:$0xff]
    %v372 = vsel %vm72, %v369, 0
    %v375 = vsel %vm72, %v370, 0
    %v377 = vsel %vm79, %v361, 0
    %v380 = vsel %vm79, %v367, 0
    %382 = vmatprep.subr.mxu0 %v380
    %383 = vmatpush1.msra.mxu0 %v377
    %384 = vmatprep.subr.mxu0 0.0
    %385 = vmatpush1.msra.mxu0 0.0
    %386 = vmatprep.subr.mxu0 0.0
    %387 = vmatpush1.msra.mxu0 0.0
    %388 = vmatprep.subr.mxu0 0.0
    %389 = vmatpush1.msra.mxu0 0.0
    %390 = vmatprep.subr.mxu0 0.0
    %391 = vmatpush1.msra.mxu0 0.0
    %392 = vmatprep.subr.mxu0 0.0
    %393 = vmatpush1.msra.mxu0 0.0
    %394 = vmatprep.subr.mxu0 0.0
    %395 = vmatpush1.msra.mxu0 0.0
    %396 = vmatprep.subr.mxu0 0.0
    %397 = vmatpush1.msra.mxu0 0.0
    %398 = vmatprep.subr.mxu0 0.0
    %399 = vmatpush1.msra.mxu0 0.0
    %400 = vmatprep.subr.mxu0 0.0
    %401 = vmatpush1.msra.mxu0 0.0
    %402 = vmatprep.subr.mxu0 0.0
    %403 = vmatpush1.msra.mxu0 0.0
    %404 = vmatprep.subr.mxu0 0.0
    %405 = vmatpush1.msra.mxu0 0.0
    %406 = vmatprep.subr.mxu0 0.0
    %407 = vmatpush1.msra.mxu0 0.0
    %408 = vmatprep.subr.mxu0 0.0
    %409 = vmatpush1.msra.mxu0 0.0
    %410 = vmatprep.subr.mxu0 0.0
    %411 = vmatpush1.msra.mxu0 0.0
    %412 = vmatprep.subr.mxu0 0.0
    %413 = vmatpush1.msra.mxu0 0.0
    %414 = vmatprep.subr.mxu0 0.0
    %415 = vmatpush1.msra.mxu0 0.0
    %416 = vmatprep.subr.mxu0 0.0
    %417 = vmatpush1.msra.mxu0 0.0
    %418 = vmatprep.subr.mxu0 0.0
    %419 = vmatpush1.msra.mxu0 0.0
    %420 = vmatprep.subr.mxu0 0.0
    %421 = vmatpush1.msra.mxu0 0.0
    %422 = vmatprep.subr.mxu0 0.0
    %423 = vmatpush1.msra.mxu0 0.0
    %424 = vmatprep.subr.mxu0 0.0
    %425 = vmatpush1.msra.mxu0 0.0
    %426 = vmatprep.subr.mxu0 0.0
    %427 = vmatpush1.msra.mxu0 0.0
    %428 = vmatprep.subr.mxu0 0.0
    %429 = vmatpush1.msra.mxu0 0.0
    %430 = vmatprep.subr.mxu0 0.0
    %431 = vmatpush1.msra.mxu0 0.0
    %432 = vmatprep.subr.mxu0 0.0
    %433 = vmatpush1.msra.mxu0 0.0
    %434 = vmatprep.subr.mxu0 0.0
    %435 = vmatpush1.msra.mxu0 0.0
    %436 = vmatprep.subr.mxu0 0.0
    %437 = vmatpush1.msra.mxu0 0.0
    %438 = vmatprep.subr.mxu0 0.0
    %439 = vmatpush1.msra.mxu0 0.0
    %440 = vmatprep.subr.mxu0 0.0
    %441 = vmatpush1.msra.mxu0 0.0
    %442 = vmatprep.subr.mxu0 0.0
    %443 = vmatpush1.msra.mxu0 0.0
    %444 = vmatprep.subr.mxu0 0.0
    %445 = vmatpush1.msra.mxu0 0.0
    %446 = vmatprep.mubr.f32.mxu0 0.0
    %447 = vmatmul.mubr.f32.gmra.mrb[0].mxu0 %v372
    %v448 = vpop.f32.mrb[0].mxu0
    %v449 = vadd.f32 0.0, %v448
    %v450 = vpop.f32.mrb[0].mxu0
    %v451 = vadd.f32 0.0, %v450
    %452 = vmatprep.mubr.f32.mxu0 0.0
    %453 = vmatmul.mubr.f32.gmra.mrb[0].mxu0 %v375
    %v454 = vpop.f32.mrb[0].mxu0
    %v455 = vadd.f32 0.0, %v454
    %v456 = vpop.f32.mrb[0].mxu0
    %v457 = vadd.f32 0.0, %v456
    %458 = vdwg.mxu0
    %v459 = vadd.f32 %v352, %v449
    %v460 = vadd.f32 %v353, %v451
    %v461 = vadd.f32 %v354, %v455
    %v462 = vadd.f32 %v355, %v457
    %463 = vrot.lane.b32.xlu0 %v53, 117
    %v464 = vpop.permute.xlu0 %463
    %465 = vrot.lane.b32.xlu0 %v50, 117
    %v466 = vpop.permute.xlu0 %465
    %vm467 = vcmask 957440
    %v468 = vsel %vm467, %v464, %v466
    %470 = vrot.lane.b32.xlu0 %v53, 61
    %v471 = vpop.permute.xlu0 %470
    %vm473 = vcmask 498688
    %v474 = vsel %vm473, %v466, %v471
    %s475 = scalar_lea.vmem %s1, 64
    %v476 = vld [vmem:[%s475] sm:$0xff]
    %v477 = vld [vmem:[%s475 + $0x8] sm:$0xff]
    %v479 = vsel %vm72, %v476, 0
    %v482 = vsel %vm72, %v477, 0
    %v484 = vsel %vm79, %v468, 0
    %v487 = vsel %vm79, %v474, 0
    %489 = vmatprep.subr.mxu0 %v487
    %490 = vmatpush1.msra.mxu0 %v484
    %491 = vmatprep.subr.mxu0 0.0
    %492 = vmatpush1.msra.mxu0 0.0
    %493 = vmatprep.subr.mxu0 0.0
    %494 = vmatpush1.msra.mxu0 0.0
    %495 = vmatprep.subr.mxu0 0.0
    %496 = vmatpush1.msra.mxu0 0.0
    %497 = vmatprep.subr.mxu0 0.0
    %498 = vmatpush1.msra.mxu0 0.0
    %499 = vmatprep.subr.mxu0 0.0
    %500 = vmatpush1.msra.mxu0 0.0
    %501 = vmatprep.subr.mxu0 0.0
    %502 = vmatpush1.msra.mxu0 0.0
    %503 = vmatprep.subr.mxu0 0.0
    %504 = vmatpush1.msra.mxu0 0.0
    %505 = vmatprep.subr.mxu0 0.0
    %506 = vmatpush1.msra.mxu0 0.0
    %507 = vmatprep.subr.mxu0 0.0
    %508 = vmatpush1.msra.mxu0 0.0
    %509 = vmatprep.subr.mxu0 0.0
    %510 = vmatpush1.msra.mxu0 0.0
    %511 = vmatprep.subr.mxu0 0.0
    %512 = vmatpush1.msra.mxu0 0.0
    %513 = vmatprep.subr.mxu0 0.0
    %514 = vmatpush1.msra.mxu0 0.0
    %515 = vmatprep.subr.mxu0 0.0
    %516 = vmatpush1.msra.mxu0 0.0
    %517 = vmatprep.subr.mxu0 0.0
    %518 = vmatpush1.msra.mxu0 0.0
    %519 = vmatprep.subr.mxu0 0.0
    %520 = vmatpush1.msra.mxu0 0.0
    %521 = vmatprep.subr.mxu0 0.0
    %522 = vmatpush1.msra.mxu0 0.0
    %523 = vmatprep.subr.mxu0 0.0
    %524 = vmatpush1.msra.mxu0 0.0
    %525 = vmatprep.subr.mxu0 0.0
    %526 = vmatpush1.msra.mxu0 0.0
    %527 = vmatprep.subr.mxu0 0.0
    %528 = vmatpush1.msra.mxu0 0.0
    %529 = vmatprep.subr.mxu0 0.0
    %530 = vmatpush1.msra.mxu0 0.0
    %531 = vmatprep.subr.mxu0 0.0
    %532 = vmatpush1.msra.mxu0 0.0
    %533 = vmatprep.subr.mxu0 0.0
    %534 = vmatpush1.msra.mxu0 0.0
    %535 = vmatprep.subr.mxu0 0.0
    %536 = vmatpush1.msra.mxu0 0.0
    %537 = vmatprep.subr.mxu0 0.0
    %538 = vmatpush1.msra.mxu0 0.0
    %539 = vmatprep.subr.mxu0 0.0
    %540 = vmatpush1.msra.mxu0 0.0
    %541 = vmatprep.subr.mxu0 0.0
    %542 = vmatpush1.msra.mxu0 0.0
    %543 = vmatprep.subr.mxu0 0.0
    %544 = vmatpush1.msra.mxu0 0.0
    %545 = vmatprep.subr.mxu0 0.0
    %546 = vmatpush1.msra.mxu0 0.0
    %547 = vmatprep.subr.mxu0 0.0
    %548 = vmatpush1.msra.mxu0 0.0
    %549 = vmatprep.subr.mxu0 0.0
    %550 = vmatpush1.msra.mxu0 0.0
    %551 = vmatprep.subr.mxu0 0.0
    %552 = vmatpush1.msra.mxu0 0.0
    %553 = vmatprep.mubr.f32.mxu0 0.0
    %554 = vmatmul.mubr.f32.gmra.mrb[0].mxu0 %v479
    %v555 = vpop.f32.mrb[0].mxu0
    %v556 = vadd.f32 0.0, %v555
    %v557 = vpop.f32.mrb[0].mxu0
    %v558 = vadd.f32 0.0, %v557
    %559 = vmatprep.mubr.f32.mxu0 0.0
    %560 = vmatmul.mubr.f32.gmra.mrb[0].mxu0 %v482
    %v561 = vpop.f32.mrb[0].mxu0
    %v562 = vadd.f32 0.0, %v561
    %v563 = vpop.f32.mrb[0].mxu0
    %v564 = vadd.f32 0.0, %v563
    %565 = vdwg.mxu0
    %v566 = vadd.f32 %v459, %v556
    %v567 = vadd.f32 %v460, %v558
    %v568 = vadd.f32 %v461, %v562
    %v569 = vadd.f32 %v462, %v564
    %570 = vrot.lane.b32.xlu0 %v53, 116
    %v571 = vpop.permute.xlu0 %570
    %572 = vrot.lane.b32.xlu0 %v50, 116
    %v573 = vpop.permute.xlu0 %572
    %vm574 = vcmask 949248
    %v575 = vsel %vm574, %v571, %v573
    %577 = vrot.lane.b32.xlu0 %v53, 60
    %v578 = vpop.permute.xlu0 %577
    %vm580 = vcmask 490496
    %v581 = vsel %vm580, %v573, %v578
    %s582 = scalar_lea.vmem %s1, 80
    %v583 = vld [vmem:[%s582] sm:$0xff]
    %v584 = vld [vmem:[%s582 + $0x8] sm:$0xff]
    %v586 = vsel %vm72, %v583, 0
    %v589 = vsel %vm72, %v584, 0
    %v591 = vsel %vm79, %v575, 0
    %v594 = vsel %vm79, %v581, 0
    %596 = vmatprep.subr.mxu0 %v594
    %597 = vmatpush1.msra.mxu0 %v591
    %598 = vmatprep.subr.mxu0 0.0
    %599 = vmatpush1.msra.mxu0 0.0
    %600 = vmatprep.subr.mxu0 0.0
    %601 = vmatpush1.msra.mxu0 0.0
    %602 = vmatprep.subr.mxu0 0.0
    %603 = vmatpush1.msra.mxu0 0.0
    %604 = vmatprep.subr.mxu0 0.0
    %605 = vmatpush1.msra.mxu0 0.0
    %606 = vmatprep.subr.mxu0 0.0
    %607 = vmatpush1.msra.mxu0 0.0
    %608 = vmatprep.subr.mxu0 0.0
    %609 = vmatpush1.msra.mxu0 0.0
    %610 = vmatprep.subr.mxu0 0.0
    %611 = vmatpush1.msra.mxu0 0.0
    %612 = vmatprep.subr.mxu0 0.0
    %613 = vmatpush1.msra.mxu0 0.0
    %614 = vmatprep.subr.mxu0 0.0
    %615 = vmatpush1.msra.mxu0 0.0
    %616 = vmatprep.subr.mxu0 0.0
    %617 = vmatpush1.msra.mxu0 0.0
    %618 = vmatprep.subr.mxu0 0.0
    %619 = vmatpush1.msra.mxu0 0.0
    %620 = vmatprep.subr.mxu0 0.0
    %621 = vmatpush1.msra.mxu0 0.0
    %622 = vmatprep.subr.mxu0 0.0
    %623 = vmatpush1.msra.mxu0 0.0
    %624 = vmatprep.subr.mxu0 0.0
    %625 = vmatpush1.msra.mxu0 0.0
    %626 = vmatprep.subr.mxu0 0.0
    %627 = vmatpush1.msra.mxu0 0.0
    %628 = vmatprep.subr.mxu0 0.0
    %629 = vmatpush1.msra.mxu0 0.0
    %630 = vmatprep.subr.mxu0 0.0
    %631 = vmatpush1.msra.mxu0 0.0
    %632 = vmatprep.subr.mxu0 0.0
    %633 = vmatpush1.msra.mxu0 0.0
    %634 = vmatprep.subr.mxu0 0.0
    %635 = vmatpush1.msra.mxu0 0.0
    %636 = vmatprep.subr.mxu0 0.0
    %637 = vmatpush1.msra.mxu0 0.0
    %638 = vmatprep.subr.mxu0 0.0
    %639 = vmatpush1.msra.mxu0 0.0
    %640 = vmatprep.subr.mxu0 0.0
    %641 = vmatpush1.msra.mxu0 0.0
    %642 = vmatprep.subr.mxu0 0.0
    %643 = vmatpush1.msra.mxu0 0.0
    %644 = vmatprep.subr.mxu0 0.0
    %645 = vmatpush1.msra.mxu0 0.0
    %646 = vmatprep.subr.mxu0 0.0
    %647 = vmatpush1.msra.mxu0 0.0
    %648 = vmatprep.subr.mxu0 0.0
    %649 = vmatpush1.msra.mxu0 0.0
    %650 = vmatprep.subr.mxu0 0.0
    %651 = vmatpush1.msra.mxu0 0.0
    %652 = vmatprep.subr.mxu0 0.0
    %653 = vmatpush1.msra.mxu0 0.0
    %654 = vmatprep.subr.mxu0 0.0
    %655 = vmatpush1.msra.mxu0 0.0
    %656 = vmatprep.subr.mxu0 0.0
    %657 = vmatpush1.msra.mxu0 0.0
    %658 = vmatprep.subr.mxu0 0.0
    %659 = vmatpush1.msra.mxu0 0.0
    %660 = vmatprep.mubr.f32.mxu0 0.0
    %661 = vmatmul.mubr.f32.gmra.mrb[0].mxu0 %v586
    %v662 = vpop.f32.mrb[0].mxu0
    %v663 = vadd.f32 0.0, %v662
    %v664 = vpop.f32.mrb[0].mxu0
    %v665 = vadd.f32 0.0, %v664
    %666 = vmatprep.mubr.f32.mxu0 0.0
    %667 = vmatmul.mubr.f32.gmra.mrb[0].mxu0 %v589
    %v668 = vpop.f32.mrb[0].mxu0
    %v669 = vadd.f32 0.0, %v668
    %v670 = vpop.f32.mrb[0].mxu0
    %v671 = vadd.f32 0.0, %v670
    %672 = vdwg.mxu0
    %v673 = vadd.f32 %v566, %v663
    %v674 = vadd.f32 %v567, %v665
    %v675 = vadd.f32 %v568, %v669
    %v676 = vadd.f32 %v569, %v671
    %677 = vrot.lane.b32.xlu0 %v53, 108
    %v678 = vpop.permute.xlu0 %677
    %679 = vrot.lane.b32.xlu0 %v50, 108
    %v680 = vpop.permute.xlu0 %679
    %vm681 = vcmask 883712
    %v682 = vsel %vm681, %v678, %v680
    %684 = vrot.lane.b32.xlu0 %v53, 52
    %v685 = vpop.permute.xlu0 %684
    %vm687 = vcmask 424960
    %v688 = vsel %vm687, %v680, %v685
    %s689 = scalar_lea.vmem %s1, 96
    %v690 = vld [vmem:[%s689] sm:$0xff]
    %v691 = vld [vmem:[%s689 + $0x8] sm:$0xff]
    %v693 = vsel %vm72, %v690, 0
    %v696 = vsel %vm72, %v691, 0
    %v698 = vsel %vm79, %v682, 0
    %v701 = vsel %vm79, %v688, 0
    %703 = vmatprep.subr.mxu0 %v701
    %704 = vmatpush1.msra.mxu0 %v698
    %705 = vmatprep.subr.mxu0 0.0
    %706 = vmatpush1.msra.mxu0 0.0
    %707 = vmatprep.subr.mxu0 0.0
    %708 = vmatpush1.msra.mxu0 0.0
    %709 = vmatprep.subr.mxu0 0.0
    %710 = vmatpush1.msra.mxu0 0.0
    %711 = vmatprep.subr.mxu0 0.0
    %712 = vmatpush1.msra.mxu0 0.0
    %713 = vmatprep.subr.mxu0 0.0
    %714 = vmatpush1.msra.mxu0 0.0
    %715 = vmatprep.subr.mxu0 0.0
    %716 = vmatpush1.msra.mxu0 0.0
    %717 = vmatprep.subr.mxu0 0.0
    %718 = vmatpush1.msra.mxu0 0.0
    %719 = vmatprep.subr.mxu0 0.0
    %720 = vmatpush1.msra.mxu0 0.0
    %721 = vmatprep.subr.mxu0 0.0
    %722 = vmatpush1.msra.mxu0 0.0
    %723 = vmatprep.subr.mxu0 0.0
    %724 = vmatpush1.msra.mxu0 0.0
    %725 = vmatprep.subr.mxu0 0.0
    %726 = vmatpush1.msra.mxu0 0.0
    %727 = vmatprep.subr.mxu0 0.0
    %728 = vmatpush1.msra.mxu0 0.0
    %729 = vmatprep.subr.mxu0 0.0
    %730 = vmatpush1.msra.mxu0 0.0
    %731 = vmatprep.subr.mxu0 0.0
    %732 = vmatpush1.msra.mxu0 0.0
    %733 = vmatprep.subr.mxu0 0.0
    %734 = vmatpush1.msra.mxu0 0.0
    %735 = vmatprep.subr.mxu0 0.0
    %736 = vmatpush1.msra.mxu0 0.0
    %737 = vmatprep.subr.mxu0 0.0
    %738 = vmatpush1.msra.mxu0 0.0
    %739 = vmatprep.subr.mxu0 0.0
    %740 = vmatpush1.msra.mxu0 0.0
    %741 = vmatprep.subr.mxu0 0.0
    %742 = vmatpush1.msra.mxu0 0.0
    %743 = vmatprep.subr.mxu0 0.0
    %744 = vmatpush1.msra.mxu0 0.0
    %745 = vmatprep.subr.mxu0 0.0
    %746 = vmatpush1.msra.mxu0 0.0
    %747 = vmatprep.subr.mxu0 0.0
    %748 = vmatpush1.msra.mxu0 0.0
    %749 = vmatprep.subr.mxu0 0.0
    %750 = vmatpush1.msra.mxu0 0.0
    %751 = vmatprep.subr.mxu0 0.0
    %752 = vmatpush1.msra.mxu0 0.0
    %753 = vmatprep.subr.mxu0 0.0
    %754 = vmatpush1.msra.mxu0 0.0
    %755 = vmatprep.subr.mxu0 0.0
    %756 = vmatpush1.msra.mxu0 0.0
    %757 = vmatprep.subr.mxu0 0.0
    %758 = vmatpush1.msra.mxu0 0.0
    %759 = vmatprep.subr.mxu0 0.0
    %760 = vmatpush1.msra.mxu0 0.0
    %761 = vmatprep.subr.mxu0 0.0
    %762 = vmatpush1.msra.mxu0 0.0
    %763 = vmatprep.subr.mxu0 0.0
    %764 = vmatpush1.msra.mxu0 0.0
    %765 = vmatprep.subr.mxu0 0.0
    %766 = vmatpush1.msra.mxu0 0.0
    %767 = vmatprep.mubr.f32.mxu0 0.0
    %768 = vmatmul.mubr.f32.gmra.mrb[0].mxu0 %v693
    %v769 = vpop.f32.mrb[0].mxu0
    %v770 = vadd.f32 0.0, %v769
    %v771 = vpop.f32.mrb[0].mxu0
    %v772 = vadd.f32 0.0, %v771
    %773 = vmatprep.mubr.f32.mxu0 0.0
    %774 = vmatmul.mubr.f32.gmra.mrb[0].mxu0 %v696
    %v775 = vpop.f32.mrb[0].mxu0
    %v776 = vadd.f32 0.0, %v775
    %v777 = vpop.f32.mrb[0].mxu0
    %v778 = vadd.f32 0.0, %v777
    %779 = vdwg.mxu0
    %v780 = vadd.f32 %v673, %v770
    %v781 = vadd.f32 %v674, %v772
    %v782 = vadd.f32 %v675, %v776
    %v783 = vadd.f32 %v676, %v778
    %784 = vrot.lane.b32.xlu0 %v53, 107
    %v785 = vpop.permute.xlu0 %784
    %786 = vrot.lane.b32.xlu0 %v50, 107
    %v787 = vpop.permute.xlu0 %786
    %vm788 = vcmask 875520
    %v789 = vsel %vm788, %v785, %v787
    %791 = vrot.lane.b32.xlu0 %v53, 51
    %v792 = vpop.permute.xlu0 %791
    %vm794 = vcmask 416768
    %v795 = vsel %vm794, %v787, %v792
    %s796 = scalar_lea.vmem %s1, 112
    %v797 = vld [vmem:[%s796] sm:$0xff]
    %v798 = vld [vmem:[%s796 + $0x8] sm:$0xff]
    %v800 = vsel %vm72, %v797, 0
    %v803 = vsel %vm72, %v798, 0
    %v805 = vsel %vm79, %v789, 0
    %v808 = vsel %vm79, %v795, 0
    %810 = vmatprep.subr.mxu0 %v808
    %811 = vmatpush1.msra.mxu0 %v805
    %812 = vmatprep.subr.mxu0 0.0
    %813 = vmatpush1.msra.mxu0 0.0
    %814 = vmatprep.subr.mxu0 0.0
    %815 = vmatpush1.msra.mxu0 0.0
    %816 = vmatprep.subr.mxu0 0.0
    %817 = vmatpush1.msra.mxu0 0.0
    %818 = vmatprep.subr.mxu0 0.0
    %819 = vmatpush1.msra.mxu0 0.0
    %820 = vmatprep.subr.mxu0 0.0
    %821 = vmatpush1.msra.mxu0 0.0
    %822 = vmatprep.subr.mxu0 0.0
    %823 = vmatpush1.msra.mxu0 0.0
    %824 = vmatprep.subr.mxu0 0.0
    %825 = vmatpush1.msra.mxu0 0.0
    %826 = vmatprep.subr.mxu0 0.0
    %827 = vmatpush1.msra.mxu0 0.0
    %828 = vmatprep.subr.mxu0 0.0
    %829 = vmatpush1.msra.mxu0 0.0
    %830 = vmatprep.subr.mxu0 0.0
    %831 = vmatpush1.msra.mxu0 0.0
    %832 = vmatprep.subr.mxu0 0.0
    %833 = vmatpush1.msra.mxu0 0.0
    %834 = vmatprep.subr.mxu0 0.0
    %835 = vmatpush1.msra.mxu0 0.0
    %836 = vmatprep.subr.mxu0 0.0
    %837 = vmatpush1.msra.mxu0 0.0
    %838 = vmatprep.subr.mxu0 0.0
    %839 = vmatpush1.msra.mxu0 0.0
    %840 = vmatprep.subr.mxu0 0.0
    %841 = vmatpush1.msra.mxu0 0.0
    %842 = vmatprep.subr.mxu0 0.0
    %843 = vmatpush1.msra.mxu0 0.0
    %844 = vmatprep.subr.mxu0 0.0
    %845 = vmatpush1.msra.mxu0 0.0
    %846 = vmatprep.subr.mxu0 0.0
    %847 = vmatpush1.msra.mxu0 0.0
    %848 = vmatprep.subr.mxu0 0.0
    %849 = vmatpush1.msra.mxu0 0.0
    %850 = vmatprep.subr.mxu0 0.0
    %851 = vmatpush1.msra.mxu0 0.0
    %852 = vmatprep.subr.mxu0 0.0
    %853 = vmatpush1.msra.mxu0 0.0
    %854 = vmatprep.subr.mxu0 0.0
    %855 = vmatpush1.msra.mxu0 0.0
    %856 = vmatprep.subr.mxu0 0.0
    %857 = vmatpush1.msra.mxu0 0.0
    %858 = vmatprep.subr.mxu0 0.0
    %859 = vmatpush1.msra.mxu0 0.0
    %860 = vmatprep.subr.mxu0 0.0
    %861 = vmatpush1.msra.mxu0 0.0
    %862 = vmatprep.subr.mxu0 0.0
    %863 = vmatpush1.msra.mxu0 0.0
    %864 = vmatprep.subr.mxu0 0.0
    %865 = vmatpush1.msra.mxu0 0.0
    %866 = vmatprep.subr.mxu0 0.0
    %867 = vmatpush1.msra.mxu0 0.0
    %868 = vmatprep.subr.mxu0 0.0
    %869 = vmatpush1.msra.mxu0 0.0
    %870 = vmatprep.subr.mxu0 0.0
    %871 = vmatpush1.msra.mxu0 0.0
    %872 = vmatprep.subr.mxu0 0.0
    %873 = vmatpush1.msra.mxu0 0.0
    %874 = vmatprep.mubr.f32.mxu0 0.0
    %875 = vmatmul.mubr.f32.gmra.mrb[0].mxu0 %v800
    %v876 = vpop.f32.mrb[0].mxu0
    %v877 = vadd.f32 0.0, %v876
    %v878 = vpop.f32.mrb[0].mxu0
    %v879 = vadd.f32 0.0, %v878
    %880 = vmatprep.mubr.f32.mxu0 0.0
    %881 = vmatmul.mubr.f32.gmra.mrb[0].mxu0 %v803
    %v882 = vpop.f32.mrb[0].mxu0
    %v883 = vadd.f32 0.0, %v882
    %v884 = vpop.f32.mrb[0].mxu0
    %v885 = vadd.f32 0.0, %v884
    %886 = vdwg.mxu0
    %v887 = vadd.f32 %v780, %v877
    %v888 = vadd.f32 %v781, %v879
    %v889 = vadd.f32 %v782, %v883
    %v890 = vadd.f32 %v783, %v885
    %891 = vrot.lane.b32.xlu0 %v53, 106
    %v892 = vpop.permute.xlu0 %891
    %893 = vrot.lane.b32.xlu0 %v50, 106
    %v894 = vpop.permute.xlu0 %893
    %vm895 = vcmask 867328
    %v896 = vsel %vm895, %v892, %v894
    %898 = vrot.lane.b32.xlu0 %v53, 50
    %v899 = vpop.permute.xlu0 %898
    %vm901 = vcmask 408576
    %v902 = vsel %vm901, %v894, %v899
    %s903 = scalar_lea.vmem %s1, 128
    %v904 = vld [vmem:[%s903] sm:$0xff]
    %v905 = vld [vmem:[%s903 + $0x8] sm:$0xff]
    %v907 = vsel %vm72, %v904, 0
    %v910 = vsel %vm72, %v905, 0
    %v912 = vsel %vm79, %v896, 0
    %v915 = vsel %vm79, %v902, 0
    %917 = vmatprep.subr.mxu0 %v915
    %918 = vmatpush1.msra.mxu0 %v912
    %919 = vmatprep.subr.mxu0 0.0
    %920 = vmatpush1.msra.mxu0 0.0
    %921 = vmatprep.subr.mxu0 0.0
    %922 = vmatpush1.msra.mxu0 0.0
    %923 = vmatprep.subr.mxu0 0.0
    %924 = vmatpush1.msra.mxu0 0.0
    %925 = vmatprep.subr.mxu0 0.0
    %926 = vmatpush1.msra.mxu0 0.0
    %927 = vmatprep.subr.mxu0 0.0
    %928 = vmatpush1.msra.mxu0 0.0
    %929 = vmatprep.subr.mxu0 0.0
    %930 = vmatpush1.msra.mxu0 0.0
    %931 = vmatprep.subr.mxu0 0.0
    %932 = vmatpush1.msra.mxu0 0.0
    %933 = vmatprep.subr.mxu0 0.0
    %934 = vmatpush1.msra.mxu0 0.0
    %935 = vmatprep.subr.mxu0 0.0
    %936 = vmatpush1.msra.mxu0 0.0
    %937 = vmatprep.subr.mxu0 0.0
    %938 = vmatpush1.msra.mxu0 0.0
    %939 = vmatprep.subr.mxu0 0.0
    %940 = vmatpush1.msra.mxu0 0.0
    %941 = vmatprep.subr.mxu0 0.0
    %942 = vmatpush1.msra.mxu0 0.0
    %943 = vmatprep.subr.mxu0 0.0
    %944 = vmatpush1.msra.mxu0 0.0
    %945 = vmatprep.subr.mxu0 0.0
    %946 = vmatpush1.msra.mxu0 0.0
    %947 = vmatprep.subr.mxu0 0.0
    %948 = vmatpush1.msra.mxu0 0.0
    %949 = vmatprep.subr.mxu0 0.0
    %950 = vmatpush1.msra.mxu0 0.0
    %951 = vmatprep.subr.mxu0 0.0
    %952 = vmatpush1.msra.mxu0 0.0
    %953 = vmatprep.subr.mxu0 0.0
    %954 = vmatpush1.msra.mxu0 0.0
    %955 = vmatprep.subr.mxu0 0.0
    %956 = vmatpush1.msra.mxu0 0.0
    %957 = vmatprep.subr.mxu0 0.0
    %958 = vmatpush1.msra.mxu0 0.0
    %959 = vmatprep.subr.mxu0 0.0
    %960 = vmatpush1.msra.mxu0 0.0
    %961 = vmatprep.subr.mxu0 0.0
    %962 = vmatpush1.msra.mxu0 0.0
    %963 = vmatprep.subr.mxu0 0.0
    %964 = vmatpush1.msra.mxu0 0.0
    %965 = vmatprep.subr.mxu0 0.0
    %966 = vmatpush1.msra.mxu0 0.0
    %967 = vmatprep.subr.mxu0 0.0
    %968 = vmatpush1.msra.mxu0 0.0
    %969 = vmatprep.subr.mxu0 0.0
    %970 = vmatpush1.msra.mxu0 0.0
    %971 = vmatprep.subr.mxu0 0.0
    %972 = vmatpush1.msra.mxu0 0.0
    %973 = vmatprep.subr.mxu0 0.0
    %974 = vmatpush1.msra.mxu0 0.0
    %975 = vmatprep.subr.mxu0 0.0
    %976 = vmatpush1.msra.mxu0 0.0
    %977 = vmatprep.subr.mxu0 0.0
    %978 = vmatpush1.msra.mxu0 0.0
    %979 = vmatprep.subr.mxu0 0.0
    %980 = vmatpush1.msra.mxu0 0.0
    %981 = vmatprep.mubr.f32.mxu0 0.0
    %982 = vmatmul.mubr.f32.gmra.mrb[0].mxu0 %v907
    %v983 = vpop.f32.mrb[0].mxu0
    %v984 = vadd.f32 0.0, %v983
    %v985 = vpop.f32.mrb[0].mxu0
    %v986 = vadd.f32 0.0, %v985
    %987 = vmatprep.mubr.f32.mxu0 0.0
    %988 = vmatmul.mubr.f32.gmra.mrb[0].mxu0 %v910
    %v989 = vpop.f32.mrb[0].mxu0
    %v990 = vadd.f32 0.0, %v989
    %v991 = vpop.f32.mrb[0].mxu0
    %v992 = vadd.f32 0.0, %v991
    %993 = vdwg.mxu0
    %v994 = vadd.f32 %v887, %v984
    %v995 = vadd.f32 %v888, %v986
    %v996 = vadd.f32 %v889, %v990
    %v997 = vadd.f32 %v890, %v992
    %v998 = vld [vmem:[%s2] sm:$0xff]
    %v999 = vld [vmem:[%s2 + $0x8] sm:$0xff]
    %1001 = vset.pattern.permute.xlu0 0
    %1002 = vperm.xlu0 %1001, %v998
    %v1003 = vpop.permute.xlu0 %1002
    %1006 = vset.pattern.permute.xlu0 0
    %1007 = vperm.xlu0 %1006, %v999
    %v1008 = vpop.permute.xlu0 %1007
    %v1010 = vadd.f32 %v994, %v1003
    %v1011 = vadd.f32 %v995, %v1003
    %v1012 = vadd.f32 %v996, %v1008
    %v1013 = vadd.f32 %v997, %v1008
    %vm1014 = vcmp.ge.f32.partialorder %v1010, 0.0
    %vm1015 = vcmp.ge.f32.partialorder %v1011, 0.0
    %vm1016 = vcmp.ge.f32.partialorder %v1012, 0.0
    %vm1017 = vcmp.ge.f32.partialorder %v1013, 0.0
    %v1018 = vmul.f32 %v1010, 0.01
    %v1019 = vmul.f32 %v1011, 0.01
    %v1020 = vmul.f32 %v1012, 0.01
    %v1021 = vmul.f32 %v1013, 0.01
    %v1022 = vsel %vm1014, %v1010, %v1018
    %v1023 = vsel %vm1015, %v1011, %v1019
    %v1024 = vsel %vm1016, %v1012, %v1020
    %v1025 = vsel %vm1017, %v1013, %v1021
    %1030 = vrot.lane.b32.xlu0 %v1022, 127
    %v1031 = vpop.permute.xlu0 %1030
    %1032 = vrot.lane.b32.xlu0 %v1023, 127
    %v1033 = vpop.permute.xlu0 %1032
    %1034 = vrot.lane.b32.xlu0 %v1024, 127
    %v1035 = vpop.permute.xlu0 %1034
    %1036 = vrot.lane.b32.xlu0 %v1025, 127
    %v1037 = vpop.permute.xlu0 %1036
    %v1038 = vsel %vm61, %v1031, %v1033
    %v1039 = vsel %vm61, %v1035, %v1037
    %1044 = vrot.lane.b32.xlu0 %v1022, 71
    %v1045 = vpop.permute.xlu0 %1044
    %1046 = vrot.lane.b32.xlu0 %v1024, 71
    %v1047 = vpop.permute.xlu0 %1046
    %v1050 = vsel %vm67, %v1033, %v1045
    %v1051 = vsel %vm67, %v1037, %v1047
    %v1052 = vmax.f32 %v1022, %v1038
    %v1053 = vmax.f32 %v1023, %v1050
    %v1054 = vmax.f32 %v1024, %v1039
    %v1055 = vmax.f32 %v1025, %v1051
    %1060 = vrot.lane.b32.xlu0 %v1052, 118
    %v1061 = vpop.permute.xlu0 %1060
    %1062 = vrot.lane.b32.xlu0 %v1053, 118
    %v1063 = vpop.permute.xlu0 %1062
    %1064 = vrot.lane.b32.xlu0 %v1054, 118
    %v1065 = vpop.permute.xlu0 %1064
    %1066 = vrot.lane.b32.xlu0 %v1055, 118
    %v1067 = vpop.permute.xlu0 %1066
    %v1068 = vsel %vm360, %v1061, %v1063
    %v1069 = vsel %vm360, %v1065, %v1067
    %1074 = vrot.lane.b32.xlu0 %v1052, 62
    %v1075 = vpop.permute.xlu0 %1074
    %1076 = vrot.lane.b32.xlu0 %v1054, 62
    %v1077 = vpop.permute.xlu0 %1076
    %v1080 = vsel %vm366, %v1063, %v1075
    %v1081 = vsel %vm366, %v1067, %v1077
    %v1082 = vmax.f32 %v1052, %v1068
    %v1083 = vmax.f32 %v1053, %v1080
    %v1084 = vmax.f32 %v1054, %v1069
    %v1085 = vmax.f32 %v1055, %v1081
    %v1086 = vld [vmem:[%s3] sm:$0xff]
    %v1087 = vld [vmem:[%s3 + $0x8] sm:$0xff]
    %v1088 = vld [vmem:[%s3 + $0x10] sm:$0xff]
    %v1089 = vld [vmem:[%s3 + $0x18] sm:$0xff]
    %v1090 = vld [vmem:[%s3 + $0x20] sm:$0xff]
    %v1091 = vld [vmem:[%s3 + $0x28] sm:$0xff]
    %v1092 = vld [vmem:[%s3 + $0x30] sm:$0xff]
    %v1093 = vld [vmem:[%s3 + $0x38] sm:$0xff]
    %v1094 = vld [vmem:[%s3 + $0x40] sm:$0xff]
    %v1095 = vld [vmem:[%s3 + $0x48] sm:$0xff]
    %v1096 = vld [vmem:[%s3 + $0x50] sm:$0xff]
    %v1097 = vld [vmem:[%s3 + $0x58] sm:$0xff]
    %v1098 = vld [vmem:[%s3 + $0x60] sm:$0xff]
    %v1099 = vld [vmem:[%s3 + $0x68] sm:$0xff]
    %v1100 = vld [vmem:[%s3 + $0x70] sm:$0xff]
    %v1101 = vld [vmem:[%s3 + $0x78] sm:$0xff]
    %v1102 = vld [vmem:[%s3 + $0x80] sm:$0xff]
    %v1103 = vld [vmem:[%s3 + $0x88] sm:$0xff]
    %v1104 = vld [vmem:[%s3 + $0x90] sm:$0xff]
    %v1105 = vld [vmem:[%s3 + $0x98] sm:$0xff]
    %v1106 = vld [vmem:[%s3 + $0xa0] sm:$0xff]
    %v1107 = vld [vmem:[%s3 + $0xa8] sm:$0xff]
    %v1108 = vld [vmem:[%s3 + $0xb0] sm:$0xff]
    %v1109 = vld [vmem:[%s3 + $0xb8] sm:$0xff]
    %v1110 = vld [vmem:[%s3 + $0xc0] sm:$0xff]
    %vm1111 = vcmask 588800
    %v1113 = vsel %vm1111, %v1083, 0
    %v1116 = vsel %vm1111, %v1085, 0
    %1118 = vmatprep.subr.mxu0 0.0
    %1119 = vmatpush1.msra.mxu0 %v1086
    %1120 = vmatprep.subr.mxu0 0.0
    %1121 = vmatpush1.msra.mxu0 %v1087
    %1122 = vmatprep.subr.mxu0 0.0
    %1123 = vmatpush1.msra.mxu0 %v1088
    %1124 = vmatprep.subr.mxu0 0.0
    %1125 = vmatpush1.msra.mxu0 %v1089
    %1126 = vmatprep.subr.mxu0 0.0
    %1127 = vmatpush1.msra.mxu0 %v1090
    %1128 = vmatprep.subr.mxu0 0.0
    %1129 = vmatpush1.msra.mxu0 %v1091
    %1130 = vmatprep.subr.mxu0 0.0
    %1131 = vmatpush1.msra.mxu0 %v1092
    %1132 = vmatprep.subr.mxu0 0.0
    %1133 = vmatpush1.msra.mxu0 %v1093
    %1134 = vmatprep.subr.mxu0 0.0
    %1135 = vmatpush1.msra.mxu0 %v1094
    %1136 = vmatprep.subr.mxu0 0.0
    %1137 = vmatpush1.msra.mxu0 %v1095
    %1138 = vmatprep.subr.mxu0 0.0
    %1139 = vmatpush1.msra.mxu0 %v1096
    %1140 = vmatprep.subr.mxu0 0.0
    %1141 = vmatpush1.msra.mxu0 %v1097
    %1142 = vmatprep.subr.mxu0 0.0
    %1143 = vmatpush1.msra.mxu0 %v1098
    %1144 = vmatprep.subr.mxu0 0.0
    %1145 = vmatpush1.msra.mxu0 %v1099
    %1146 = vmatprep.subr.mxu0 0.0
    %1147 = vmatpush1.msra.mxu0 %v1100
    %1148 = vmatprep.subr.mxu0 0.0
    %1149 = vmatpush1.msra.mxu0 %v1101
    %1150 = vmatprep.subr.mxu0 0.0
    %1151 = vmatpush1.msra.mxu0 %v1102
    %1152 = vmatprep.subr.mxu0 0.0
    %1153 = vmatpush1.msra.mxu0 %v1103
    %1154 = vmatprep.subr.mxu0 0.0
    %1155 = vmatpush1.msra.mxu0 %v1104
    %1156 = vmatprep.subr.mxu0 0.0
    %1157 = vmatpush1.msra.mxu0 %v1105
    %1158 = vmatprep.subr.mxu0 0.0
    %1159 = vmatpush1.msra.mxu0 %v1106
    %1160 = vmatprep.subr.mxu0 0.0
    %1161 = vmatpush1.msra.mxu0 %v1107
    %1162 = vmatprep.subr.mxu0 0.0
    %1163 = vmatpush1.msra.mxu0 %v1108
    %1164 = vmatprep.subr.mxu0 0.0
    %1165 = vmatpush1.msra.mxu0 %v1109
    %1166 = vmatprep.subr.mxu0 0.0
    %1167 = vmatpush1.msra.mxu0 %v1110
    %1168 = vmatprep.subr.mxu0 0.0
    %1169 = vmatpush1.msra.mxu0 0.0
    %1170 = vmatprep.subr.mxu0 0.0
    %1171 = vmatpush1.msra.mxu0 0.0
    %1172 = vmatprep.subr.mxu0 0.0
    %1173 = vmatpush1.msra.mxu0 0.0
    %1174 = vmatprep.subr.mxu0 0.0
    %1175 = vmatpush1.msra.mxu0 0.0
    %1176 = vmatprep.subr.mxu0 0.0
    %1177 = vmatpush1.msra.mxu0 0.0
    %1178 = vmatprep.subr.mxu0 0.0
    %1179 = vmatpush1.msra.mxu0 0.0
    %1180 = vmatprep.subr.mxu0 0.0
    %1181 = vmatpush1.msra.mxu0 0.0
    %1182 = vmatprep.mubr.f32.mxu0 %v1113
    %1183 = vmatmul.mubr.f32.gmra.mrb[0].mxu0 %v1082
    %v1184 = vpop.f32.mrb[0].mxu0
    %v1185 = vadd.f32 0.0, %v1184
    %v1186 = vpop.f32.mrb[0].mxu0
    %1187 = vmatprep.mubr.f32.mxu0 %v1116
    %1188 = vmatmul.mubr.f32.gmra.mrb[0].mxu0 %v1084
    %v1189 = vpop.f32.mrb[0].mxu0
    %v1190 = vadd.f32 0.0, %v1189
    %v1191 = vpop.f32.mrb[0].mxu0
    %1192 = vdwg.mxu0
    %v1193 = vld [vmem:[%s4] sm:$0xff]
    %v1194 = vld [vmem:[%s4 + $0x8] sm:$0xff]
    %v1195 = vld [vmem:[%s4 + $0x10] sm:$0xff]
    %v1196 = vld [vmem:[%s4 + $0x18] sm:$0xff]
    %1199 = vrot.lane.b32.xlu0 %v1185, 127
    %v1200 = vpop.permute.xlu0 %1199
    %1201 = vrot.lane.b32.xlu0 %v1190, 127
    %v1202 = vpop.permute.xlu0 %1201
    %1205 = vrot.lane.b32.xlu0 %v1185, 71
    %v1206 = vpop.permute.xlu0 %1205
    %1207 = vrot.lane.b32.xlu0 %v1190, 71
    %v1208 = vpop.permute.xlu0 %1207
    %v1211 = vsel %vm67, %v1200, %v1206
    %v1212 = vsel %vm67, %v1202, %v1208
    %s1213 = scalar_lea.vmem %s4, 32
    %v1214 = vld [vmem:[%s1213] sm:$0xff]
    %v1215 = vld [vmem:[%s1213 + $0x8] sm:$0xff]
    %v1216 = vld [vmem:[%s1213 + $0x10] sm:$0xff]
    %v1217 = vld [vmem:[%s1213 + $0x18] sm:$0xff]
    %vm1218 = vcmask 130048
    %v1220 = vsel %vm1218, %v1214, 0
    %v1223 = vsel %vm1218, %v1215, 0
    %v1226 = vsel %vm1218, %v1216, 0
    %v1229 = vsel %vm1218, %v1217, 0
    %1231 = vmatprep.subr.mxu0 0.0
    %1232 = vmatpush1.msra.mxu0 %v1211
    %1233 = vmatprep.subr.mxu0 0.0
    %1234 = vmatpush1.msra.mxu0 %v1212
    %1235 = vmatprep.subr.mxu0 0.0
    %1236 = vmatpush1.msra.mxu0 0.0
    %1237 = vmatprep.subr.mxu0 0.0
    %1238 = vmatpush1.msra.mxu0 0.0
    %1239 = vmatprep.subr.mxu0 0.0
    %1240 = vmatpush1.msra.mxu0 0.0
    %1241 = vmatprep.subr.mxu0 0.0
    %1242 = vmatpush1.msra.mxu0 0.0
    %1243 = vmatprep.subr.mxu0 0.0
    %1244 = vmatpush1.msra.mxu0 0.0
    %1245 = vmatprep.subr.mxu0 0.0
    %1246 = vmatpush1.msra.mxu0 0.0
    %1247 = vmatprep.subr.mxu0 0.0
    %1248 = vmatpush1.msra.mxu0 0.0
    %1249 = vmatprep.subr.mxu0 0.0
    %1250 = vmatpush1.msra.mxu0 0.0
    %1251 = vmatprep.subr.mxu0 0.0
    %1252 = vmatpush1.msra.mxu0 0.0
    %1253 = vmatprep.subr.mxu0 0.0
    %1254 = vmatpush1.msra.mxu0 0.0
    %1255 = vmatprep.subr.mxu0 0.0
    %1256 = vmatpush1.msra.mxu0 0.0
    %1257 = vmatprep.subr.mxu0 0.0
    %1258 = vmatpush1.msra.mxu0 0.0
    %1259 = vmatprep.subr.mxu0 0.0
    %1260 = vmatpush1.msra.mxu0 0.0
    %1261 = vmatprep.subr.mxu0 0.0
    %1262 = vmatpush1.msra.mxu0 0.0
    %1263 = vmatprep.subr.mxu0 0.0
    %1264 = vmatpush1.msra.mxu0 0.0
    %1265 = vmatprep.subr.mxu0 0.0
    %1266 = vmatpush1.msra.mxu0 0.0
    %1267 = vmatprep.subr.mxu0 0.0
    %1268 = vmatpush1.msra.mxu0 0.0
    %1269 = vmatprep.subr.mxu0 0.0
    %1270 = vmatpush1.msra.mxu0 0.0
    %1271 = vmatprep.subr.mxu0 0.0
    %1272 = vmatpush1.msra.mxu0 0.0
    %1273 = vmatprep.subr.mxu0 0.0
    %1274 = vmatpush1.msra.mxu0 0.0
    %1275 = vmatprep.subr.mxu0 0.0
    %1276 = vmatpush1.msra.mxu0 0.0
    %1277 = vmatprep.subr.mxu0 0.0
    %1278 = vmatpush1.msra.mxu0 0.0
    %1279 = vmatprep.subr.mxu0 0.0
    %1280 = vmatpush1.msra.mxu0 0.0
    %1281 = vmatprep.subr.mxu0 0.0
    %1282 = vmatpush1.msra.mxu0 0.0
    %1283 = vmatprep.subr.mxu0 0.0
    %1284 = vmatpush1.msra.mxu0 0.0
    %1285 = vmatprep.subr.mxu0 0.0
    %1286 = vmatpush1.msra.mxu0 0.0
    %1287 = vmatprep.subr.mxu0 0.0
    %1288 = vmatpush1.msra.mxu0 0.0
    %1289 = vmatprep.subr.mxu0 0.0
    %1290 = vmatpush1.msra.mxu0 0.0
    %1291 = vmatprep.subr.mxu0 0.0
    %1292 = vmatpush1.msra.mxu0 0.0
    %1293 = vmatprep.subr.mxu0 0.0
    %1294 = vmatpush1.msra.mxu0 0.0
    %1295 = vmatprep.mubr.f32.mxu0 0.0
    %1296 = vmatmul.mubr.f32.gmra.mrb[0].mxu0 %v1220
    %v1297 = vpop.f32.mrb[0].mxu0
    %v1298 = vadd.f32 0.0, %v1297
    %v1299 = vpop.f32.mrb[0].mxu0
    %1300 = vmatprep.mubr.f32.mxu0 0.0
    %1301 = vmatmul.mubr.f32.gmra.mrb[0].mxu0 %v1223
    %v1302 = vpop.f32.mrb[0].mxu0
    %v1303 = vadd.f32 0.0, %v1302
    %v1304 = vpop.f32.mrb[0].mxu0
    %1305 = vmatprep.mubr.f32.mxu0 0.0
    %1306 = vmatmul.mubr.f32.gmra.mrb[0].mxu0 %v1226
    %v1307 = vpop.f32.mrb[0].mxu0
    %v1308 = vadd.f32 0.0, %v1307
    %v1309 = vpop.f32.mrb[0].mxu0
    %1310 = vmatprep.mubr.f32.mxu0 0.0
    %1311 = vmatmul.mubr.f32.gmra.mrb[0].mxu0 %v1229
    %v1312 = vpop.f32.mrb[0].mxu0
    %v1313 = vadd.f32 0.0, %v1312
    %v1314 = vpop.f32.mrb[0].mxu0
    %1315 = vdwg.mxu0
    %v1317 = vsel %vm1218, %v1193, 0
    %v1320 = vsel %vm1218, %v1194, 0
    %v1323 = vsel %vm1218, %v1195, 0
    %v1326 = vsel %vm1218, %v1196, 0
    %1328 = vmatprep.subr.mxu0 0.0
    %1329 = vmatpush1.msra.mxu0 %v1185
    %1330 = vmatprep.subr.mxu0 0.0
    %1331 = vmatpush1.msra.mxu0 %v1190
    %1332 = vmatprep.subr.mxu0 0.0
    %1333 = vmatpush1.msra.mxu0 0.0
    %1334 = vmatprep.subr.mxu0 0.0
    %1335 = vmatpush1.msra.mxu0 0.0
    %1336 = vmatprep.subr.mxu0 0.0
    %1337 = vmatpush1.msra.mxu0 0.0
    %1338 = vmatprep.subr.mxu0 0.0
    %1339 = vmatpush1.msra.mxu0 0.0
    %1340 = vmatprep.subr.mxu0 0.0
    %1341 = vmatpush1.msra.mxu0 0.0
    %1342 = vmatprep.subr.mxu0 0.0
    %1343 = vmatpush1.msra.mxu0 0.0
    %1344 = vmatprep.subr.mxu0 0.0
    %1345 = vmatpush1.msra.mxu0 0.0
    %1346 = vmatprep.subr.mxu0 0.0
    %1347 = vmatpush1.msra.mxu0 0.0
    %1348 = vmatprep.subr.mxu0 0.0
    %1349 = vmatpush1.msra.mxu0 0.0
    %1350 = vmatprep.subr.mxu0 0.0
    %1351 = vmatpush1.msra.mxu0 0.0
    %1352 = vmatprep.subr.mxu0 0.0
    %1353 = vmatpush1.msra.mxu0 0.0
    %1354 = vmatprep.subr.mxu0 0.0
    %1355 = vmatpush1.msra.mxu0 0.0
    %1356 = vmatprep.subr.mxu0 0.0
    %1357 = vmatpush1.msra.mxu0 0.0
    %1358 = vmatprep.subr.mxu0 0.0
    %1359 = vmatpush1.msra.mxu0 0.0
    %1360 = vmatprep.subr.mxu0 0.0
    %1361 = vmatpush1.msra.mxu0 0.0
    %1362 = vmatprep.subr.mxu0 0.0
    %1363 = vmatpush1.msra.mxu0 0.0
    %1364 = vmatprep.subr.mxu0 0.0
    %1365 = vmatpush1.msra.mxu0 0.0
    %1366 = vmatprep.subr.mxu0 0.0
    %1367 = vmatpush1.msra.mxu0 0.0
    %1368 = vmatprep.subr.mxu0 0.0
    %1369 = vmatpush1.msra.mxu0 0.0
    %1370 = vmatprep.subr.mxu0 0.0
    %1371 = vmatpush1.msra.mxu0 0.0
    %1372 = vmatprep.subr.mxu0 0.0
    %1373 = vmatpush1.msra.mxu0 0.0
    %1374 = vmatprep.subr.mxu0 0.0
    %1375 = vmatpush1.msra.mxu0 0.0
    %1376 = vmatprep.subr.mxu0 0.0
    %1377 = vmatpush1.msra.mxu0 0.0
    %1378 = vmatprep.subr.mxu0 0.0
    %1379 = vmatpush1.msra.mxu0 0.0
    %1380 = vmatprep.subr.mxu0 0.0
    %1381 = vmatpush1.msra.mxu0 0.0
    %1382 = vmatprep.subr.mxu0 0.0
    %1383 = vmatpush1.msra.mxu0 0.0
    %1384 = vmatprep.subr.mxu0 0.0
    %1385 = vmatpush1.msra.mxu0 0.0
    %1386 = vmatprep.subr.mxu0 0.0
    %1387 = vmatpush1.msra.mxu0 0.0
    %1388 = vmatprep.subr.mxu0 0.0
    %1389 = vmatpush1.msra.mxu0 0.0
    %1390 = vmatprep.subr.mxu0 0.0
    %1391 = vmatpush1.msra.mxu0 0.0
    %1392 = vmatprep.mubr.f32.mxu0 0.0
    %1393 = vmatmul.mubr.f32.gmra.mrb[0].mxu0 %v1317
    %v1394 = vpop.f32.mrb[0].mxu0
    %v1395 = vadd.f32 %v1298, %v1394
    %v1396 = vpop.f32.mrb[0].mxu0
    %1397 = vmatprep.mubr.f32.mxu0 0.0
    %1398 = vmatmul.mubr.f32.gmra.mrb[0].mxu0 %v1320
    %v1399 = vpop.f32.mrb[0].mxu0
    %v1400 = vadd.f32 %v1303, %v1399
    %v1401 = vpop.f32.mrb[0].mxu0
    %1402 = vmatprep.mubr.f32.mxu0 0.0
    %1403 = vmatmul.mubr.f32.gmra.mrb[0].mxu0 %v1323
    %v1404 = vpop.f32.mrb[0].mxu0
    %v1405 = vadd.f32 %v1308, %v1404
    %v1406 = vpop.f32.mrb[0].mxu0
    %1407 = vmatprep.mubr.f32.mxu0 0.0
    %1408 = vmatmul.mubr.f32.gmra.mrb[0].mxu0 %v1326
    %v1409 = vpop.f32.mrb[0].mxu0
    %v1410 = vadd.f32 %v1313, %v1409
    %v1411 = vpop.f32.mrb[0].mxu0
    %1412 = vdwg.mxu0
    %1413 = vrot.lane.b32.xlu0 %v1185, 126
    %v1414 = vpop.permute.xlu0 %1413
    %1415 = vrot.lane.b32.xlu0 %v1190, 126
    %v1416 = vpop.permute.xlu0 %1415
    %1419 = vrot.lane.b32.xlu0 %v1185, 70
    %v1420 = vpop.permute.xlu0 %1419
    %1421 = vrot.lane.b32.xlu0 %v1190, 70
    %v1422 = vpop.permute.xlu0 %1421
    %v1425 = vsel %vm259, %v1414, %v1420
    %v1426 = vsel %vm259, %v1416, %v1422
    %s1427 = scalar_lea.vmem %s4, 64
    %v1428 = vld [vmem:[%s1427] sm:$0xff]
    %v1429 = vld [vmem:[%s1427 + $0x8] sm:$0xff]
    %v1430 = vld [vmem:[%s1427 + $0x10] sm:$0xff]
    %v1431 = vld [vmem:[%s1427 + $0x18] sm:$0xff]
    %v1433 = vsel %vm1218, %v1428, 0
    %v1436 = vsel %vm1218, %v1429, 0
    %v1439 = vsel %vm1218, %v1430, 0
    %v1442 = vsel %vm1218, %v1431, 0
    %1444 = vmatprep.subr.mxu0 0.0
    %1445 = vmatpush1.msra.mxu0 %v1425
    %1446 = vmatprep.subr.mxu0 0.0
    %1447 = vmatpush1.msra.mxu0 %v1426
    %1448 = vmatprep.subr.mxu0 0.0
    %1449 = vmatpush1.msra.mxu0 0.0
    %1450 = vmatprep.subr.mxu0 0.0
    %1451 = vmatpush1.msra.mxu0 0.0
    %1452 = vmatprep.subr.mxu0 0.0
    %1453 = vmatpush1.msra.mxu0 0.0
    %1454 = vmatprep.subr.mxu0 0.0
    %1455 = vmatpush1.msra.mxu0 0.0
    %1456 = vmatprep.subr.mxu0 0.0
    %1457 = vmatpush1.msra.mxu0 0.0
    %1458 = vmatprep.subr.mxu0 0.0
    %1459 = vmatpush1.msra.mxu0 0.0
    %1460 = vmatprep.subr.mxu0 0.0
    %1461 = vmatpush1.msra.mxu0 0.0
    %1462 = vmatprep.subr.mxu0 0.0
    %1463 = vmatpush1.msra.mxu0 0.0
    %1464 = vmatprep.subr.mxu0 0.0
    %1465 = vmatpush1.msra.mxu0 0.0
    %1466 = vmatprep.subr.mxu0 0.0
    %1467 = vmatpush1.msra.mxu0 0.0
    %1468 = vmatprep.subr.mxu0 0.0
    %1469 = vmatpush1.msra.mxu0 0.0
    %1470 = vmatprep.subr.mxu0 0.0
    %1471 = vmatpush1.msra.mxu0 0.0
    %1472 = vmatprep.subr.mxu0 0.0
    %1473 = vmatpush1.msra.mxu0 0.0
    %1474 = vmatprep.subr.mxu0 0.0
    %1475 = vmatpush1.msra.mxu0 0.0
    %1476 = vmatprep.subr.mxu0 0.0
    %1477 = vmatpush1.msra.mxu0 0.0
    %1478 = vmatprep.subr.mxu0 0.0
    %1479 = vmatpush1.msra.mxu0 0.0
    %1480 = vmatprep.subr.mxu0 0.0
    %1481 = vmatpush1.msra.mxu0 0.0
    %1482 = vmatprep.subr.mxu0 0.0
    %1483 = vmatpush1.msra.mxu0 0.0
    %1484 = vmatprep.subr.mxu0 0.0
    %1485 = vmatpush1.msra.mxu0 0.0
    %1486 = vmatprep.subr.mxu0 0.0
    %1487 = vmatpush1.msra.mxu0 0.0
    %1488 = vmatprep.subr.mxu0 0.0
    %1489 = vmatpush1.msra.mxu0 0.0
    %1490 = vmatprep.subr.mxu0 0.0
    %1491 = vmatpush1.msra.mxu0 0.0
    %1492 = vmatprep.subr.mxu0 0.0
    %1493 = vmatpush1.msra.mxu0 0.0
    %1494 = vmatprep.subr.mxu0 0.0
    %1495 = vmatpush1.msra.mxu0 0.0
    %1496 = vmatprep.subr.mxu0 0.0
    %1497 = vmatpush1.msra.mxu0 0.0
    %1498 = vmatprep.subr.mxu0 0.0
    %1499 = vmatpush1.msra.mxu0 0.0
    %1500 = vmatprep.subr.mxu0 0.0
    %1501 = vmatpush1.msra.mxu0 0.0
    %1502 = vmatprep.subr.mxu0 0.0
    %1503 = vmatpush1.msra.mxu0 0.0
    %1504 = vmatprep.subr.mxu0 0.0
    %1505 = vmatpush1.msra.mxu0 0.0
    %1506 = vmatprep.subr.mxu0 0.0
    %1507 = vmatpush1.msra.mxu0 0.0
    %1508 = vmatprep.mubr.f32.mxu0 0.0
    %1509 = vmatmul.mubr.f32.gmra.mrb[0].mxu0 %v1433
    %v1510 = vpop.f32.mrb[0].mxu0
    %v1511 = vadd.f32 0.0, %v1510
    %v1512 = vpop.f32.mrb[0].mxu0
    %1513 = vmatprep.mubr.f32.mxu0 0.0
    %1514 = vmatmul.mubr.f32.gmra.mrb[0].mxu0 %v1436
    %v1515 = vpop.f32.mrb[0].mxu0
    %v1516 = vadd.f32 0.0, %v1515
    %v1517 = vpop.f32.mrb[0].mxu0
    %1518 = vmatprep.mubr.f32.mxu0 0.0
    %1519 = vmatmul.mubr.f32.gmra.mrb[0].mxu0 %v1439
    %v1520 = vpop.f32.mrb[0].mxu0
    %v1521 = vadd.f32 0.0, %v1520
    %v1522 = vpop.f32.mrb[0].mxu0
    %1523 = vmatprep.mubr.f32.mxu0 0.0
    %1524 = vmatmul.mubr.f32.gmra.mrb[0].mxu0 %v1442
    %v1525 = vpop.f32.mrb[0].mxu0
    %v1526 = vadd.f32 0.0, %v1525
    %v1527 = vpop.f32.mrb[0].mxu0
    %1528 = vdwg.mxu0
    %v1529 = vadd.f32 %v1395, %v1511
    %v1530 = vadd.f32 %v1400, %v1516
    %v1531 = vadd.f32 %v1405, %v1521
    %v1532 = vadd.f32 %v1410, %v1526
    %1533 = vrot.lane.b32.xlu0 %v1185, 122
    %v1534 = vpop.permute.xlu0 %1533
    %1535 = vrot.lane.b32.xlu0 %v1190, 122
    %v1536 = vpop.permute.xlu0 %1535
    %1539 = vrot.lane.b32.xlu0 %v1185, 66
    %v1540 = vpop.permute.xlu0 %1539
    %1541 = vrot.lane.b32.xlu0 %v1190, 66
    %v1542 = vpop.permute.xlu0 %1541
    %vm1545 = vcmask 539648
    %v1546 = vsel %vm1545, %v1534, %v1540
    %v1547 = vsel %vm1545, %v1536, %v1542
    %s1548 = scalar_lea.vmem %s4, 96
    %v1549 = vld [vmem:[%s1548] sm:$0xff]
    %v1550 = vld [vmem:[%s1548 + $0x8] sm:$0xff]
    %v1551 = vld [vmem:[%s1548 + $0x10] sm:$0xff]
    %v1552 = vld [vmem:[%s1548 + $0x18] sm:$0xff]
    %v1554 = vsel %vm1218, %v1549, 0
    %v1557 = vsel %vm1218, %v1550, 0
    %v1560 = vsel %vm1218, %v1551, 0
    %v1563 = vsel %vm1218, %v1552, 0
    %1565 = vmatprep.subr.mxu0 0.0
    %1566 = vmatpush1.msra.mxu0 %v1546
    %1567 = vmatprep.subr.mxu0 0.0
    %1568 = vmatpush1.msra.mxu0 %v1547
    %1569 = vmatprep.subr.mxu0 0.0
    %1570 = vmatpush1.msra.mxu0 0.0
    %1571 = vmatprep.subr.mxu0 0.0
    %1572 = vmatpush1.msra.mxu0 0.0
    %1573 = vmatprep.subr.mxu0 0.0
    %1574 = vmatpush1.msra.mxu0 0.0
    %1575 = vmatprep.subr.mxu0 0.0
    %1576 = vmatpush1.msra.mxu0 0.0
    %1577 = vmatprep.subr.mxu0 0.0
    %1578 = vmatpush1.msra.mxu0 0.0
    %1579 = vmatprep.subr.mxu0 0.0
    %1580 = vmatpush1.msra.mxu0 0.0
    %1581 = vmatprep.subr.mxu0 0.0
    %1582 = vmatpush1.msra.mxu0 0.0
    %1583 = vmatprep.subr.mxu0 0.0
    %1584 = vmatpush1.msra.mxu0 0.0
    %1585 = vmatprep.subr.mxu0 0.0
    %1586 = vmatpush1.msra.mxu0 0.0
    %1587 = vmatprep.subr.mxu0 0.0
    %1588 = vmatpush1.msra.mxu0 0.0
    %1589 = vmatprep.subr.mxu0 0.0
    %1590 = vmatpush1.msra.mxu0 0.0
    %1591 = vmatprep.subr.mxu0 0.0
    %1592 = vmatpush1.msra.mxu0 0.0
    %1593 = vmatprep.subr.mxu0 0.0
    %1594 = vmatpush1.msra.mxu0 0.0
    %1595 = vmatprep.subr.mxu0 0.0
    %1596 = vmatpush1.msra.mxu0 0.0
    %1597 = vmatprep.subr.mxu0 0.0
    %1598 = vmatpush1.msra.mxu0 0.0
    %1599 = vmatprep.subr.mxu0 0.0
    %1600 = vmatpush1.msra.mxu0 0.0
    %1601 = vmatprep.subr.mxu0 0.0
    %1602 = vmatpush1.msra.mxu0 0.0
    %1603 = vmatprep.subr.mxu0 0.0
    %1604 = vmatpush1.msra.mxu0 0.0
    %1605 = vmatprep.subr.mxu0 0.0
    %1606 = vmatpush1.msra.mxu0 0.0
    %1607 = vmatprep.subr.mxu0 0.0
    %1608 = vmatpush1.msra.mxu0 0.0
    %1609 = vmatprep.subr.mxu0 0.0
    %1610 = vmatpush1.msra.mxu0 0.0
    %1611 = vmatprep.subr.mxu0 0.0
    %1612 = vmatpush1.msra.mxu0 0.0
    %1613 = vmatprep.subr.mxu0 0.0
    %1614 = vmatpush1.msra.mxu0 0.0
    %1615 = vmatprep.subr.mxu0 0.0
    %1616 = vmatpush1.msra.mxu0 0.0
    %1617 = vmatprep.subr.mxu0 0.0
    %1618 = vmatpush1.msra.mxu0 0.0
    %1619 = vmatprep.subr.mxu0 0.0
    %1620 = vmatpush1.msra.mxu0 0.0
    %1621 = vmatprep.subr.mxu0 0.0
    %1622 = vmatpush1.msra.mxu0 0.0
    %1623 = vmatprep.subr.mxu0 0.0
    %1624 = vmatpush1.msra.mxu0 0.0
    %1625 = vmatprep.subr.mxu0 0.0
    %1626 = vmatpush1.msra.mxu0 0.0
    %1627 = vmatprep.subr.mxu0 0.0
    %1628 = vmatpush1.msra.mxu0 0.0
    %1629 = vmatprep.mubr.f32.mxu0 0.0
    %1630 = vmatmul.mubr.f32.gmra.mrb[0].mxu0 %v1554
    %v1631 = vpop.f32.mrb[0].mxu0
    %v1632 = vadd.f32 0.0, %v1631
    %v1633 = vpop.f32.mrb[0].mxu0
    %1634 = vmatprep.mubr.f32.mxu0 0.0
    %1635 = vmatmul.mubr.f32.gmra.mrb[0].mxu0 %v1557
    %v1636 = vpop.f32.mrb[0].mxu0
    %v1637 = vadd.f32 0.0, %v1636
    %v1638 = vpop.f32.mrb[0].mxu0
    %1639 = vmatprep.mubr.f32.mxu0 0.0
    %1640 = vmatmul.mubr.f32.gmra.mrb[0].mxu0 %v1560
    %v1641 = vpop.f32.mrb[0].mxu0
    %v1642 = vadd.f32 0.0, %v1641
    %v1643 = vpop.f32.mrb[0].mxu0
    %1644 = vmatprep.mubr.f32.mxu0 0.0
    %1645 = vmatmul.mubr.f32.gmra.mrb[0].mxu0 %v1563
    %v1646 = vpop.f32.mrb[0].mxu0
    %v1647 = vadd.f32 0.0, %v1646
    %v1648 = vpop.f32.mrb[0].mxu0
    %1649 = vdwg.mxu0
    %v1650 = vadd.f32 %v1529, %v1632
    %v1651 = vadd.f32 %v1530, %v1637
    %v1652 = vadd.f32 %v1531, %v1642
    %v1653 = vadd.f32 %v1532, %v1647
    %1654 = vrot.lane.b32.xlu0 %v1185, 121
    %v1655 = vpop.permute.xlu0 %1654
    %1656 = vrot.lane.b32.xlu0 %v1190, 121
    %v1657 = vpop.permute.xlu0 %1656
    %1660 = vrot.lane.b32.xlu0 %v1185, 65
    %v1661 = vpop.permute.xlu0 %1660
    %1662 = vrot.lane.b32.xlu0 %v1190, 65
    %v1663 = vpop.permute.xlu0 %1662
    %vm1666 = vcmask 531456
    %v1667 = vsel %vm1666, %v1655, %v1661
    %v1668 = vsel %vm1666, %v1657, %v1663
    %s1669 = scalar_lea.vmem %s4, 128
    %v1670 = vld [vmem:[%s1669] sm:$0xff]
    %v1671 = vld [vmem:[%s1669 + $0x8] sm:$0xff]
    %v1672 = vld [vmem:[%s1669 + $0x10] sm:$0xff]
    %v1673 = vld [vmem:[%s1669 + $0x18] sm:$0xff]
    %v1675 = vsel %vm1218, %v1670, 0
    %v1678 = vsel %vm1218, %v1671, 0
    %v1681 = vsel %vm1218, %v1672, 0
    %v1684 = vsel %vm1218, %v1673, 0
    %1686 = vmatprep.subr.mxu0 0.0
    %1687 = vmatpush1.msra.mxu0 %v1667
    %1688 = vmatprep.subr.mxu0 0.0
    %1689 = vmatpush1.msra.mxu0 %v1668
    %1690 = vmatprep.subr.mxu0 0.0
    %1691 = vmatpush1.msra.mxu0 0.0
    %1692 = vmatprep.subr.mxu0 0.0
    %1693 = vmatpush1.msra.mxu0 0.0
    %1694 = vmatprep.subr.mxu0 0.0
    %1695 = vmatpush1.msra.mxu0 0.0
    %1696 = vmatprep.subr.mxu0 0.0
    %1697 = vmatpush1.msra.mxu0 0.0
    %1698 = vmatprep.subr.mxu0 0.0
    %1699 = vmatpush1.msra.mxu0 0.0
    %1700 = vmatprep.subr.mxu0 0.0
    %1701 = vmatpush1.msra.mxu0 0.0
    %1702 = vmatprep.subr.mxu0 0.0
    %1703 = vmatpush1.msra.mxu0 0.0
    %1704 = vmatprep.subr.mxu0 0.0
    %1705 = vmatpush1.msra.mxu0 0.0
    %1706 = vmatprep.subr.mxu0 0.0
    %1707 = vmatpush1.msra.mxu0 0.0
    %1708 = vmatprep.subr.mxu0 0.0
    %1709 = vmatpush1.msra.mxu0 0.0
    %1710 = vmatprep.subr.mxu0 0.0
    %1711 = vmatpush1.msra.mxu0 0.0
    %1712 = vmatprep.subr.mxu0 0.0
    %1713 = vmatpush1.msra.mxu0 0.0
    %1714 = vmatprep.subr.mxu0 0.0
    %1715 = vmatpush1.msra.mxu0 0.0
    %1716 = vmatprep.subr.mxu0 0.0
    %1717 = vmatpush1.msra.mxu0 0.0
    %1718 = vmatprep.subr.mxu0 0.0
    %1719 = vmatpush1.msra.mxu0 0.0
    %1720 = vmatprep.subr.mxu0 0.0
    %1721 = vmatpush1.msra.mxu0 0.0
    %1722 = vmatprep.subr.mxu0 0.0
    %1723 = vmatpush1.msra.mxu0 0.0
    %1724 = vmatprep.subr.mxu0 0.0
    %1725 = vmatpush1.msra.mxu0 0.0
    %1726 = vmatprep.subr.mxu0 0.0
    %1727 = vmatpush1.msra.mxu0 0.0
    %1728 = vmatprep.subr.mxu0 0.0
    %1729 = vmatpush1.msra.mxu0 0.0
    %1730 = vmatprep.subr.mxu0 0.0
    %1731 = vmatpush1.msra.mxu0 0.0
    %1732 = vmatprep.subr.mxu0 0.0
    %1733 = vmatpush1.msra.mxu0 0.0
    %1734 = vmatprep.subr.mxu0 0.0
    %1735 = vmatpush1.msra.mxu0 0.0
    %1736 = vmatprep.subr.mxu0 0.0
    %1737 = vmatpush1.msra.mxu0 0.0
    %1738 = vmatprep.subr.mxu0 0.0
    %1739 = vmatpush1.msra.mxu0 0.0
    %1740 = vmatprep.subr.mxu0 0.0
    %1741 = vmatpush1.msra.mxu0 0.0
    %1742 = vmatprep.subr.mxu0 0.0
    %1743 = vmatpush1.msra.mxu0 0.0
    %1744 = vmatprep.subr.mxu0 0.0
    %1745 = vmatpush1.msra.mxu0 0.0
    %1746 = vmatprep.subr.mxu0 0.0
    %1747 = vmatpush1.msra.mxu0 0.0
    %1748 = vmatprep.subr.mxu0 0.0
    %1749 = vmatpush1.msra.mxu0 0.0
    %1750 = vmatprep.mubr.f32.mxu0 0.0
    %1751 = vmatmul.mubr.f32.gmra.mrb[0].mxu0 %v1675
    %v1752 = vpop.f32.mrb[0].mxu0
    %v1753 = vadd.f32 0.0, %v1752
    %v1754 = vpop.f32.mrb[0].mxu0
    %1755 = vmatprep.mubr.f32.mxu0 0.0
    %1756 = vmatmul.mubr.f32.gmra.mrb[0].mxu0 %v1678
    %v1757 = vpop.f32.mrb[0].mxu0
    %v1758 = vadd.f32 0.0, %v1757
    %v1759 = vpop.f32.mrb[0].mxu0
    %1760 = vmatprep.mubr.f32.mxu0 0.0
    %1761 = vmatmul.mubr.f32.gmra.mrb[0].mxu0 %v1681
    %v1762 = vpop.f32.mrb[0].mxu0
    %v1763 = vadd.f32 0.0, %v1762
    %v1764 = vpop.f32.mrb[0].mxu0
    %1765 = vmatprep.mubr.f32.mxu0 0.0
    %1766 = vmatmul.mubr.f32.gmra.mrb[0].mxu0 %v1684
    %v1767 = vpop.f32.mrb[0].mxu0
    %v1768 = vadd.f32 0.0, %v1767
    %v1769 = vpop.f32.mrb[0].mxu0
    %1770 = vdwg.mxu0
    %v1771 = vadd.f32 %v1650, %v1753
    %v1772 = vadd.f32 %v1651, %v1758
    %v1773 = vadd.f32 %v1652, %v1763
    %v1774 = vadd.f32 %v1653, %v1768
    %1775 = vrot.lane.b32.xlu0 %v1185, 120
    %v1776 = vpop.permute.xlu0 %1775
    %1777 = vrot.lane.b32.xlu0 %v1190, 120
    %v1778 = vpop.permute.xlu0 %1777
    %1781 = vrot.lane.b32.xlu0 %v1185, 64
    %v1782 = vpop.permute.xlu0 %1781
    %1783 = vrot.lane.b32.xlu0 %v1190, 64
    %v1784 = vpop.permute.xlu0 %1783
    %vm1787 = vcmask 523264
    %v1788 = vsel %vm1787, %v1776, %v1782
    %v1789 = vsel %vm1787, %v1778, %v1784
    %s1790 = scalar_lea.vmem %s4, 160
    %v1791 = vld [vmem:[%s1790] sm:$0xff]
    %v1792 = vld [vmem:[%s1790 + $0x8] sm:$0xff]
    %v1793 = vld [vmem:[%s1790 + $0x10] sm:$0xff]
    %v1794 = vld [vmem:[%s1790 + $0x18] sm:$0xff]
    %v1796 = vsel %vm1218, %v1791, 0
    %v1799 = vsel %vm1218, %v1792, 0
    %v1802 = vsel %vm1218, %v1793, 0
    %v1805 = vsel %vm1218, %v1794, 0
    %1807 = vmatprep.subr.mxu0 0.0
    %1808 = vmatpush1.msra.mxu0 %v1788
    %1809 = vmatprep.subr.mxu0 0.0
    %1810 = vmatpush1.msra.mxu0 %v1789
    %1811 = vmatprep.subr.mxu0 0.0
    %1812 = vmatpush1.msra.mxu0 0.0
    %1813 = vmatprep.subr.mxu0 0.0
    %1814 = vmatpush1.msra.mxu0 0.0
    %1815 = vmatprep.subr.mxu0 0.0
    %1816 = vmatpush1.msra.mxu0 0.0
    %1817 = vmatprep.subr.mxu0 0.0
    %1818 = vmatpush1.msra.mxu0 0.0
    %1819 = vmatprep.subr.mxu0 0.0
    %1820 = vmatpush1.msra.mxu0 0.0
    %1821 = vmatprep.subr.mxu0 0.0
    %1822 = vmatpush1.msra.mxu0 0.0
    %1823 = vmatprep.subr.mxu0 0.0
    %1824 = vmatpush1.msra.mxu0 0.0
    %1825 = vmatprep.subr.mxu0 0.0
    %1826 = vmatpush1.msra.mxu0 0.0
    %1827 = vmatprep.subr.mxu0 0.0
    %1828 = vmatpush1.msra.mxu0 0.0
    %1829 = vmatprep.subr.mxu0 0.0
    %1830 = vmatpush1.msra.mxu0 0.0
    %1831 = vmatprep.subr.mxu0 0.0
    %1832 = vmatpush1.msra.mxu0 0.0
    %1833 = vmatprep.subr.mxu0 0.0
    %1834 = vmatpush1.msra.mxu0 0.0
    %1835 = vmatprep.subr.mxu0 0.0
    %1836 = vmatpush1.msra.mxu0 0.0
    %1837 = vmatprep.subr.mxu0 0.0
    %1838 = vmatpush1.msra.mxu0 0.0
    %1839 = vmatprep.subr.mxu0 0.0
    %1840 = vmatpush1.msra.mxu0 0.0
    %1841 = vmatprep.subr.mxu0 0.0
    %1842 = vmatpush1.msra.mxu0 0.0
    %1843 = vmatprep.subr.mxu0 0.0
    %1844 = vmatpush1.msra.mxu0 0.0
    %1845 = vmatprep.subr.mxu0 0.0
    %1846 = vmatpush1.msra.mxu0 0.0
    %1847 = vmatprep.subr.mxu0 0.0
    %1848 = vmatpush1.msra.mxu0 0.0
    %1849 = vmatprep.subr.mxu0 0.0
    %1850 = vmatpush1.msra.mxu0 0.0
    %1851 = vmatprep.subr.mxu0 0.0
    %1852 = vmatpush1.msra.mxu0 0.0
    %1853 = vmatprep.subr.mxu0 0.0
    %1854 = vmatpush1.msra.mxu0 0.0
    %1855 = vmatprep.subr.mxu0 0.0
    %1856 = vmatpush1.msra.mxu0 0.0
    %1857 = vmatprep.subr.mxu0 0.0
    %1858 = vmatpush1.msra.mxu0 0.0
    %1859 = vmatprep.subr.mxu0 0.0
    %1860 = vmatpush1.msra.mxu0 0.0
    %1861 = vmatprep.subr.mxu0 0.0
    %1862 = vmatpush1.msra.mxu0 0.0
    %1863 = vmatprep.subr.mxu0 0.0
    %1864 = vmatpush1.msra.mxu0 0.0
    %1865 = vmatprep.subr.mxu0 0.0
    %1866 = vmatpush1.msra.mxu0 0.0
    %1867 = vmatprep.subr.mxu0 0.0
    %1868 = vmatpush1.msra.mxu0 0.0
    %1869 = vmatprep.subr.mxu0 0.0
    %1870 = vmatpush1.msra.mxu0 0.0
    %1871 = vmatprep.mubr.f32.mxu0 0.0
    %1872 = vmatmul.mubr.f32.gmra.mrb[0].mxu0 %v1796
    %v1873 = vpop.f32.mrb[0].mxu0
    %v1874 = vadd.f32 0.0, %v1873
    %v1875 = vpop.f32.mrb[0].mxu0
    %1876 = vmatprep.mubr.f32.mxu0 0.0
    %1877 = vmatmul.mubr.f32.gmra.mrb[0].mxu0 %v1799
    %v1878 = vpop.f32.mrb[0].mxu0
    %v1879 = vadd.f32 0.0, %v1878
    %v1880 = vpop.f32.mrb[0].mxu0
    %1881 = vmatprep.mubr.f32.mxu0 0.0
    %1882 = vmatmul.mubr.f32.gmra.mrb[0].mxu0 %v1802
    %v1883 = vpop.f32.mrb[0].mxu0
    %v1884 = vadd.f32 0.0, %v1883
    %v1885 = vpop.f32.mrb[0].mxu0
    %1886 = vmatprep.mubr.f32.mxu0 0.0
    %1887 = vmatmul.mubr.f32.gmra.mrb[0].mxu0 %v1805
    %v1888 = vpop.f32.mrb[0].mxu0
    %v1889 = vadd.f32 0.0, %v1888
    %v1890 = vpop.f32.mrb[0].mxu0
    %1891 = vdwg.mxu0
    %v1892 = vadd.f32 %v1771, %v1874
    %v1893 = vadd.f32 %v1772, %v1879
    %v1894 = vadd.f32 %v1773, %v1884
    %v1895 = vadd.f32 %v1774, %v1889
    %1896 = vrot.lane.b32.xlu0 %v1185, 116
    %v1897 = vpop.permute.xlu0 %1896
    %1898 = vrot.lane.b32.xlu0 %v1190, 116
    %v1899 = vpop.permute.xlu0 %1898
    %1902 = vrot.lane.b32.xlu0 %v1185, 60
    %v1903 = vpop.permute.xlu0 %1902
    %1904 = vrot.lane.b32.xlu0 %v1190, 60
    %v1905 = vpop.permute.xlu0 %1904
    %v1908 = vsel %vm580, %v1897, %v1903
    %v1909 = vsel %vm580, %v1899, %v1905
    %s1910 = scalar_lea.vmem %s4, 192
    %v1911 = vld [vmem:[%s1910] sm:$0xff]
    %v1912 = vld [vmem:[%s1910 + $0x8] sm:$0xff]
    %v1913 = vld [vmem:[%s1910 + $0x10] sm:$0xff]
    %v1914 = vld [vmem:[%s1910 + $0x18] sm:$0xff]
    %v1916 = vsel %vm1218, %v1911, 0
    %v1919 = vsel %vm1218, %v1912, 0
    %v1922 = vsel %vm1218, %v1913, 0
    %v1925 = vsel %vm1218, %v1914, 0
    %1927 = vmatprep.subr.mxu0 0.0
    %1928 = vmatpush1.msra.mxu0 %v1908
    %1929 = vmatprep.subr.mxu0 0.0
    %1930 = vmatpush1.msra.mxu0 %v1909
    %1931 = vmatprep.subr.mxu0 0.0
    %1932 = vmatpush1.msra.mxu0 0.0
    %1933 = vmatprep.subr.mxu0 0.0
    %1934 = vmatpush1.msra.mxu0 0.0
    %1935 = vmatprep.subr.mxu0 0.0
    %1936 = vmatpush1.msra.mxu0 0.0
    %1937 = vmatprep.subr.mxu0 0.0
    %1938 = vmatpush1.msra.mxu0 0.0
    %1939 = vmatprep.subr.mxu0 0.0
    %1940 = vmatpush1.msra.mxu0 0.0
    %1941 = vmatprep.subr.mxu0 0.0
    %1942 = vmatpush1.msra.mxu0 0.0
    %1943 = vmatprep.subr.mxu0 0.0
    %1944 = vmatpush1.msra.mxu0 0.0
    %1945 = vmatprep.subr.mxu0 0.0
    %1946 = vmatpush1.msra.mxu0 0.0
    %1947 = vmatprep.subr.mxu0 0.0
    %1948 = vmatpush1.msra.mxu0 0.0
    %1949 = vmatprep.subr.mxu0 0.0
    %1950 = vmatpush1.msra.mxu0 0.0
    %1951 = vmatprep.subr.mxu0 0.0
    %1952 = vmatpush1.msra.mxu0 0.0
    %1953 = vmatprep.subr.mxu0 0.0
    %1954 = vmatpush1.msra.mxu0 0.0
    %1955 = vmatprep.subr.mxu0 0.0
    %1956 = vmatpush1.msra.mxu0 0.0
    %1957 = vmatprep.subr.mxu0 0.0
    %1958 = vmatpush1.msra.mxu0 0.0
    %1959 = vmatprep.subr.mxu0 0.0
    %1960 = vmatpush1.msra.mxu0 0.0
    %1961 = vmatprep.subr.mxu0 0.0
    %1962 = vmatpush1.msra.mxu0 0.0
    %1963 = vmatprep.subr.mxu0 0.0
    %1964 = vmatpush1.msra.mxu0 0.0
    %1965 = vmatprep.subr.mxu0 0.0
    %1966 = vmatpush1.msra.mxu0 0.0
    %1967 = vmatprep.subr.mxu0 0.0
    %1968 = vmatpush1.msra.mxu0 0.0
    %1969 = vmatprep.subr.mxu0 0.0
    %1970 = vmatpush1.msra.mxu0 0.0
    %1971 = vmatprep.subr.mxu0 0.0
    %1972 = vmatpush1.msra.mxu0 0.0
    %1973 = vmatprep.subr.mxu0 0.0
    %1974 = vmatpush1.msra.mxu0 0.0
    %1975 = vmatprep.subr.mxu0 0.0
    %1976 = vmatpush1.msra.mxu0 0.0
    %1977 = vmatprep.subr.mxu0 0.0
    %1978 = vmatpush1.msra.mxu0 0.0
    %1979 = vmatprep.subr.mxu0 0.0
    %1980 = vmatpush1.msra.mxu0 0.0
    %1981 = vmatprep.subr.mxu0 0.0
    %1982 = vmatpush1.msra.mxu0 0.0
    %1983 = vmatprep.subr.mxu0 0.0
    %1984 = vmatpush1.msra.mxu0 0.0
    %1985 = vmatprep.subr.mxu0 0.0
    %1986 = vmatpush1.msra.mxu0 0.0
    %1987 = vmatprep.subr.mxu0 0.0
    %1988 = vmatpush1.msra.mxu0 0.0
    %1989 = vmatprep.subr.mxu0 0.0
    %1990 = vmatpush1.msra.mxu0 0.0
    %1991 = vmatprep.mubr.f32.mxu0 0.0
    %1992 = vmatmul.mubr.f32.gmra.mrb[0].mxu0 %v1916
    %v1993 = vpop.f32.mrb[0].mxu0
    %v1994 = vadd.f32 0.0, %v1993
    %v1995 = vpop.f32.mrb[0].mxu0
    %1996 = vmatprep.mubr.f32.mxu0 0.0
    %1997 = vmatmul.mubr.f32.gmra.mrb[0].mxu0 %v1919
    %v1998 = vpop.f32.mrb[0].mxu0
    %v1999 = vadd.f32 0.0, %v1998
    %v2000 = vpop.f32.mrb[0].mxu0
    %2001 = vmatprep.mubr.f32.mxu0 0.0
    %2002 = vmatmul.mubr.f32.gmra.mrb[0].mxu0 %v1922
    %v2003 = vpop.f32.mrb[0].mxu0
    %v2004 = vadd.f32 0.0, %v2003
    %v2005 = vpop.f32.mrb[0].mxu0
    %2006 = vmatprep.mubr.f32.mxu0 0.0
    %2007 = vmatmul.mubr.f32.gmra.mrb[0].mxu0 %v1925
    %v2008 = vpop.f32.mrb[0].mxu0
    %v2009 = vadd.f32 0.0, %v2008
    %v2010 = vpop.f32.mrb[0].mxu0
    %2011 = vdwg.mxu0
    %v2012 = vadd.f32 %v1892, %v1994
    %v2013 = vadd.f32 %v1893, %v1999
    %v2014 = vadd.f32 %v1894, %v2004
    %v2015 = vadd.f32 %v1895, %v2009
    %2016 = vrot.lane.b32.xlu0 %v1185, 115
    %v2017 = vpop.permute.xlu0 %2016
    %2018 = vrot.lane.b32.xlu0 %v1190, 115
    %v2019 = vpop.permute.xlu0 %2018
    %2022 = vrot.lane.b32.xlu0 %v1185, 59
    %v2023 = vpop.permute.xlu0 %2022
    %2024 = vrot.lane.b32.xlu0 %v1190, 59
    %v2025 = vpop.permute.xlu0 %2024
    %vm2028 = vcmask 482304
    %v2029 = vsel %vm2028, %v2017, %v2023
    %v2030 = vsel %vm2028, %v2019, %v2025
    %s2031 = scalar_lea.vmem %s4, 224
    %v2032 = vld [vmem:[%s2031] sm:$0xff]
    %v2033 = vld [vmem:[%s2031 + $0x8] sm:$0xff]
    %v2034 = vld [vmem:[%s2031 + $0x10] sm:$0xff]
    %v2035 = vld [vmem:[%s2031 + $0x18] sm:$0xff]
    %v2037 = vsel %vm1218, %v2032, 0
    %v2040 = vsel %vm1218, %v2033, 0
    %v2043 = vsel %vm1218, %v2034, 0
    %v2046 = vsel %vm1218, %v2035, 0
    %2048 = vmatprep.subr.mxu0 0.0
    %2049 = vmatpush1.msra.mxu0 %v2029
    %2050 = vmatprep.subr.mxu0 0.0
    %2051 = vmatpush1.msra.mxu0 %v2030
    %2052 = vmatprep.subr.mxu0 0.0
    %2053 = vmatpush1.msra.mxu0 0.0
    %2054 = vmatprep.subr.mxu0 0.0
    %2055 = vmatpush1.msra.mxu0 0.0
    %2056 = vmatprep.subr.mxu0 0.0
    %2057 = vmatpush1.msra.mxu0 0.0
    %2058 = vmatprep.subr.mxu0 0.0
    %2059 = vmatpush1.msra.mxu0 0.0
    %2060 = vmatprep.subr.mxu0 0.0
    %2061 = vmatpush1.msra.mxu0 0.0
    %2062 = vmatprep.subr.mxu0 0.0
    %2063 = vmatpush1.msra.mxu0 0.0
    %2064 = vmatprep.subr.mxu0 0.0
    %2065 = vmatpush1.msra.mxu0 0.0
    %2066 = vmatprep.subr.mxu0 0.0
    %2067 = vmatpush1.msra.mxu0 0.0
    %2068 = vmatprep.subr.mxu0 0.0
    %2069 = vmatpush1.msra.mxu0 0.0
    %2070 = vmatprep.subr.mxu0 0.0
    %2071 = vmatpush1.msra.mxu0 0.0
    %2072 = vmatprep.subr.mxu0 0.0
    %2073 = vmatpush1.msra.mxu0 0.0
    %2074 = vmatprep.subr.mxu0 0.0
    %2075 = vmatpush1.msra.mxu0 0.0
    %2076 = vmatprep.subr.mxu0 0.0
    %2077 = vmatpush1.msra.mxu0 0.0
    %2078 = vmatprep.subr.mxu0 0.0
    %2079 = vmatpush1.msra.mxu0 0.0
    %2080 = vmatprep.subr.mxu0 0.0
    %2081 = vmatpush1.msra.mxu0 0.0
    %2082 = vmatprep.subr.mxu0 0.0
    %2083 = vmatpush1.msra.mxu0 0.0
    %2084 = vmatprep.subr.mxu0 0.0
    %2085 = vmatpush1.msra.mxu0 0.0
    %2086 = vmatprep.subr.mxu0 0.0
    %2087 = vmatpush1.msra.mxu0 0.0
    %2088 = vmatprep.subr.mxu0 0.0
    %2089 = vmatpush1.msra.mxu0 0.0
    %2090 = vmatprep.subr.mxu0 0.0
    %2091 = vmatpush1.msra.mxu0 0.0
    %2092 = vmatprep.subr.mxu0 0.0
    %2093 = vmatpush1.msra.mxu0 0.0
    %2094 = vmatprep.subr.mxu0 0.0
    %2095 = vmatpush1.msra.mxu0 0.0
    %2096 = vmatprep.subr.mxu0 0.0
    %2097 = vmatpush1.msra.mxu0 0.0
    %2098 = vmatprep.subr.mxu0 0.0
    %2099 = vmatpush1.msra.mxu0 0.0
    %2100 = vmatprep.subr.mxu0 0.0
    %2101 = vmatpush1.msra.mxu0 0.0
    %2102 = vmatprep.subr.mxu0 0.0
    %2103 = vmatpush1.msra.mxu0 0.0
    %2104 = vmatprep.subr.mxu0 0.0
    %2105 = vmatpush1.msra.mxu0 0.0
    %2106 = vmatprep.subr.mxu0 0.0
    %2107 = vmatpush1.msra.mxu0 0.0
    %2108 = vmatprep.subr.mxu0 0.0
    %2109 = vmatpush1.msra.mxu0 0.0
    %2110 = vmatprep.subr.mxu0 0.0
    %2111 = vmatpush1.msra.mxu0 0.0
    %2112 = vmatprep.mubr.f32.mxu0 0.0
    %2113 = vmatmul.mubr.f32.gmra.mrb[0].mxu0 %v2037
    %v2114 = vpop.f32.mrb[0].mxu0
    %v2115 = vadd.f32 0.0, %v2114
    %v2116 = vpop.f32.mrb[0].mxu0
    %2117 = vmatprep.mubr.f32.mxu0 0.0
    %2118 = vmatmul.mubr.f32.gmra.mrb[0].mxu0 %v2040
    %v2119 = vpop.f32.mrb[0].mxu0
    %v2120 = vadd.f32 0.0, %v2119
    %v2121 = vpop.f32.mrb[0].mxu0
    %2122 = vmatprep.mubr.f32.mxu0 0.0
    %2123 = vmatmul.mubr.f32.gmra.mrb[0].mxu0 %v2043
    %v2124 = vpop.f32.mrb[0].mxu0
    %v2125 = vadd.f32 0.0, %v2124
    %v2126 = vpop.f32.mrb[0].mxu0
    %2127 = vmatprep.mubr.f32.mxu0 0.0
    %2128 = vmatmul.mubr.f32.gmra.mrb[0].mxu0 %v2046
    %v2129 = vpop.f32.mrb[0].mxu0
    %v2130 = vadd.f32 0.0, %v2129
    %v2131 = vpop.f32.mrb[0].mxu0
    %2132 = vdwg.mxu0
    %v2133 = vadd.f32 %v2012, %v2115
    %v2134 = vadd.f32 %v2013, %v2120
    %v2135 = vadd.f32 %v2014, %v2125
    %v2136 = vadd.f32 %v2015, %v2130
    %2137 = vrot.lane.b32.xlu0 %v1185, 114
    %v2138 = vpop.permute.xlu0 %2137
    %2139 = vrot.lane.b32.xlu0 %v1190, 114
    %v2140 = vpop.permute.xlu0 %2139
    %2143 = vrot.lane.b32.xlu0 %v1185, 58
    %v2144 = vpop.permute.xlu0 %2143
    %2145 = vrot.lane.b32.xlu0 %v1190, 58
    %v2146 = vpop.permute.xlu0 %2145
    %vm2149 = vcmask 474112
    %v2150 = vsel %vm2149, %v2138, %v2144
    %v2151 = vsel %vm2149, %v2140, %v2146
    %s2152 = scalar_lea.vmem %s4, 256
    %v2153 = vld [vmem:[%s2152] sm:$0xff]
    %v2154 = vld [vmem:[%s2152 + $0x8] sm:$0xff]
    %v2155 = vld [vmem:[%s2152 + $0x10] sm:$0xff]
    %v2156 = vld [vmem:[%s2152 + $0x18] sm:$0xff]
    %v2158 = vsel %vm1218, %v2153, 0
    %v2161 = vsel %vm1218, %v2154, 0
    %v2164 = vsel %vm1218, %v2155, 0
    %v2167 = vsel %vm1218, %v2156, 0
    %2169 = vmatprep.subr.mxu0 0.0
    %2170 = vmatpush1.msra.mxu0 %v2150
    %2171 = vmatprep.subr.mxu0 0.0
    %2172 = vmatpush1.msra.mxu0 %v2151
    %2173 = vmatprep.subr.mxu0 0.0
    %2174 = vmatpush1.msra.mxu0 0.0
    %2175 = vmatprep.subr.mxu0 0.0
    %2176 = vmatpush1.msra.mxu0 0.0
    %2177 = vmatprep.subr.mxu0 0.0
    %2178 = vmatpush1.msra.mxu0 0.0
    %2179 = vmatprep.subr.mxu0 0.0
    %2180 = vmatpush1.msra.mxu0 0.0
    %2181 = vmatprep.subr.mxu0 0.0
    %2182 = vmatpush1.msra.mxu0 0.0
    %2183 = vmatprep.subr.mxu0 0.0
    %2184 = vmatpush1.msra.mxu0 0.0
    %2185 = vmatprep.subr.mxu0 0.0
    %2186 = vmatpush1.msra.mxu0 0.0
    %2187 = vmatprep.subr.mxu0 0.0
    %2188 = vmatpush1.msra.mxu0 0.0
    %2189 = vmatprep.subr.mxu0 0.0
    %2190 = vmatpush1.msra.mxu0 0.0
    %2191 = vmatprep.subr.mxu0 0.0
    %2192 = vmatpush1.msra.mxu0 0.0
    %2193 = vmatprep.subr.mxu0 0.0
    %2194 = vmatpush1.msra.mxu0 0.0
    %2195 = vmatprep.subr.mxu0 0.0
    %2196 = vmatpush1.msra.mxu0 0.0
    %2197 = vmatprep.subr.mxu0 0.0
    %2198 = vmatpush1.msra.mxu0 0.0
    %2199 = vmatprep.subr.mxu0 0.0
    %2200 = vmatpush1.msra.mxu0 0.0
    %2201 = vmatprep.subr.mxu0 0.0
    %2202 = vmatpush1.msra.mxu0 0.0
    %2203 = vmatprep.subr.mxu0 0.0
    %2204 = vmatpush1.msra.mxu0 0.0
    %2205 = vmatprep.subr.mxu0 0.0
    %2206 = vmatpush1.msra.mxu0 0.0
    %2207 = vmatprep.subr.mxu0 0.0
    %2208 = vmatpush1.msra.mxu0 0.0
    %2209 = vmatprep.subr.mxu0 0.0
    %2210 = vmatpush1.msra.mxu0 0.0
    %2211 = vmatprep.subr.mxu0 0.0
    %2212 = vmatpush1.msra.mxu0 0.0
    %2213 = vmatprep.subr.mxu0 0.0
    %2214 = vmatpush1.msra.mxu0 0.0
    %2215 = vmatprep.subr.mxu0 0.0
    %2216 = vmatpush1.msra.mxu0 0.0
    %2217 = vmatprep.subr.mxu0 0.0
    %2218 = vmatpush1.msra.mxu0 0.0
    %2219 = vmatprep.subr.mxu0 0.0
    %2220 = vmatpush1.msra.mxu0 0.0
    %2221 = vmatprep.subr.mxu0 0.0
    %2222 = vmatpush1.msra.mxu0 0.0
    %2223 = vmatprep.subr.mxu0 0.0
    %2224 = vmatpush1.msra.mxu0 0.0
    %2225 = vmatprep.subr.mxu0 0.0
    %2226 = vmatpush1.msra.mxu0 0.0
    %2227 = vmatprep.subr.mxu0 0.0
    %2228 = vmatpush1.msra.mxu0 0.0
    %2229 = vmatprep.subr.mxu0 0.0
    %2230 = vmatpush1.msra.mxu0 0.0
    %2231 = vmatprep.subr.mxu0 0.0
    %2232 = vmatpush1.msra.mxu0 0.0
    %2233 = vmatprep.mubr.f32.mxu0 0.0
    %2234 = vmatmul.mubr.f32.gmra.mrb[0].mxu0 %v2158
    %v2235 = vpop.f32.mrb[0].mxu0
    %v2236 = vadd.f32 0.0, %v2235
    %v2237 = vpop.f32.mrb[0].mxu0
    %2238 = vmatprep.mubr.f32.mxu0 0.0
    %2239 = vmatmul.mubr.f32.gmra.mrb[0].mxu0 %v2161
    %v2240 = vpop.f32.mrb[0].mxu0
    %v2241 = vadd.f32 0.0, %v2240
    %v2242 = vpop.f32.mrb[0].mxu0
    %2243 = vmatprep.mubr.f32.mxu0 0.0
    %2244 = vmatmul.mubr.f32.gmra.mrb[0].mxu0 %v2164
    %v2245 = vpop.f32.mrb[0].mxu0
    %v2246 = vadd.f32 0.0, %v2245
    %v2247 = vpop.f32.mrb[0].mxu0
    %2248 = vmatprep.mubr.f32.mxu0 0.0
    %2249 = vmatmul.mubr.f32.gmra.mrb[0].mxu0 %v2167
    %v2250 = vpop.f32.mrb[0].mxu0
    %v2251 = vadd.f32 0.0, %v2250
    %v2252 = vpop.f32.mrb[0].mxu0
    %2253 = vdwg.mxu0
    %v2254 = vadd.f32 %v2133, %v2236
    %v2255 = vadd.f32 %v2134, %v2241
    %v2256 = vadd.f32 %v2135, %v2246
    %v2257 = vadd.f32 %v2136, %v2251
    %v2258 = vld [vmem:[%s5] sm:$0xff]
    %v2259 = vld [vmem:[%s5 + $0x8] sm:$0xff]
    %v2260 = vld [vmem:[%s5 + $0x10] sm:$0xff]
    %v2261 = vld [vmem:[%s5 + $0x18] sm:$0xff]
    %2263 = vset.pattern.permute.xlu0 0
    %2264 = vperm.xlu0 %2263, %v2258
    %v2265 = vpop.permute.xlu0 %2264
    %2268 = vset.pattern.permute.xlu0 0
    %2269 = vperm.xlu0 %2268, %v2259
    %v2270 = vpop.permute.xlu0 %2269
    %2273 = vset.pattern.permute.xlu0 0
    %2274 = vperm.xlu0 %2273, %v2260
    %v2275 = vpop.permute.xlu0 %2274
    %2278 = vset.pattern.permute.xlu0 0
    %2279 = vperm.xlu0 %2278, %v2261
    %v2280 = vpop.permute.xlu0 %2279
    %v2282 = vadd.f32 %v2254, %v2265
    %v2283 = vadd.f32 %v2255, %v2270
    %v2284 = vadd.f32 %v2256, %v2275
    %v2285 = vadd.f32 %v2257, %v2280
    %vm2286 = vcmp.ge.f32.partialorder %v2282, 0.0
    %vm2287 = vcmp.ge.f32.partialorder %v2283, 0.0
    %vm2288 = vcmp.ge.f32.partialorder %v2284, 0.0
    %vm2289 = vcmp.ge.f32.partialorder %v2285, 0.0
    %v2290 = vmul.f32 %v2282, 0.01
    %v2291 = vmul.f32 %v2283, 0.01
    %v2292 = vmul.f32 %v2284, 0.01
    %v2293 = vmul.f32 %v2285, 0.01
    %v2294 = vsel %vm2286, %v2282, %v2290
    %v2295 = vsel %vm2287, %v2283, %v2291
    %v2296 = vsel %vm2288, %v2284, %v2292
    %v2297 = vsel %vm2289, %v2285, %v2293
    %2302 = vrot.lane.b32.xlu0 %v2294, 127
    %v2303 = vpop.permute.xlu0 %2302
    %2304 = vrot.lane.b32.xlu0 %v2295, 127
    %v2305 = vpop.permute.xlu0 %2304
    %2306 = vrot.lane.b32.xlu0 %v2296, 127
    %v2307 = vpop.permute.xlu0 %2306
    %2308 = vrot.lane.b32.xlu0 %v2297, 127
    %v2309 = vpop.permute.xlu0 %2308
    %2314 = vrot.lane.b32.xlu0 %v2294, 71
    %v2315 = vpop.permute.xlu0 %2314
    %2316 = vrot.lane.b32.xlu0 %v2295, 71
    %v2317 = vpop.permute.xlu0 %2316
    %2318 = vrot.lane.b32.xlu0 %v2296, 71
    %v2319 = vpop.permute.xlu0 %2318
    %2320 = vrot.lane.b32.xlu0 %v2297, 71
    %v2321 = vpop.permute.xlu0 %2320
    %v2326 = vsel %vm67, %v2303, %v2315
    %v2327 = vsel %vm67, %v2305, %v2317
    %v2328 = vsel %vm67, %v2307, %v2319
    %v2329 = vsel %vm67, %v2309, %v2321
    %v2330 = vmax.f32 %v2294, %v2326
    %v2331 = vmax.f32 %v2295, %v2327
    %v2332 = vmax.f32 %v2296, %v2328
    %v2333 = vmax.f32 %v2297, %v2329
    %2338 = vrot.lane.b32.xlu0 %v2330, 122
    %v2339 = vpop.permute.xlu0 %2338
    %2340 = vrot.lane.b32.xlu0 %v2331, 122
    %v2341 = vpop.permute.xlu0 %2340
    %2342 = vrot.lane.b32.xlu0 %v2332, 122
    %v2343 = vpop.permute.xlu0 %2342
    %2344 = vrot.lane.b32.xlu0 %v2333, 122
    %v2345 = vpop.permute.xlu0 %2344
    %2350 = vrot.lane.b32.xlu0 %v2330, 66
    %v2351 = vpop.permute.xlu0 %2350
    %2352 = vrot.lane.b32.xlu0 %v2331, 66
    %v2353 = vpop.permute.xlu0 %2352
    %2354 = vrot.lane.b32.xlu0 %v2332, 66
    %v2355 = vpop.permute.xlu0 %2354
    %2356 = vrot.lane.b32.xlu0 %v2333, 66
    %v2357 = vpop.permute.xlu0 %2356
    %v2362 = vsel %vm1545, %v2339, %v2351
    %v2363 = vsel %vm1545, %v2341, %v2353
    %v2364 = vsel %vm1545, %v2343, %v2355
    %v2365 = vsel %vm1545, %v2345, %v2357
    %v2366 = vmax.f32 %v2330, %v2362
    %v2367 = vmax.f32 %v2331, %v2363
    %v2368 = vmax.f32 %v2332, %v2364
    %v2369 = vmax.f32 %v2333, %v2365
    %v2370 = vld [vmem:[%s6] sm:$0xff]
    %v2372 = vsel %vm1111, %v2370, 0
    %v2375 = vsel %vm1111, %v2366, 0
    %v2378 = vsel %vm1111, %v2367, 0
    %v2381 = vsel %vm1111, %v2368, 0
    %v2384 = vsel %vm1111, %v2369, 0
    %2386 = vmatprep.subr.mxu0 0.0
    %2387 = vmatpush1.xpose.msra.mxu0 %v2375
    %2388 = vmatprep.subr.mxu0 0.0
    %2389 = vmatpush1.xpose.msra.mxu0 %v2378
    %2390 = vmatprep.subr.mxu0 0.0
    %2391 = vmatpush1.xpose.msra.mxu0 %v2381
    %2392 = vmatprep.subr.mxu0 0.0
    %2393 = vmatpush1.xpose.msra.mxu0 %v2384
    %2394 = vmatprep.subr.mxu0 0.0
    %2395 = vmatpush1.xpose.msra.mxu0 0.0
    %2396 = vmatprep.subr.mxu0 0.0
    %2397 = vmatpush1.xpose.msra.mxu0 0.0
    %2398 = vmatprep.subr.mxu0 0.0
    %2399 = vmatpush1.xpose.msra.mxu0 0.0
    %2400 = vmatprep.subr.mxu0 0.0
    %2401 = vmatpush1.xpose.msra.mxu0 0.0
    %2402 = vmatprep.subr.mxu0 0.0
    %2403 = vmatpush1.xpose.msra.mxu0 0.0
    %2404 = vmatprep.subr.mxu0 0.0
    %2405 = vmatpush1.xpose.msra.mxu0 0.0
    %2406 = vmatprep.subr.mxu0 0.0
    %2407 = vmatpush1.xpose.msra.mxu0 0.0
    %2408 = vmatprep.subr.mxu0 0.0
    %2409 = vmatpush1.xpose.msra.mxu0 0.0
    %2410 = vmatprep.subr.mxu0 0.0
    %2411 = vmatpush1.xpose.msra.mxu0 0.0
    %2412 = vmatprep.subr.mxu0 0.0
    %2413 = vmatpush1.xpose.msra.mxu0 0.0
    %2414 = vmatprep.subr.mxu0 0.0
    %2415 = vmatpush1.xpose.msra.mxu0 0.0
    %2416 = vmatprep.subr.mxu0 0.0
    %2417 = vmatpush1.xpose.msra.mxu0 0.0
    %2418 = vmatprep.subr.mxu0 0.0
    %2419 = vmatpush1.xpose.msra.mxu0 0.0
    %2420 = vmatprep.subr.mxu0 0.0
    %2421 = vmatpush1.xpose.msra.mxu0 0.0
    %2422 = vmatprep.subr.mxu0 0.0
    %2423 = vmatpush1.xpose.msra.mxu0 0.0
    %2424 = vmatprep.subr.mxu0 0.0
    %2425 = vmatpush1.xpose.msra.mxu0 0.0
    %2426 = vmatprep.subr.mxu0 0.0
    %2427 = vmatpush1.xpose.msra.mxu0 0.0
    %2428 = vmatprep.subr.mxu0 0.0
    %2429 = vmatpush1.xpose.msra.mxu0 0.0
    %2430 = vmatprep.subr.mxu0 0.0
    %2431 = vmatpush1.xpose.msra.mxu0 0.0
    %2432 = vmatprep.subr.mxu0 0.0
    %2433 = vmatpush1.xpose.msra.mxu0 0.0
    %2434 = vmatprep.subr.mxu0 0.0
    %2435 = vmatpush1.xpose.msra.mxu0 0.0
    %2436 = vmatprep.subr.mxu0 0.0
    %2437 = vmatpush1.xpose.msra.mxu0 0.0
    %2438 = vmatprep.subr.mxu0 0.0
    %2439 = vmatpush1.xpose.msra.mxu0 0.0
    %2440 = vmatprep.subr.mxu0 0.0
    %2441 = vmatpush1.xpose.msra.mxu0 0.0
    %2442 = vmatprep.subr.mxu0 0.0
    %2443 = vmatpush1.xpose.msra.mxu0 0.0
    %2444 = vmatprep.subr.mxu0 0.0
    %2445 = vmatpush1.xpose.msra.mxu0 0.0
    %2446 = vmatprep.subr.mxu0 0.0
    %2447 = vmatpush1.xpose.msra.mxu0 0.0
    %2448 = vmatprep.subr.mxu0 0.0
    %2449 = vmatpush1.xpose.msra.mxu0 0.0
    %2450 = vmatprep.mubr.f32.mxu0 0.0
    %2451 = vmatmul.mubr.f32.gmra.mrb[0].mxu0 %v2372
    %v2452 = vpop.f32.mrb[0].mxu0
    %v2453 = vadd.f32 0.0, %v2452
    %v2454 = vpop.f32.mrb[0].mxu0
    %2455 = vdwg.mxu0
    %v2456 = vld [vmem:[%s8] sm:$0x1]
    %v2457 = vld [vmem:[%s7] sm:$0xff]
    %v2458 = vld [vmem:[%s7 + $0x8] sm:$0xff]
    %v2459 = vld [vmem:[%s7 + $0x10] sm:$0xff]
    %v2460 = vld [vmem:[%s7 + $0x18] sm:$0xff]
    %vm2461 = vcmask 261120
    %v2463 = vsel %vm2461, %v2453, 0
    %2465 = vmatprep.subr.mxu0 0.0
    %2466 = vmatpush1.msra.mxu0 %v2457
    %2467 = vmatprep.subr.mxu0 0.0
    %2468 = vmatpush1.msra.mxu0 %v2458
    %2469 = vmatprep.subr.mxu0 0.0
    %2470 = vmatpush1.msra.mxu0 %v2459
    %2471 = vmatprep.subr.mxu0 0.0
    %2472 = vmatpush1.msra.mxu0 %v2460
    %2473 = vmatprep.subr.mxu0 0.0
    %2474 = vmatpush1.msra.mxu0 0.0
    %2475 = vmatprep.subr.mxu0 0.0
    %2476 = vmatpush1.msra.mxu0 0.0
    %2477 = vmatprep.subr.mxu0 0.0
    %2478 = vmatpush1.msra.mxu0 0.0
    %2479 = vmatprep.subr.mxu0 0.0
    %2480 = vmatpush1.msra.mxu0 0.0
    %2481 = vmatprep.subr.mxu0 0.0
    %2482 = vmatpush1.msra.mxu0 0.0
    %2483 = vmatprep.subr.mxu0 0.0
    %2484 = vmatpush1.msra.mxu0 0.0
    %2485 = vmatprep.subr.mxu0 0.0
    %2486 = vmatpush1.msra.mxu0 0.0
    %2487 = vmatprep.subr.mxu0 0.0
    %2488 = vmatpush1.msra.mxu0 0.0
    %2489 = vmatprep.subr.mxu0 0.0
    %2490 = vmatpush1.msra.mxu0 0.0
    %2491 = vmatprep.subr.mxu0 0.0
    %2492 = vmatpush1.msra.mxu0 0.0
    %2493 = vmatprep.subr.mxu0 0.0
    %2494 = vmatpush1.msra.mxu0 0.0
    %2495 = vmatprep.subr.mxu0 0.0
    %2496 = vmatpush1.msra.mxu0 0.0
    %2497 = vmatprep.subr.mxu0 0.0
    %2498 = vmatpush1.msra.mxu0 0.0
    %2499 = vmatprep.subr.mxu0 0.0
    %2500 = vmatpush1.msra.mxu0 0.0
    %2501 = vmatprep.subr.mxu0 0.0
    %2502 = vmatpush1.msra.mxu0 0.0
    %2503 = vmatprep.subr.mxu0 0.0
    %2504 = vmatpush1.msra.mxu0 0.0
    %2505 = vmatprep.subr.mxu0 0.0
    %2506 = vmatpush1.msra.mxu0 0.0
    %2507 = vmatprep.subr.mxu0 0.0
    %2508 = vmatpush1.msra.mxu0 0.0
    %2509 = vmatprep.subr.mxu0 0.0
    %2510 = vmatpush1.msra.mxu0 0.0
    %2511 = vmatprep.subr.mxu0 0.0
    %2512 = vmatpush1.msra.mxu0 0.0
    %2513 = vmatprep.subr.mxu0 0.0
    %2514 = vmatpush1.msra.mxu0 0.0
    %2515 = vmatprep.subr.mxu0 0.0
    %2516 = vmatpush1.msra.mxu0 0.0
    %2517 = vmatprep.subr.mxu0 0.0
    %2518 = vmatpush1.msra.mxu0 0.0
    %2519 = vmatprep.subr.mxu0 0.0
    %2520 = vmatpush1.msra.mxu0 0.0
    %2521 = vmatprep.subr.mxu0 0.0
    %2522 = vmatpush1.msra.mxu0 0.0
    %2523 = vmatprep.subr.mxu0 0.0
    %2524 = vmatpush1.msra.mxu0 0.0
    %2525 = vmatprep.subr.mxu0 0.0
    %2526 = vmatpush1.msra.mxu0 0.0
    %2527 = vmatprep.subr.mxu0 0.0
    %2528 = vmatpush1.msra.mxu0 0.0
    %2529 = vmatprep.mubr.f32.mxu0 0.0
    %2530 = vmatmul.mubr.f32.gmra.mrb[0].mxu0 %v2463
    %v2531 = vpop.f32.mrb[0].mxu0
    %v2532 = vadd.f32 0.0, %v2531
    %v2533 = vpop.f32.mrb[0].mxu0
    %2534 = vdwg.mxu0
    %v2536 = vlaneseq
    %v2537 = vshrl.u32 %v2536, 7
    %v2538 = vsub.s32 0, %v2537
    %v2539 = vrot.slane %v2456, %v2538
    %v2541 = vadd.f32 %v2539, %v2532
    %s2542 = scalar_lea.vmem %s7, 32
    %v2543 = vld [vmem:[%s2542] sm:$0xff]
    %v2544 = vld [vmem:[%s2542 + $0x8] sm:$0xff]
    %v2545 = vld [vmem:[%s2542 + $0x10] sm:$0xff]
    %v2546 = vld [vmem:[%s2542 + $0x18] sm:$0xff]
    %v2547 = vrot.slane %v2453, 2
    %v2548 = vsel %vm2461, %v2547, 0
    %2550 = vmatprep.subr.mxu0 0.0
    %2551 = vmatpush1.msra.mxu0 %v2543
    %2552 = vmatprep.subr.mxu0 0.0
    %2553 = vmatpush1.msra.mxu0 %v2544
    %2554 = vmatprep.subr.mxu0 0.0
    %2555 = vmatpush1.msra.mxu0 %v2545
    %2556 = vmatprep.subr.mxu0 0.0
    %2557 = vmatpush1.msra.mxu0 %v2546
    %2558 = vmatprep.subr.mxu0 0.0
    %2559 = vmatpush1.msra.mxu0 0.0
    %2560 = vmatprep.subr.mxu0 0.0
    %2561 = vmatpush1.msra.mxu0 0.0
    %2562 = vmatprep.subr.mxu0 0.0
    %2563 = vmatpush1.msra.mxu0 0.0
    %2564 = vmatprep.subr.mxu0 0.0
    %2565 = vmatpush1.msra.mxu0 0.0
    %2566 = vmatprep.subr.mxu0 0.0
    %2567 = vmatpush1.msra.mxu0 0.0
    %2568 = vmatprep.subr.mxu0 0.0
    %2569 = vmatpush1.msra.mxu0 0.0
    %2570 = vmatprep.subr.mxu0 0.0
    %2571 = vmatpush1.msra.mxu0 0.0
    %2572 = vmatprep.subr.mxu0 0.0
    %2573 = vmatpush1.msra.mxu0 0.0
    %2574 = vmatprep.subr.mxu0 0.0
    %2575 = vmatpush1.msra.mxu0 0.0
    %2576 = vmatprep.subr.mxu0 0.0
    %2577 = vmatpush1.msra.mxu0 0.0
    %2578 = vmatprep.subr.mxu0 0.0
    %2579 = vmatpush1.msra.mxu0 0.0
    %2580 = vmatprep.subr.mxu0 0.0
    %2581 = vmatpush1.msra.mxu0 0.0
    %2582 = vmatprep.subr.mxu0 0.0
    %2583 = vmatpush1.msra.mxu0 0.0
    %2584 = vmatprep.subr.mxu0 0.0
    %2585 = vmatpush1.msra.mxu0 0.0
    %2586 = vmatprep.subr.mxu0 0.0
    %2587 = vmatpush1.msra.mxu0 0.0
    %2588 = vmatprep.subr.mxu0 0.0
    %2589 = vmatpush1.msra.mxu0 0.0
    %2590 = vmatprep.subr.mxu0 0.0
    %2591 = vmatpush1.msra.mxu0 0.0
    %2592 = vmatprep.subr.mxu0 0.0
    %2593 = vmatpush1.msra.mxu0 0.0
    %2594 = vmatprep.subr.mxu0 0.0
    %2595 = vmatpush1.msra.mxu0 0.0
    %2596 = vmatprep.subr.mxu0 0.0
    %2597 = vmatpush1.msra.mxu0 0.0
    %2598 = vmatprep.subr.mxu0 0.0
    %2599 = vmatpush1.msra.mxu0 0.0
    %2600 = vmatprep.subr.mxu0 0.0
    %2601 = vmatpush1.msra.mxu0 0.0
    %2602 = vmatprep.subr.mxu0 0.0
    %2603 = vmatpush1.msra.mxu0 0.0
    %2604 = vmatprep.subr.mxu0 0.0
    %2605 = vmatpush1.msra.mxu0 0.0
    %2606 = vmatprep.subr.mxu0 0.0
    %2607 = vmatpush1.msra.mxu0 0.0
    %2608 = vmatprep.subr.mxu0 0.0
    %2609 = vmatpush1.msra.mxu0 0.0
    %2610 = vmatprep.subr.mxu0 0.0
    %2611 = vmatpush1.msra.mxu0 0.0
    %2612 = vmatprep.subr.mxu0 0.0
    %2613 = vmatpush1.msra.mxu0 0.0
    %2614 = vmatprep.mubr.f32.mxu0 0.0
    %2615 = vmatmul.mubr.f32.gmra.mrb[0].mxu0 %v2548
    %v2616 = vpop.f32.mrb[0].mxu0
    %v2617 = vadd.f32 0.0, %v2616
    %v2618 = vpop.f32.mrb[0].mxu0
    %2619 = vdwg.mxu0
    %v2620 = vadd.f32 %v2541, %v2617
    %s2621 = scalar_lea.vmem %s7, 64
    %v2622 = vld [vmem:[%s2621] sm:$0xff]
    %v2623 = vld [vmem:[%s2621 + $0x8] sm:$0xff]
    %v2624 = vld [vmem:[%s2621 + $0x10] sm:$0xff]
    %v2625 = vld [vmem:[%s2621 + $0x18] sm:$0xff]
    %v2626 = vrot.slane %v2453, 4
    %v2627 = vsel %vm2461, %v2626, 0
    %2629 = vmatprep.subr.mxu0 0.0
    %2630 = vmatpush1.msra.mxu0 %v2622
    %2631 = vmatprep.subr.mxu0 0.0
    %2632 = vmatpush1.msra.mxu0 %v2623
    %2633 = vmatprep.subr.mxu0 0.0
    %2634 = vmatpush1.msra.mxu0 %v2624
    %2635 = vmatprep.subr.mxu0 0.0
    %2636 = vmatpush1.msra.mxu0 %v2625
    %2637 = vmatprep.subr.mxu0 0.0
    %2638 = vmatpush1.msra.mxu0 0.0
    %2639 = vmatprep.subr.mxu0 0.0
    %2640 = vmatpush1.msra.mxu0 0.0
    %2641 = vmatprep.subr.mxu0 0.0
    %2642 = vmatpush1.msra.mxu0 0.0
    %2643 = vmatprep.subr.mxu0 0.0
    %2644 = vmatpush1.msra.mxu0 0.0
    %2645 = vmatprep.subr.mxu0 0.0
    %2646 = vmatpush1.msra.mxu0 0.0
    %2647 = vmatprep.subr.mxu0 0.0
    %2648 = vmatpush1.msra.mxu0 0.0
    %2649 = vmatprep.subr.mxu0 0.0
    %2650 = vmatpush1.msra.mxu0 0.0
    %2651 = vmatprep.subr.mxu0 0.0
    %2652 = vmatpush1.msra.mxu0 0.0
    %2653 = vmatprep.subr.mxu0 0.0
    %2654 = vmatpush1.msra.mxu0 0.0
    %2655 = vmatprep.subr.mxu0 0.0
    %2656 = vmatpush1.msra.mxu0 0.0
    %2657 = vmatprep.subr.mxu0 0.0
    %2658 = vmatpush1.msra.mxu0 0.0
    %2659 = vmatprep.subr.mxu0 0.0
    %2660 = vmatpush1.msra.mxu0 0.0
    %2661 = vmatprep.subr.mxu0 0.0
    %2662 = vmatpush1.msra.mxu0 0.0
    %2663 = vmatprep.subr.mxu0 0.0
    %2664 = vmatpush1.msra.mxu0 0.0
    %2665 = vmatprep.subr.mxu0 0.0
    %2666 = vmatpush1.msra.mxu0 0.0
    %2667 = vmatprep.subr.mxu0 0.0
    %2668 = vmatpush1.msra.mxu0 0.0
    %2669 = vmatprep.subr.mxu0 0.0
    %2670 = vmatpush1.msra.mxu0 0.0
    %2671 = vmatprep.subr.mxu0 0.0
    %2672 = vmatpush1.msra.mxu0 0.0
    %2673 = vmatprep.subr.mxu0 0.0
    %2674 = vmatpush1.msra.mxu0 0.0
    %2675 = vmatprep.subr.mxu0 0.0
    %2676 = vmatpush1.msra.mxu0 0.0
    %2677 = vmatprep.subr.mxu0 0.0
    %2678 = vmatpush1.msra.mxu0 0.0
    %2679 = vmatprep.subr.mxu0 0.0
    %2680 = vmatpush1.msra.mxu0 0.0
    %2681 = vmatprep.subr.mxu0 0.0
    %2682 = vmatpush1.msra.mxu0 0.0
    %2683 = vmatprep.subr.mxu0 0.0
    %2684 = vmatpush1.msra.mxu0 0.0
    %2685 = vmatprep.subr.mxu0 0.0
    %2686 = vmatpush1.msra.mxu0 0.0
    %2687 = vmatprep.subr.mxu0 0.0
    %2688 = vmatpush1.msra.mxu0 0.0
    %2689 = vmatprep.subr.mxu0 0.0
    %2690 = vmatpush1.msra.mxu0 0.0
    %2691 = vmatprep.subr.mxu0 0.0
    %2692 = vmatpush1.msra.mxu0 0.0
    %2693 = vmatprep.mubr.f32.mxu0 0.0
    %2694 = vmatmul.mubr.f32.gmra.mrb[0].mxu0 %v2627
    %v2695 = vpop.f32.mrb[0].mxu0
    %v2696 = vadd.f32 0.0, %v2695
    %v2697 = vpop.f32.mrb[0].mxu0
    %2698 = vdwg.mxu0
    %v2699 = vadd.f32 %v2620, %v2696
    %s2700 = scalar_lea.vmem %s7, 96
    %v2701 = vld [vmem:[%s2700] sm:$0xff]
    %v2702 = vld [vmem:[%s2700 + $0x8] sm:$0xff]
    %v2703 = vld [vmem:[%s2700 + $0x10] sm:$0xff]
    %v2704 = vld [vmem:[%s2700 + $0x18] sm:$0xff]
    %v2705 = vrot.slane %v2453, 6
    %v2706 = vsel %vm2461, %v2705, 0
    %2708 = vmatprep.subr.mxu0 0.0
    %2709 = vmatpush1.msra.mxu0 %v2701
    %2710 = vmatprep.subr.mxu0 0.0
    %2711 = vmatpush1.msra.mxu0 %v2702
    %2712 = vmatprep.subr.mxu0 0.0
    %2713 = vmatpush1.msra.mxu0 %v2703
    %2714 = vmatprep.subr.mxu0 0.0
    %2715 = vmatpush1.msra.mxu0 %v2704
    %2716 = vmatprep.subr.mxu0 0.0
    %2717 = vmatpush1.msra.mxu0 0.0
    %2718 = vmatprep.subr.mxu0 0.0
    %2719 = vmatpush1.msra.mxu0 0.0
    %2720 = vmatprep.subr.mxu0 0.0
    %2721 = vmatpush1.msra.mxu0 0.0
    %2722 = vmatprep.subr.mxu0 0.0
    %2723 = vmatpush1.msra.mxu0 0.0
    %2724 = vmatprep.subr.mxu0 0.0
    %2725 = vmatpush1.msra.mxu0 0.0
    %2726 = vmatprep.subr.mxu0 0.0
    %2727 = vmatpush1.msra.mxu0 0.0
    %2728 = vmatprep.subr.mxu0 0.0
    %2729 = vmatpush1.msra.mxu0 0.0
    %2730 = vmatprep.subr.mxu0 0.0
    %2731 = vmatpush1.msra.mxu0 0.0
    %2732 = vmatprep.subr.mxu0 0.0
    %2733 = vmatpush1.msra.mxu0 0.0
    %2734 = vmatprep.subr.mxu0 0.0
    %2735 = vmatpush1.msra.mxu0 0.0
    %2736 = vmatprep.subr.mxu0 0.0
    %2737 = vmatpush1.msra.mxu0 0.0
    %2738 = vmatprep.subr.mxu0 0.0
    %2739 = vmatpush1.msra.mxu0 0.0
    %2740 = vmatprep.subr.mxu0 0.0
    %2741 = vmatpush1.msra.mxu0 0.0
    %2742 = vmatprep.subr.mxu0 0.0
    %2743 = vmatpush1.msra.mxu0 0.0
    %2744 = vmatprep.subr.mxu0 0.0
    %2745 = vmatpush1.msra.mxu0 0.0
    %2746 = vmatprep.subr.mxu0 0.0
    %2747 = vmatpush1.msra.mxu0 0.0
    %2748 = vmatprep.subr.mxu0 0.0
    %2749 = vmatpush1.msra.mxu0 0.0
    %2750 = vmatprep.subr.mxu0 0.0
    %2751 = vmatpush1.msra.mxu0 0.0
    %2752 = vmatprep.subr.mxu0 0.0
    %2753 = vmatpush1.msra.mxu0 0.0
    %2754 = vmatprep.subr.mxu0 0.0
    %2755 = vmatpush1.msra.mxu0 0.0
    %2756 = vmatprep.subr.mxu0 0.0
    %2757 = vmatpush1.msra.mxu0 0.0
    %2758 = vmatprep.subr.mxu0 0.0
    %2759 = vmatpush1.msra.mxu0 0.0
    %2760 = vmatprep.subr.mxu0 0.0
    %2761 = vmatpush1.msra.mxu0 0.0
    %2762 = vmatprep.subr.mxu0 0.0
    %2763 = vmatpush1.msra.mxu0 0.0
    %2764 = vmatprep.subr.mxu0 0.0
    %2765 = vmatpush1.msra.mxu0 0.0
    %2766 = vmatprep.subr.mxu0 0.0
    %2767 = vmatpush1.msra.mxu0 0.0
    %2768 = vmatprep.subr.mxu0 0.0
    %2769 = vmatpush1.msra.mxu0 0.0
    %2770 = vmatprep.subr.mxu0 0.0
    %2771 = vmatpush1.msra.mxu0 0.0
    %2772 = vmatprep.mubr.f32.mxu0 0.0
    %2773 = vmatmul.mubr.f32.gmra.mrb[0].mxu0 %v2706
    %v2774 = vpop.f32.mrb[0].mxu0
    %v2775 = vadd.f32 0.0, %v2774
    %v2776 = vpop.f32.mrb[0].mxu0
    %2777 = vdwg.mxu0
    %v2778 = vadd.f32 %v2699, %v2775
    %vm2779 = vcmp.ge.f32.partialorder %v2778, 0.0
    %v2780 = vmul.f32 %v2778, 0.01
    %v2781 = vsel %vm2779, %v2778, %v2780
    %v2782 = vld [vmem:[%s9] sm:$0xff]
    %v2783 = vld [vmem:[%s9 + $0x8] sm:$0xff]
    %v2784 = vld [vmem:[%s9 + $0x10] sm:$0xff]
    %v2785 = vld [vmem:[%s9 + $0x18] sm:$0xff]
    %v2786 = vld [vmem:[%s9 + $0x20] sm:$0xff]
    %v2787 = vld [vmem:[%s9 + $0x28] sm:$0xff]
    %v2788 = vld [vmem:[%s9 + $0x30] sm:$0xff]
    %v2789 = vld [vmem:[%s9 + $0x38] sm:$0xff]
    %v2790 = vld [vmem:[%s9 + $0x40] sm:$0xff]
    %v2791 = vld [vmem:[%s9 + $0x48] sm:$0xff]
    %v2792 = vld [vmem:[%s9 + $0x50] sm:$0xff]
    %v2793 = vld [vmem:[%s9 + $0x58] sm:$0xff]
    %v2794 = vld [vmem:[%s9 + $0x60] sm:$0xff]
    %v2795 = vld [vmem:[%s9 + $0x68] sm:$0xff]
    %v2796 = vld [vmem:[%s9 + $0x70] sm:$0xff]
    %v2797 = vld [vmem:[%s9 + $0x78] sm:$0xff]
    %v2798 = vld [vmem:[%s10] sm:$0x1]
    %v2800 = vlaneseq
    %v2801 = vshrl.u32 %v2800, 7
    %v2802 = vsub.s32 0, %v2801
    %v2803 = vrot.slane %v2798, %v2802
    %2805 = vmatprep.subr.mxu0 0.0
    %2806 = vmatpush1.msra.mxu0 %v2782
    %2807 = vmatprep.subr.mxu0 0.0
    %2808 = vmatpush1.msra.mxu0 %v2783
    %2809 = vmatprep.subr.mxu0 0.0
    %2810 = vmatpush1.msra.mxu0 %v2784
    %2811 = vmatprep.subr.mxu0 0.0
    %2812 = vmatpush1.msra.mxu0 %v2785
    %2813 = vmatprep.subr.mxu0 0.0
    %2814 = vmatpush1.msra.mxu0 %v2786
    %2815 = vmatprep.subr.mxu0 0.0
    %2816 = vmatpush1.msra.mxu0 %v2787
    %2817 = vmatprep.subr.mxu0 0.0
    %2818 = vmatpush1.msra.mxu0 %v2788
    %2819 = vmatprep.subr.mxu0 0.0
    %2820 = vmatpush1.msra.mxu0 %v2789
    %2821 = vmatprep.subr.mxu0 0.0
    %2822 = vmatpush1.msra.mxu0 %v2790
    %2823 = vmatprep.subr.mxu0 0.0
    %2824 = vmatpush1.msra.mxu0 %v2791
    %2825 = vmatprep.subr.mxu0 0.0
    %2826 = vmatpush1.msra.mxu0 %v2792
    %2827 = vmatprep.subr.mxu0 0.0
    %2828 = vmatpush1.msra.mxu0 %v2793
    %2829 = vmatprep.subr.mxu0 0.0
    %2830 = vmatpush1.msra.mxu0 %v2794
    %2831 = vmatprep.subr.mxu0 0.0
    %2832 = vmatpush1.msra.mxu0 %v2795
    %2833 = vmatprep.subr.mxu0 0.0
    %2834 = vmatpush1.msra.mxu0 %v2796
    %2835 = vmatprep.subr.mxu0 0.0
    %2836 = vmatpush1.msra.mxu0 %v2797
    %2837 = vmatprep.subr.mxu0 0.0
    %2838 = vmatpush1.msra.mxu0 0.0
    %2839 = vmatprep.subr.mxu0 0.0
    %2840 = vmatpush1.msra.mxu0 0.0
    %2841 = vmatprep.subr.mxu0 0.0
    %2842 = vmatpush1.msra.mxu0 0.0
    %2843 = vmatprep.subr.mxu0 0.0
    %2844 = vmatpush1.msra.mxu0 0.0
    %2845 = vmatprep.subr.mxu0 0.0
    %2846 = vmatpush1.msra.mxu0 0.0
    %2847 = vmatprep.subr.mxu0 0.0
    %2848 = vmatpush1.msra.mxu0 0.0
    %2849 = vmatprep.subr.mxu0 0.0
    %2850 = vmatpush1.msra.mxu0 0.0
    %2851 = vmatprep.subr.mxu0 0.0
    %2852 = vmatpush1.msra.mxu0 0.0
    %2853 = vmatprep.subr.mxu0 0.0
    %2854 = vmatpush1.msra.mxu0 0.0
    %2855 = vmatprep.subr.mxu0 0.0
    %2856 = vmatpush1.msra.mxu0 0.0
    %2857 = vmatprep.subr.mxu0 0.0
    %2858 = vmatpush1.msra.mxu0 0.0
    %2859 = vmatprep.subr.mxu0 0.0
    %2860 = vmatpush1.msra.mxu0 0.0
    %2861 = vmatprep.subr.mxu0 0.0
    %2862 = vmatpush1.msra.mxu0 0.0
    %2863 = vmatprep.subr.mxu0 0.0
    %2864 = vmatpush1.msra.mxu0 0.0
    %2865 = vmatprep.subr.mxu0 0.0
    %2866 = vmatpush1.msra.mxu0 0.0
    %2867 = vmatprep.subr.mxu0 0.0
    %2868 = vmatpush1.msra.mxu0 0.0
    %2869 = vmatprep.mubr.f32.mxu0 0.0
    %2870 = vmatmul.mubr.f32.gmra.mrb[0].mxu0 %v2781
    %v2871 = vpop.f32.mrb[0].mxu0
    %v2872 = vadd.f32 %v2803, %v2871
    %v2873 = vpop.f32.mrb[0].mxu0
    %2874 = vdwg.mxu0
    %vm2875 = vcmp.ge.f32.partialorder %v2872, 0.0
    %v2876 = vmul.f32 %v2872, 0.01
    %v2877 = vsel %vm2875, %v2872, %v2876
    %v2878 = vld [vmem:[%s11] sm:$0xff]
    %v2879 = vld [vmem:[%s11 + $0x8] sm:$0xff]
    %v2880 = vld [vmem:[%s11 + $0x10] sm:$0xff]
    %v2881 = vld [vmem:[%s11 + $0x18] sm:$0xff]
    %v2882 = vld [vmem:[%s11 + $0x20] sm:$0xff]
    %v2883 = vld [vmem:[%s11 + $0x28] sm:$0xff]
    %v2884 = vld [vmem:[%s11 + $0x30] sm:$0xff]
    %v2885 = vld [vmem:[%s11 + $0x38] sm:$0xff]
    %v2886 = vld [vmem:[%s11 + $0x40] sm:$0xff]
    %v2887 = vld [vmem:[%s11 + $0x48] sm:$0xff]
    %v2888 = vld [vmem:[%s11 + $0x50] sm:$0xff]
    %v2889 = vld [vmem:[%s11 + $0x58] sm:$0xff]
    %v2890 = vld [vmem:[%s11 + $0x60] sm:$0xff]
    %v2891 = vld [vmem:[%s11 + $0x68] sm:$0xff]
    %v2892 = vld [vmem:[%s11 + $0x70] sm:$0xff]
    %v2893 = vld [vmem:[%s11 + $0x78] sm:$0xff]
    %v2894 = vld [vmem:[%s12] sm:$0x1]
    %v2896 = vlaneseq
    %v2897 = vshrl.u32 %v2896, 7
    %v2898 = vsub.s32 0, %v2897
    %v2899 = vrot.slane %v2894, %v2898
    %2901 = vmatprep.subr.mxu0 0.0
    %2902 = vmatpush1.msra.mxu0 %v2878
    %2903 = vmatprep.subr.mxu0 0.0
    %2904 = vmatpush1.msra.mxu0 %v2879
    %2905 = vmatprep.subr.mxu0 0.0
    %2906 = vmatpush1.msra.mxu0 %v2880
    %2907 = vmatprep.subr.mxu0 0.0
    %2908 = vmatpush1.msra.mxu0 %v2881
    %2909 = vmatprep.subr.mxu0 0.0
    %2910 = vmatpush1.msra.mxu0 %v2882
    %2911 = vmatprep.subr.mxu0 0.0
    %2912 = vmatpush1.msra.mxu0 %v2883
    %2913 = vmatprep.subr.mxu0 0.0
    %2914 = vmatpush1.msra.mxu0 %v2884
    %2915 = vmatprep.subr.mxu0 0.0
    %2916 = vmatpush1.msra.mxu0 %v2885
    %2917 = vmatprep.subr.mxu0 0.0
    %2918 = vmatpush1.msra.mxu0 %v2886
    %2919 = vmatprep.subr.mxu0 0.0
    %2920 = vmatpush1.msra.mxu0 %v2887
    %2921 = vmatprep.subr.mxu0 0.0
    %2922 = vmatpush1.msra.mxu0 %v2888
    %2923 = vmatprep.subr.mxu0 0.0
    %2924 = vmatpush1.msra.mxu0 %v2889
    %2925 = vmatprep.subr.mxu0 0.0
    %2926 = vmatpush1.msra.mxu0 %v2890
    %2927 = vmatprep.subr.mxu0 0.0
    %2928 = vmatpush1.msra.mxu0 %v2891
    %2929 = vmatprep.subr.mxu0 0.0
    %2930 = vmatpush1.msra.mxu0 %v2892
    %2931 = vmatprep.subr.mxu0 0.0
    %2932 = vmatpush1.msra.mxu0 %v2893
    %2933 = vmatprep.subr.mxu0 0.0
    %2934 = vmatpush1.msra.mxu0 0.0
    %2935 = vmatprep.subr.mxu0 0.0
    %2936 = vmatpush1.msra.mxu0 0.0
    %2937 = vmatprep.subr.mxu0 0.0
    %2938 = vmatpush1.msra.mxu0 0.0
    %2939 = vmatprep.subr.mxu0 0.0
    %2940 = vmatpush1.msra.mxu0 0.0
    %2941 = vmatprep.subr.mxu0 0.0
    %2942 = vmatpush1.msra.mxu0 0.0
    %2943 = vmatprep.subr.mxu0 0.0
    %2944 = vmatpush1.msra.mxu0 0.0
    %2945 = vmatprep.subr.mxu0 0.0
    %2946 = vmatpush1.msra.mxu0 0.0
    %2947 = vmatprep.subr.mxu0 0.0
    %2948 = vmatpush1.msra.mxu0 0.0
    %2949 = vmatprep.subr.mxu0 0.0
    %2950 = vmatpush1.msra.mxu0 0.0
    %2951 = vmatprep.subr.mxu0 0.0
    %2952 = vmatpush1.msra.mxu0 0.0
    %2953 = vmatprep.subr.mxu0 0.0
    %2954 = vmatpush1.msra.mxu0 0.0
    %2955 = vmatprep.subr.mxu0 0.0
    %2956 = vmatpush1.msra.mxu0 0.0
    %2957 = vmatprep.subr.mxu0 0.0
    %2958 = vmatpush1.msra.mxu0 0.0
    %2959 = vmatprep.subr.mxu0 0.0
    %2960 = vmatpush1.msra.mxu0 0.0
    %2961 = vmatprep.subr.mxu0 0.0
    %2962 = vmatpush1.msra.mxu0 0.0
    %2963 = vmatprep.subr.mxu0 0.0
    %2964 = vmatpush1.msra.mxu0 0.0
    %2965 = vmatprep.mubr.f32.mxu0 0.0
    %2966 = vmatmul.mubr.f32.gmra.mrb[0].mxu0 %v2877
    %v2967 = vpop.f32.mrb[0].mxu0
    %v2968 = vadd.f32 %v2899, %v2967
    %v2969 = vpop.f32.mrb[0].mxu0
    %2970 = vdwg.mxu0
    %v2971 = vsub.f32 0.0, %v2968
    %v2972 = vmul.f32 %v2971, 1.442695
    %v2973 = vpow.pop %v2972
    %v2974 = vadd.f32 %v2973, 1.0
    %v2975 = vrcp.pop %v2974
    %v2976 = vmul.f32 10.0, %v2975
    %2977 = vst [vmem:[#allocation2] sm:$0x3] %v2976
    // Predicated region
    $region54: #{nlayernet_forward.1} parent=1 // pred_check
      _
    $region55: #{nlayernet_forward.1} parent=1 // pred_check_branch
      %2979 = sbr.rel (0) target = $region57
    $region56: #{nlayernet_forward.1} parent=1 // pred_region
      %s2981 = ssub.s32 32, 32
      %2982 = vsyncadd [#allocation3], %s2981
      %s2984 = sshll.u32 [#allocation2], 4
      %s2985 = int_to_ptr.vmem [resolvable:$true] %s2984
      %2987 = dma.vmem_to_hbm [thread:$0]  %s2985, 32, %s13, [#allocation3]
    $region57: #{nlayernet_forward.1} parent=1 // pred_fallthru
      _
    // Predicated region
    $region58: #{nlayernet_forward.1} parent=1 // pred_check
      _
    $region59: #{nlayernet_forward.1} parent=1 // pred_check_branch
      %2989 = sbr.rel (0) target = $region61
    $region60: #{nlayernet_forward.1} parent=1 // pred_region
      %2990 = dma.done [#allocation3], 32
    $region61: #{nlayernet_forward.1} parent=1 // pred_fallthru
      _
    %2991 = vsyncpa [#allocation3], 1

</llo_original>
